<compile_context>
chip_gen: v7x
topology: tpu7x:2x2x1
jax: 0.10.0
libtpu: 0.0.40
codegen_flags: <defaults>
</compile_context>

<pallas_src>
import functools

import jax
import jax.numpy as jnp
from jax import lax
from jax.experimental import pallas as pl
from jax.experimental.pallas import tpu as pltpu

EPS = 1e-5


def intro_block_kernel(x_ref, w_ref, g_ref, b_ref, s_ref, o_ref, patch_ref, *,
                       ho, wo, cin, hh):
    # x_ref:     (1, 4*Hh, cin_pad, Wh) bf16  -- 2x2 space-to-depth padded input (this batch elem);
    #                                            leading-axis index = parity*Hh + row, width on lanes.
    # w_ref:     (planes, Kpad) bf16          -- conv1 weights, K ordered (kh, kw, c), zero K tail.
    # g_ref/b_ref: (planes, 1) f32            -- GroupNorm affine params.
    # s_ref:     (3, Wo, Wp) f32              -- one-hot column-selection matrices for the pool.
    # o_ref:     (1, Hp, planes, Wp) f32      -- pooled output.
    # patch_ref: VMEM scratch (Ho, Kpad, Wo) bf16 -- in-VMEM im2col (K on sublanes, W on lanes).
    planes = w_ref.shape[0]
    kpad = patch_ref.shape[1]
    k_real = 7 * 7 * cin
    hp = ho // 2
    wp = s_ref.shape[2]

    # Padded-K tail must be zeroed EVERY step: batch grid axis is "parallel" (two TensorCores),
    # so a program_id()==0 guard would leave one core's scratch tail uninitialized.
    if kpad > k_real:
        patch_ref[:, k_real:, :] = jnp.zeros((ho, kpad - k_real, wo), patch_ref.dtype)

    # ---- conv1 7x7 stride 2: build the 49 taps in VMEM (full-lane-width slab writes) ----
    for kh in range(7):
        q = kh // 2
        for kw in range(7):
            r = kw // 2
            par = (kh % 2) * 2 + (kw % 2)            # which plane of the 2x2 space-to-depth split
            k0 = (kh * 7 + kw) * cin                 # even offset (cin is padded to an even count)
            patch_ref[:, k0:k0 + cin, :] = x_ref[0, pl.ds(par * hh + q, ho), :, pl.ds(r, wo)]

    # One batched MXU matmul over output rows: (planes, Kpad) x (Kpad, Wo) per row,
    # bf16 operands, f32 accumulation.
    w_b = jnp.broadcast_to(w_ref[...][None], (ho, planes, kpad))
    conv = jnp.einsum("hck,hkw->hcw", w_b, patch_ref[...],
                      preferred_element_type=jnp.float32)            # (Ho, planes, Wo) f32

    # ---- instance norm (two-pass, centered form) folded into scale/shift + fused ReLU ----
    inv_m = 1.0 / (ho * wo)
    mean = jnp.sum(jnp.sum(conv, axis=2, keepdims=True), axis=0, keepdims=True) * inv_m
    centered = conv - mean                                            # reused by the affine apply
    var = jnp.sum(jnp.sum(centered * centered, axis=2, keepdims=True),
                  axis=0, keepdims=True) * inv_m
    scale = g_ref[...][None] * lax.rsqrt(var + EPS)                   # (1, planes, 1)
    y = jnp.maximum(centered * scale + b_ref[...][None], 0.0)         # (Ho, planes, Wo) f32, >= 0

    # ---- MaxPool2d(3, stride=2, padding=1); post-ReLU y >= 0 so zero-fill == -inf padding ----
    # rows: parity split on the leading axis (no strided slicing)
    y4 = y.reshape(hp, 2, planes, wo)
    y_even = y4[:, 0]                                                 # rows 2*ph
    y_odd = y4[:, 1]                                                  # rows 2*ph + 1
    y_up = jnp.concatenate([jnp.zeros((1, planes, wo), jnp.float32), y_odd[:-1]], axis=0)
    rowmax = jnp.maximum(jnp.maximum(y_even, y_odd), y_up)            # (Hp, planes, Wo)

    # columns: three exact one-hot gathers on the MXU (cols 2pw-1 / 2pw / 2pw+1), then max
    r2 = rowmax.reshape(hp * planes, wo)
    p0 = jnp.dot(r2, s_ref[0], preferred_element_type=jnp.float32)    # col 2*pw - 1 (0 at pw=0)
    p1 = jnp.dot(r2, s_ref[1], preferred_element_type=jnp.float32)    # col 2*pw
    p2 = jnp.dot(r2, s_ref[2], preferred_element_type=jnp.float32)    # col 2*pw + 1
    pooled = jnp.maximum(jnp.maximum(p0, p1), p2).reshape(hp, planes, wp)

    o_ref[0] = pooled.astype(o_ref.dtype)


def intro_block(x_nchw, conv_w, gamma, beta):
    """x_nchw: (N, Cin, H, W); conv_w: (planes, Cin, 7, 7); gamma/beta: (planes,)."""
    n, cin, h, w_dim = x_nchw.shape
    planes = conv_w.shape[0]
    assert h % 4 == 0 and w_dim % 4 == 0, "this tiling needs H, W divisible by 4"

    ho = (h + 2 * 3 - 7) // 2 + 1
    wo = (w_dim + 2 * 3 - 7) // 2 + 1
    assert ho % 2 == 0 and wo % 2 == 0, "even conv output dims required by the pooling split"
    hp = (ho + 2 * 1 - 3) // 2 + 1
    wp = (wo + 2 * 1 - 3) // 2 + 1

    hh = (h + 6) // 2
    wh = (w_dim + 6) // 2
    cin_pad = cin + (cin & 1)                  # even channel count -> aligned packed bf16 stores
    k_real = 7 * 7 * cin_pad
    kpad = ((k_real + 15) // 16) * 16          # bf16 sublane granule, NOT a 128-lane multiple

    # --- cheap boundary glue (~1x input traffic): bf16, pad, 2x2 space-to-depth, cin on sublanes ---
    x = jnp.transpose(x_nchw, (0, 2, 3, 1)).astype(jnp.bfloat16)           # NHWC
    x_pad = jnp.pad(x, ((0, 0), (3, 3), (3, 3), (0, cin_pad - cin)))       # (N, H+6, W+6, cin_pad)
    xs = (x_pad.reshape(n, hh, 2, wh, 2, cin_pad)
               .transpose(0, 2, 4, 1, 5, 3)                                # (n, a, b, row, c, col)
               .reshape(n, 4 * hh, cin_pad, wh))
    # xs[n, (a*2+b)*hh + i, c, j] = x_pad[n, 2i+a, 2j+b, c]

    # conv weights (planes, Cin, 7, 7) -> (planes, K) with K ordered (kh, kw, c); zero-padded tails
    w2 = jnp.transpose(conv_w, (0, 2, 3, 1))                               # (planes, 7, 7, cin)
    w2 = jnp.pad(w2, ((0, 0), (0, 0), (0, 0), (0, cin_pad - cin))).reshape(planes, k_real)
    w2 = jnp.pad(w2, ((0, 0), (0, kpad - k_real))).astype(jnp.bfloat16)

    g2 = gamma.reshape(planes, 1).astype(jnp.float32)
    b2 = beta.reshape(planes, 1).astype(jnp.float32)

    # one-hot column-selection matrices: sel[d, iw, pw] = 1 iff iw == 2*pw + d - 1
    iw = jnp.arange(wo)[None, :, None]
    pw_i = jnp.arange(wp)[None, None, :]
    d = jnp.arange(3)[:, None, None]
    sel = (iw == 2 * pw_i + d - 1).astype(jnp.float32)                     # (3, Wo, Wp)

    kernel = functools.partial(intro_block_kernel, ho=ho, wo=wo, cin=cin_pad, hh=hh)
    out = pl.pallas_call(
        kernel,
        out_shape=jax.ShapeDtypeStruct((n, hp, planes, wp), jnp.float32),
        grid_spec=pltpu.PrefetchScalarGridSpec(
            num_scalar_prefetch=0,
            grid=(n,),
            in_specs=[
                pl.BlockSpec((1, 4 * hh, cin_pad, wh), lambda i: (i, 0, 0, 0)),
                pl.BlockSpec((planes, kpad), lambda i: (0, 0)),
                pl.BlockSpec((planes, 1), lambda i: (0, 0)),
                pl.BlockSpec((planes, 1), lambda i: (0, 0)),
                pl.BlockSpec((3, wo, wp), lambda i: (0, 0, 0)),
            ],
            out_specs=pl.BlockSpec((1, hp, planes, wp), lambda i: (i, 0, 0, 0)),
            scratch_shapes=[pltpu.VMEM((ho, kpad, wo), jnp.bfloat16)],
        ),
        compiler_params=pltpu.CompilerParams(
            dimension_semantics=("parallel",),        # batch elems shard across two TensorCores
            vmem_limit_bytes=32 * 1024 * 1024,        # safe on v5e/v6e/v7x; raise on 128 MiB parts
        ),
    )(xs, w2, g2, b2, sel)

    return jnp.transpose(out, (0, 2, 1, 3))           # -> (N, planes, Hp, Wp) NCHW


def reference(x_nchw, conv_w, gamma, beta):
    """Pure-JAX reference of IntroBlock (instance norm).  Conv operands are quantized to bf16 to
    mirror the kernel's bf16 MXU inputs; accumulation and everything else stays f32."""
    x = jnp.transpose(x_nchw, (0, 2, 3, 1)).astype(jnp.bfloat16).astype(jnp.float32)
    w_hwio = jnp.transpose(conv_w, (2, 3, 1, 0)).astype(jnp.bfloat16).astype(jnp.float32)
    conv = lax.conv_general_dilated(
        x, w_hwio, window_strides=(2, 2), padding=((3, 3), (3, 3)),
        dimension_numbers=("NHWC", "HWIO", "NHWC"))
    mean = jnp.mean(conv, axis=(1, 2), keepdims=True)
    var = jnp.mean((conv - mean) ** 2, axis=(1, 2), keepdims=True)
    y = (conv - mean) * lax.rsqrt(var + EPS)
    y = y * gamma.reshape(1, 1, 1, -1) + beta.reshape(1, 1, 1, -1)
    y = jnp.maximum(y, 0.0)
    pooled = lax.reduce_window(
        y, -jnp.inf, lax.max, (1, 3, 3, 1), (1, 2, 2, 1),
        ((0, 0), (1, 1), (1, 1), (0, 0)))
    return jnp.transpose(pooled, (0, 3, 1, 2))


if __name__ == "__main__":
    key = jax.random.PRNGKey(0)
    k1, k2, k3, k4 = jax.random.split(key, 4)

    N, CIN, H, W = 2, 3, 16, 16
    PLANES = 8

    x = jax.random.normal(k1, (N, CIN, H, W), jnp.float32)
    conv_w = jax.random.normal(k2, (PLANES, CIN, 7, 7), jnp.float32) / (7 * 7 * CIN) ** 0.5
    gamma = 1.0 + 0.1 * jax.random.normal(k3, (PLANES,), jnp.float32)
    beta = 0.1 * jax.random.normal(k4, (PLANES,), jnp.float32)

    out = jax.block_until_ready(intro_block(x, conv_w, gamma, beta))
    ref = jax.block_until_ready(reference(x, conv_w, gamma, beta))

    assert out.shape == (N, PLANES, 4, 4), out.shape
    max_err = float(jnp.max(jnp.abs(out - ref)))
    assert jnp.allclose(out, ref, atol=2e-3, rtol=2e-3), f"max abs err = {max_err}"
    print("KERNEL_OK")
</pallas_src>

<mosaic_0001>
module attributes {stable_mosaic.version = 11 : i64} {
  func.func @intro_block_kernel(%arg0: i32, %arg1: memref<1x44x4x11xbf16, #tpu.memory_space<vmem>>, %arg2: memref<8x208xbf16, #tpu.memory_space<vmem>>, %arg3: memref<8x1xf32, #tpu.memory_space<vmem>>, %arg4: memref<8x1xf32, #tpu.memory_space<vmem>>, %arg5: memref<3x8x4xf32, #tpu.memory_space<vmem>>, %arg6: memref<1x4x8x4xf32, #tpu.memory_space<vmem>>, %arg7: memref<8x208x8xbf16, #tpu.memory_space<vmem>>) attributes {dimension_semantics = [#tpu.dimension_semantics<parallel>], iteration_bounds = array<i64: 2>, scalar_prefetch = 0 : i64, scratch_operands = 1 : i64, tpu.core_type = #tpu.core_type<tc>, window_params = [{transform_indices = @transform_0, window_bounds = array<i64: 1, 44, 4, 11>}, {pipeline_mode = #tpu.pipeline_mode<synchronous>, transform_indices = @transform_1, window_bounds = array<i64: 8, 208>}, {pipeline_mode = #tpu.pipeline_mode<synchronous>, transform_indices = @transform_2, window_bounds = array<i64: 8, 1>}, {pipeline_mode = #tpu.pipeline_mode<synchronous>, transform_indices = @transform_3, window_bounds = array<i64: 8, 1>}, {pipeline_mode = #tpu.pipeline_mode<synchronous>, transform_indices = @transform_4, window_bounds = array<i64: 3, 8, 4>}, {transform_indices = @transform_5, window_bounds = array<i64: 1, 4, 8, 4>}]} {
    %cst = arith.constant 0.000000e+00 : bf16
    %0 = vector.broadcast %cst : bf16 to vector<8x12x8xbf16>
    %c0 = arith.constant 0 : index
    %c196 = arith.constant 196 : index
    %c0_0 = arith.constant 0 : index
    %1 = vector.load %arg7[%c0, %c196, %c0_0] : memref<8x208x8xbf16, #tpu.memory_space<vmem>>, vector<8x12x8xbf16>
    tpu.vector_store %arg7[%c0, %c196, %c0_0], %0 {strides = array<i32>} : memref<8x208x8xbf16, #tpu.memory_space<vmem>>, vector<8x12x8xbf16>,
    %c0_1 = arith.constant 0 : index
    %c0_2 = arith.constant 0 : index
    %c0_3 = arith.constant 0 : index
    %c0_4 = arith.constant 0 : index
    %2 = vector.load %arg1[%c0_1, %c0_2, %c0_3, %c0_4] : memref<1x44x4x11xbf16, #tpu.memory_space<vmem>>, vector<1x8x4x8xbf16>
    %3 = vector.shape_cast %2 : vector<1x8x4x8xbf16> to vector<8x4x8xbf16>
    %c0_5 = arith.constant 0 : index
    %c0_6 = arith.constant 0 : index
    %c0_7 = arith.constant 0 : index
    %4 = vector.load %arg7[%c0_5, %c0_6, %c0_7] : memref<8x208x8xbf16, #tpu.memory_space<vmem>>, vector<8x4x8xbf16>
    tpu.vector_store %arg7[%c0_5, %c0_6, %c0_7], %3 {strides = array<i32>} : memref<8x208x8xbf16, #tpu.memory_space<vmem>>, vector<8x4x8xbf16>,
    %c0_8 = arith.constant 0 : index
    %c11 = arith.constant 11 : index
    %c0_9 = arith.constant 0 : index
    %c0_10 = arith.constant 0 : index
    %5 = vector.load %arg1[%c0_8, %c11, %c0_9, %c0_10] : memref<1x44x4x11xbf16, #tpu.memory_space<vmem>>, vector<1x8x4x8xbf16>
    %6 = vector.shape_cast %5 : vector<1x8x4x8xbf16> to vector<8x4x8xbf16>
    %c0_11 = arith.constant 0 : index
    %c4 = arith.constant 4 : index
    %c0_12 = arith.constant 0 : index
    %7 = vector.load %arg7[%c0_11, %c4, %c0_12] : memref<8x208x8xbf16, #tpu.memory_space<vmem>>, vector<8x4x8xbf16>
    tpu.vector_store %arg7[%c0_11, %c4, %c0_12], %6 {strides = array<i32>} : memref<8x208x8xbf16, #tpu.memory_space<vmem>>, vector<8x4x8xbf16>,
    %c0_13 = arith.constant 0 : index
    %c0_14 = arith.constant 0 : index
    %c0_15 = arith.constant 0 : index
    %c1 = arith.constant 1 : index
    %8 = vector.load %arg1[%c0_13, %c0_14, %c0_15, %c1] : memref<1x44x4x11xbf16, #tpu.memory_space<vmem>>, vector<1x8x4x8xbf16>
    %9 = vector.shape_cast %8 : vector<1x8x4x8xbf16> to vector<8x4x8xbf16>
    %c0_16 = arith.constant 0 : index
    %c8 = arith.constant 8 : index
    %c0_17 = arith.constant 0 : index
    %10 = vector.load %arg7[%c0_16, %c8, %c0_17] : memref<8x208x8xbf16, #tpu.memory_space<vmem>>, vector<8x4x8xbf16>
    tpu.vector_store %arg7[%c0_16, %c8, %c0_17], %9 {strides = array<i32>} : memref<8x208x8xbf16, #tpu.memory_space<vmem>>, vector<8x4x8xbf16>,
    %c0_18 = arith.constant 0 : index
    %c11_19 = arith.constant 11 : index
    %c0_20 = arith.constant 0 : index
    %c1_21 = arith.constant 1 : index
    %11 = vector.load %arg1[%c0_18, %c11_19, %c0_20, %c1_21] : memref<1x44x4x11xbf16, #tpu.memory_space<vmem>>, vector<1x8x4x8xbf16>
    %12 = vector.shape_cast %11 : vector<1x8x4x8xbf16> to vector<8x4x8xbf16>
    %c0_22 = arith.constant 0 : index
    %c12 = arith.constant 12 : index
    %c0_23 = arith.constant 0 : index
    %13 = vector.load %arg7[%c0_22, %c12, %c0_23] : memref<8x208x8xbf16, #tpu.memory_space<vmem>>, vector<8x4x8xbf16>
    tpu.vector_store %arg7[%c0_22, %c12, %c0_23], %12 {strides = array<i32>} : memref<8x208x8xbf16, #tpu.memory_space<vmem>>, vector<8x4x8xbf16>,
    %c0_24 = arith.constant 0 : index
    %c0_25 = arith.constant 0 : index
    %c0_26 = arith.constant 0 : index
    %c2 = arith.constant 2 : index
    %14 = vector.load %arg1[%c0_24, %c0_25, %c0_26, %c2] : memref<1x44x4x11xbf16, #tpu.memory_space<vmem>>, vector<1x8x4x8xbf16>
    %15 = vector.shape_cast %14 : vector<1x8x4x8xbf16> to vector<8x4x8xbf16>
    %c0_27 = arith.constant 0 : index
    %c16 = arith.constant 16 : index
    %c0_28 = arith.constant 0 : index
    %16 = vector.load %arg7[%c0_27, %c16, %c0_28] : memref<8x208x8xbf16, #tpu.memory_space<vmem>>, vector<8x4x8xbf16>
    tpu.vector_store %arg7[%c0_27, %c16, %c0_28], %15 {strides = array<i32>} : memref<8x208x8xbf16, #tpu.memory_space<vmem>>, vector<8x4x8xbf16>,
    %c0_29 = arith.constant 0 : index
    %c11_30 = arith.constant 11 : index
    %c0_31 = arith.constant 0 : index
    %c2_32 = arith.constant 2 : index
    %17 = vector.load %arg1[%c0_29, %c11_30, %c0_31, %c2_32] : memref<1x44x4x11xbf16, #tpu.memory_space<vmem>>, vector<1x8x4x8xbf16>
    %18 = vector.shape_cast %17 : vector<1x8x4x8xbf16> to vector<8x4x8xbf16>
    %c0_33 = arith.constant 0 : index
    %c20 = arith.constant 20 : index
    %c0_34 = arith.constant 0 : index
    %19 = vector.load %arg7[%c0_33, %c20, %c0_34] : memref<8x208x8xbf16, #tpu.memory_space<vmem>>, vector<8x4x8xbf16>
    tpu.vector_store %arg7[%c0_33, %c20, %c0_34], %18 {strides = array<i32>} : memref<8x208x8xbf16, #tpu.memory_space<vmem>>, vector<8x4x8xbf16>,
    %c0_35 = arith.constant 0 : index
    %c0_36 = arith.constant 0 : index
    %c0_37 = arith.constant 0 : index
    %c3 = arith.constant 3 : index
    %20 = vector.load %arg1[%c0_35, %c0_36, %c0_37, %c3] : memref<1x44x4x11xbf16, #tpu.memory_space<vmem>>, vector<1x8x4x8xbf16>
    %21 = vector.shape_cast %20 : vector<1x8x4x8xbf16> to vector<8x4x8xbf16>
    %c0_38 = arith.constant 0 : index
    %c24 = arith.constant 24 : index
    %c0_39 = arith.constant 0 : index
    %22 = vector.load %arg7[%c0_38, %c24, %c0_39] : memref<8x208x8xbf16, #tpu.memory_space<vmem>>, vector<8x4x8xbf16>
    tpu.vector_store %arg7[%c0_38, %c24, %c0_39], %21 {strides = array<i32>} : memref<8x208x8xbf16, #tpu.memory_space<vmem>>, vector<8x4x8xbf16>,
    %c0_40 = arith.constant 0 : index
    %c22 = arith.constant 22 : index
    %c0_41 = arith.constant 0 : index
    %c0_42 = arith.constant 0 : index
    %23 = vector.load %arg1[%c0_40, %c22, %c0_41, %c0_42] : memref<1x44x4x11xbf16, #tpu.memory_space<vmem>>, vector<1x8x4x8xbf16>
    %24 = vector.shape_cast %23 : vector<1x8x4x8xbf16> to vector<8x4x8xbf16>
    %c0_43 = arith.constant 0 : index
    %c28 = arith.constant 28 : index
    %c0_44 = arith.constant 0 : index
    %25 = vector.load %arg7[%c0_43, %c28, %c0_44] : memref<8x208x8xbf16, #tpu.memory_space<vmem>>, vector<8x4x8xbf16>
    tpu.vector_store %arg7[%c0_43, %c28, %c0_44], %24 {strides = array<i32>} : memref<8x208x8xbf16, #tpu.memory_space<vmem>>, vector<8x4x8xbf16>,
    %c0_45 = arith.constant 0 : index
    %c33 = arith.constant 33 : index
    %c0_46 = arith.constant 0 : index
    %c0_47 = arith.constant 0 : index
    %26 = vector.load %arg1[%c0_45, %c33, %c0_46, %c0_47] : memref<1x44x4x11xbf16, #tpu.memory_space<vmem>>, vector<1x8x4x8xbf16>
    %27 = vector.shape_cast %26 : vector<1x8x4x8xbf16> to vector<8x4x8xbf16>
    %c0_48 = arith.constant 0 : index
    %c32 = arith.constant 32 : index
    %c0_49 = arith.constant 0 : index
    %28 = vector.load %arg7[%c0_48, %c32, %c0_49] : memref<8x208x8xbf16, #tpu.memory_space<vmem>>, vector<8x4x8xbf16>
    tpu.vector_store %arg7[%c0_48, %c32, %c0_49], %27 {strides = array<i32>} : memref<8x208x8xbf16, #tpu.memory_space<vmem>>, vector<8x4x8xbf16>,
    %c0_50 = arith.constant 0 : index
    %c22_51 = arith.constant 22 : index
    %c0_52 = arith.constant 0 : index
    %c1_53 = arith.constant 1 : index
    %29 = vector.load %arg1[%c0_50, %c22_51, %c0_52, %c1_53] : memref<1x44x4x11xbf16, #tpu.memory_space<vmem>>, vector<1x8x4x8xbf16>
    %30 = vector.shape_cast %29 : vector<1x8x4x8xbf16> to vector<8x4x8xbf16>
    %c0_54 = arith.constant 0 : index
    %c36 = arith.constant 36 : index
    %c0_55 = arith.constant 0 : index
    %31 = vector.load %arg7[%c0_54, %c36, %c0_55] : memref<8x208x8xbf16, #tpu.memory_space<vmem>>, vector<8x4x8xbf16>
    tpu.vector_store %arg7[%c0_54, %c36, %c0_55], %30 {strides = array<i32>} : memref<8x208x8xbf16, #tpu.memory_space<vmem>>, vector<8x4x8xbf16>,
    %c0_56 = arith.constant 0 : index
    %c33_57 = arith.constant 33 : index
    %c0_58 = arith.constant 0 : index
    %c1_59 = arith.constant 1 : index
    %32 = vector.load %arg1[%c0_56, %c33_57, %c0_58, %c1_59] : memref<1x44x4x11xbf16, #tpu.memory_space<vmem>>, vector<1x8x4x8xbf16>
    %33 = vector.shape_cast %32 : vector<1x8x4x8xbf16> to vector<8x4x8xbf16>
    %c0_60 = arith.constant 0 : index
    %c40 = arith.constant 40 : index
    %c0_61 = arith.constant 0 : index
    %34 = vector.load %arg7[%c0_60, %c40, %c0_61] : memref<8x208x8xbf16, #tpu.memory_space<vmem>>, vector<8x4x8xbf16>
    tpu.vector_store %arg7[%c0_60, %c40, %c0_61], %33 {strides = array<i32>} : memref<8x208x8xbf16, #tpu.memory_space<vmem>>, vector<8x4x8xbf16>,
    %c0_62 = arith.constant 0 : index
    %c22_63 = arith.constant 22 : index
    %c0_64 = arith.constant 0 : index
    %c2_65 = arith.constant 2 : index
    %35 = vector.load %arg1[%c0_62, %c22_63, %c0_64, %c2_65] : memref<1x44x4x11xbf16, #tpu.memory_space<vmem>>, vector<1x8x4x8xbf16>
    %36 = vector.shape_cast %35 : vector<1x8x4x8xbf16> to vector<8x4x8xbf16>
    %c0_66 = arith.constant 0 : index
    %c44 = arith.constant 44 : index
    %c0_67 = arith.constant 0 : index
    %37 = vector.load %arg7[%c0_66, %c44, %c0_67] : memref<8x208x8xbf16, #tpu.memory_space<vmem>>, vector<8x4x8xbf16>
    tpu.vector_store %arg7[%c0_66, %c44, %c0_67], %36 {strides = array<i32>} : memref<8x208x8xbf16, #tpu.memory_space<vmem>>, vector<8x4x8xbf16>,
    %c0_68 = arith.constant 0 : index
    %c33_69 = arith.constant 33 : index
    %c0_70 = arith.constant 0 : index
    %c2_71 = arith.constant 2 : index
    %38 = vector.load %arg1[%c0_68, %c33_69, %c0_70, %c2_71] : memref<1x44x4x11xbf16, #tpu.memory_space<vmem>>, vector<1x8x4x8xbf16>
    %39 = vector.shape_cast %38 : vector<1x8x4x8xbf16> to vector<8x4x8xbf16>
    %c0_72 = arith.constant 0 : index
    %c48 = arith.constant 48 : index
    %c0_73 = arith.constant 0 : index
    %40 = vector.load %arg7[%c0_72, %c48, %c0_73] : memref<8x208x8xbf16, #tpu.memory_space<vmem>>, vector<8x4x8xbf16>
    tpu.vector_store %arg7[%c0_72, %c48, %c0_73], %39 {strides = array<i32>} : memref<8x208x8xbf16, #tpu.memory_space<vmem>>, vector<8x4x8xbf16>,
    %c0_74 = arith.constant 0 : index
    %c22_75 = arith.constant 22 : index
    %c0_76 = arith.constant 0 : index
    %c3_77 = arith.constant 3 : index
    %41 = vector.load %arg1[%c0_74, %c22_75, %c0_76, %c3_77] : memref<1x44x4x11xbf16, #tpu.memory_space<vmem>>, vector<1x8x4x8xbf16>
    %42 = vector.shape_cast %41 : vector<1x8x4x8xbf16> to vector<8x4x8xbf16>
    %c0_78 = arith.constant 0 : index
    %c52 = arith.constant 52 : index
    %c0_79 = arith.constant 0 : index
    %43 = vector.load %arg7[%c0_78, %c52, %c0_79] : memref<8x208x8xbf16, #tpu.memory_space<vmem>>, vector<8x4x8xbf16>
    tpu.vector_store %arg7[%c0_78, %c52, %c0_79], %42 {strides = array<i32>} : memref<8x208x8xbf16, #tpu.memory_space<vmem>>, vector<8x4x8xbf16>,
    %c0_80 = arith.constant 0 : index
    %c1_81 = arith.constant 1 : index
    %c0_82 = arith.constant 0 : index
    %c0_83 = arith.constant 0 : index
    %44 = vector.load %arg1[%c0_80, %c1_81, %c0_82, %c0_83] : memref<1x44x4x11xbf16, #tpu.memory_space<vmem>>, vector<1x8x4x8xbf16>
    %45 = vector.shape_cast %44 : vector<1x8x4x8xbf16> to vector<8x4x8xbf16>
    %c0_84 = arith.constant 0 : index
    %c56 = arith.constant 56 : index
    %c0_85 = arith.constant 0 : index
    %46 = vector.load %arg7[%c0_84, %c56, %c0_85] : memref<8x208x8xbf16, #tpu.memory_space<vmem>>, vector<8x4x8xbf16>
    tpu.vector_store %arg7[%c0_84, %c56, %c0_85], %45 {strides = array<i32>} : memref<8x208x8xbf16, #tpu.memory_space<vmem>>, vector<8x4x8xbf16>,
    %c0_86 = arith.constant 0 : index
    %c12_87 = arith.constant 12 : index
    %c0_88 = arith.constant 0 : index
    %c0_89 = arith.constant 0 : index
    %47 = vector.load %arg1[%c0_86, %c12_87, %c0_88, %c0_89] : memref<1x44x4x11xbf16, #tpu.memory_space<vmem>>, vector<1x8x4x8xbf16>
    %48 = vector.shape_cast %47 : vector<1x8x4x8xbf16> to vector<8x4x8xbf16>
    %c0_90 = arith.constant 0 : index
    %c60 = arith.constant 60 : index
    %c0_91 = arith.constant 0 : index
    %49 = vector.load %arg7[%c0_90, %c60, %c0_91] : memref<8x208x8xbf16, #tpu.memory_space<vmem>>, vector<8x4x8xbf16>
    tpu.vector_store %arg7[%c0_90, %c60, %c0_91], %48 {strides = array<i32>} : memref<8x208x8xbf16, #tpu.memory_space<vmem>>, vector<8x4x8xbf16>,
    %c0_92 = arith.constant 0 : index
    %c1_93 = arith.constant 1 : index
    %c0_94 = arith.constant 0 : index
    %c1_95 = arith.constant 1 : index
    %50 = vector.load %arg1[%c0_92, %c1_93, %c0_94, %c1_95] : memref<1x44x4x11xbf16, #tpu.memory_space<vmem>>, vector<1x8x4x8xbf16>
    %51 = vector.shape_cast %50 : vector<1x8x4x8xbf16> to vector<8x4x8xbf16>
    %c0_96 = arith.constant 0 : index
    %c64 = arith.constant 64 : index
    %c0_97 = arith.constant 0 : index
    %52 = vector.load %arg7[%c0_96, %c64, %c0_97] : memref<8x208x8xbf16, #tpu.memory_space<vmem>>, vector<8x4x8xbf16>
    tpu.vector_store %arg7[%c0_96, %c64, %c0_97], %51 {strides = array<i32>} : memref<8x208x8xbf16, #tpu.memory_space<vmem>>, vector<8x4x8xbf16>,
    %c0_98 = arith.constant 0 : index
    %c12_99 = arith.constant 12 : index
    %c0_100 = arith.constant 0 : index
    %c1_101 = arith.constant 1 : index
    %53 = vector.load %arg1[%c0_98, %c12_99, %c0_100, %c1_101] : memref<1x44x4x11xbf16, #tpu.memory_space<vmem>>, vector<1x8x4x8xbf16>
    %54 = vector.shape_cast %53 : vector<1x8x4x8xbf16> to vector<8x4x8xbf16>
    %c0_102 = arith.constant 0 : index
    %c68 = arith.constant 68 : index
    %c0_103 = arith.constant 0 : index
    %55 = vector.load %arg7[%c0_102, %c68, %c0_103] : memref<8x208x8xbf16, #tpu.memory_space<vmem>>, vector<8x4x8xbf16>
    tpu.vector_store %arg7[%c0_102, %c68, %c0_103], %54 {strides = array<i32>} : memref<8x208x8xbf16, #tpu.memory_space<vmem>>, vector<8x4x8xbf16>,
    %c0_104 = arith.constant 0 : index
    %c1_105 = arith.constant 1 : index
    %c0_106 = arith.constant 0 : index
    %c2_107 = arith.constant 2 : index
    %56 = vector.load %arg1[%c0_104, %c1_105, %c0_106, %c2_107] : memref<1x44x4x11xbf16, #tpu.memory_space<vmem>>, vector<1x8x4x8xbf16>
    %57 = vector.shape_cast %56 : vector<1x8x4x8xbf16> to vector<8x4x8xbf16>
    %c0_108 = arith.constant 0 : index
    %c72 = arith.constant 72 : index
    %c0_109 = arith.constant 0 : index
    %58 = vector.load %arg7[%c0_108, %c72, %c0_109] : memref<8x208x8xbf16, #tpu.memory_space<vmem>>, vector<8x4x8xbf16>
    tpu.vector_store %arg7[%c0_108, %c72, %c0_109], %57 {strides = array<i32>} : memref<8x208x8xbf16, #tpu.memory_space<vmem>>, vector<8x4x8xbf16>,
    %c0_110 = arith.constant 0 : index
    %c12_111 = arith.constant 12 : index
    %c0_112 = arith.constant 0 : index
    %c2_113 = arith.constant 2 : index
    %59 = vector.load %arg1[%c0_110, %c12_111, %c0_112, %c2_113] : memref<1x44x4x11xbf16, #tpu.memory_space<vmem>>, vector<1x8x4x8xbf16>
    %60 = vector.shape_cast %59 : vector<1x8x4x8xbf16> to vector<8x4x8xbf16>
    %c0_114 = arith.constant 0 : index
    %c76 = arith.constant 76 : index
    %c0_115 = arith.constant 0 : index
    %61 = vector.load %arg7[%c0_114, %c76, %c0_115] : memref<8x208x8xbf16, #tpu.memory_space<vmem>>, vector<8x4x8xbf16>
    tpu.vector_store %arg7[%c0_114, %c76, %c0_115], %60 {strides = array<i32>} : memref<8x208x8xbf16, #tpu.memory_space<vmem>>, vector<8x4x8xbf16>,
    %c0_116 = arith.constant 0 : index
    %c1_117 = arith.constant 1 : index
    %c0_118 = arith.constant 0 : index
    %c3_119 = arith.constant 3 : index
    %62 = vector.load %arg1[%c0_116, %c1_117, %c0_118, %c3_119] : memref<1x44x4x11xbf16, #tpu.memory_space<vmem>>, vector<1x8x4x8xbf16>
    %63 = vector.shape_cast %62 : vector<1x8x4x8xbf16> to vector<8x4x8xbf16>
    %c0_120 = arith.constant 0 : index
    %c80 = arith.constant 80 : index
    %c0_121 = arith.constant 0 : index
    %64 = vector.load %arg7[%c0_120, %c80, %c0_121] : memref<8x208x8xbf16, #tpu.memory_space<vmem>>, vector<8x4x8xbf16>
    tpu.vector_store %arg7[%c0_120, %c80, %c0_121], %63 {strides = array<i32>} : memref<8x208x8xbf16, #tpu.memory_space<vmem>>, vector<8x4x8xbf16>,
    %c0_122 = arith.constant 0 : index
    %c23 = arith.constant 23 : index
    %c0_123 = arith.constant 0 : index
    %c0_124 = arith.constant 0 : index
    %65 = vector.load %arg1[%c0_122, %c23, %c0_123, %c0_124] : memref<1x44x4x11xbf16, #tpu.memory_space<vmem>>, vector<1x8x4x8xbf16>
    %66 = vector.shape_cast %65 : vector<1x8x4x8xbf16> to vector<8x4x8xbf16>
    %c0_125 = arith.constant 0 : index
    %c84 = arith.constant 84 : index
    %c0_126 = arith.constant 0 : index
    %67 = vector.load %arg7[%c0_125, %c84, %c0_126] : memref<8x208x8xbf16, #tpu.memory_space<vmem>>, vector<8x4x8xbf16>
    tpu.vector_store %arg7[%c0_125, %c84, %c0_126], %66 {strides = array<i32>} : memref<8x208x8xbf16, #tpu.memory_space<vmem>>, vector<8x4x8xbf16>,
    %c0_127 = arith.constant 0 : index
    %c34 = arith.constant 34 : index
    %c0_128 = arith.constant 0 : index
    %c0_129 = arith.constant 0 : index
    %68 = vector.load %arg1[%c0_127, %c34, %c0_128, %c0_129] : memref<1x44x4x11xbf16, #tpu.memory_space<vmem>>, vector<1x8x4x8xbf16>
    %69 = vector.shape_cast %68 : vector<1x8x4x8xbf16> to vector<8x4x8xbf16>
    %c0_130 = arith.constant 0 : index
    %c88 = arith.constant 88 : index
    %c0_131 = arith.constant 0 : index
    %70 = vector.load %arg7[%c0_130, %c88, %c0_131] : memref<8x208x8xbf16, #tpu.memory_space<vmem>>, vector<8x4x8xbf16>
    tpu.vector_store %arg7[%c0_130, %c88, %c0_131], %69 {strides = array<i32>} : memref<8x208x8xbf16, #tpu.memory_space<vmem>>, vector<8x4x8xbf16>,
    %c0_132 = arith.constant 0 : index
    %c23_133 = arith.constant 23 : index
    %c0_134 = arith.constant 0 : index
    %c1_135 = arith.constant 1 : index
    %71 = vector.load %arg1[%c0_132, %c23_133, %c0_134, %c1_135] : memref<1x44x4x11xbf16, #tpu.memory_space<vmem>>, vector<1x8x4x8xbf16>
    %72 = vector.shape_cast %71 : vector<1x8x4x8xbf16> to vector<8x4x8xbf16>
    %c0_136 = arith.constant 0 : index
    %c92 = arith.constant 92 : index
    %c0_137 = arith.constant 0 : index
    %73 = vector.load %arg7[%c0_136, %c92, %c0_137] : memref<8x208x8xbf16, #tpu.memory_space<vmem>>, vector<8x4x8xbf16>
    tpu.vector_store %arg7[%c0_136, %c92, %c0_137], %72 {strides = array<i32>} : memref<8x208x8xbf16, #tpu.memory_space<vmem>>, vector<8x4x8xbf16>,
    %c0_138 = arith.constant 0 : index
    %c34_139 = arith.constant 34 : index
    %c0_140 = arith.constant 0 : index
    %c1_141 = arith.constant 1 : index
    %74 = vector.load %arg1[%c0_138, %c34_139, %c0_140, %c1_141] : memref<1x44x4x11xbf16, #tpu.memory_space<vmem>>, vector<1x8x4x8xbf16>
    %75 = vector.shape_cast %74 : vector<1x8x4x8xbf16> to vector<8x4x8xbf16>
    %c0_142 = arith.constant 0 : index
    %c96 = arith.constant 96 : index
    %c0_143 = arith.constant 0 : index
    %76 = vector.load %arg7[%c0_142, %c96, %c0_143] : memref<8x208x8xbf16, #tpu.memory_space<vmem>>, vector<8x4x8xbf16>
    tpu.vector_store %arg7[%c0_142, %c96, %c0_143], %75 {strides = array<i32>} : memref<8x208x8xbf16, #tpu.memory_space<vmem>>, vector<8x4x8xbf16>,
    %c0_144 = arith.constant 0 : index
    %c23_145 = arith.constant 23 : index
    %c0_146 = arith.constant 0 : index
    %c2_147 = arith.constant 2 : index
    %77 = vector.load %arg1[%c0_144, %c23_145, %c0_146, %c2_147] : memref<1x44x4x11xbf16, #tpu.memory_space<vmem>>, vector<1x8x4x8xbf16>
    %78 = vector.shape_cast %77 : vector<1x8x4x8xbf16> to vector<8x4x8xbf16>
    %c0_148 = arith.constant 0 : index
    %c100 = arith.constant 100 : index
    %c0_149 = arith.constant 0 : index
    %79 = vector.load %arg7[%c0_148, %c100, %c0_149] : memref<8x208x8xbf16, #tpu.memory_space<vmem>>, vector<8x4x8xbf16>
    tpu.vector_store %arg7[%c0_148, %c100, %c0_149], %78 {strides = array<i32>} : memref<8x208x8xbf16, #tpu.memory_space<vmem>>, vector<8x4x8xbf16>,
    %c0_150 = arith.constant 0 : index
    %c34_151 = arith.constant 34 : index
    %c0_152 = arith.constant 0 : index
    %c2_153 = arith.constant 2 : index
    %80 = vector.load %arg1[%c0_150, %c34_151, %c0_152, %c2_153] : memref<1x44x4x11xbf16, #tpu.memory_space<vmem>>, vector<1x8x4x8xbf16>
    %81 = vector.shape_cast %80 : vector<1x8x4x8xbf16> to vector<8x4x8xbf16>
    %c0_154 = arith.constant 0 : index
    %c104 = arith.constant 104 : index
    %c0_155 = arith.constant 0 : index
    %82 = vector.load %arg7[%c0_154, %c104, %c0_155] : memref<8x208x8xbf16, #tpu.memory_space<vmem>>, vector<8x4x8xbf16>
    tpu.vector_store %arg7[%c0_154, %c104, %c0_155], %81 {strides = array<i32>} : memref<8x208x8xbf16, #tpu.memory_space<vmem>>, vector<8x4x8xbf16>,
    %c0_156 = arith.constant 0 : index
    %c23_157 = arith.constant 23 : index
    %c0_158 = arith.constant 0 : index
    %c3_159 = arith.constant 3 : index
    %83 = vector.load %arg1[%c0_156, %c23_157, %c0_158, %c3_159] : memref<1x44x4x11xbf16, #tpu.memory_space<vmem>>, vector<1x8x4x8xbf16>
    %84 = vector.shape_cast %83 : vector<1x8x4x8xbf16> to vector<8x4x8xbf16>
    %c0_160 = arith.constant 0 : index
    %c108 = arith.constant 108 : index
    %c0_161 = arith.constant 0 : index
    %85 = vector.load %arg7[%c0_160, %c108, %c0_161] : memref<8x208x8xbf16, #tpu.memory_space<vmem>>, vector<8x4x8xbf16>
    tpu.vector_store %arg7[%c0_160, %c108, %c0_161], %84 {strides = array<i32>} : memref<8x208x8xbf16, #tpu.memory_space<vmem>>, vector<8x4x8xbf16>,
    %c0_162 = arith.constant 0 : index
    %c2_163 = arith.constant 2 : index
    %c0_164 = arith.constant 0 : index
    %c0_165 = arith.constant 0 : index
    %86 = vector.load %arg1[%c0_162, %c2_163, %c0_164, %c0_165] : memref<1x44x4x11xbf16, #tpu.memory_space<vmem>>, vector<1x8x4x8xbf16>
    %87 = vector.shape_cast %86 : vector<1x8x4x8xbf16> to vector<8x4x8xbf16>
    %c0_166 = arith.constant 0 : index
    %c112 = arith.constant 112 : index
    %c0_167 = arith.constant 0 : index
    %88 = vector.load %arg7[%c0_166, %c112, %c0_167] : memref<8x208x8xbf16, #tpu.memory_space<vmem>>, vector<8x4x8xbf16>
    tpu.vector_store %arg7[%c0_166, %c112, %c0_167], %87 {strides = array<i32>} : memref<8x208x8xbf16, #tpu.memory_space<vmem>>, vector<8x4x8xbf16>,
    %c0_168 = arith.constant 0 : index
    %c13 = arith.constant 13 : index
    %c0_169 = arith.constant 0 : index
    %c0_170 = arith.constant 0 : index
    %89 = vector.load %arg1[%c0_168, %c13, %c0_169, %c0_170] : memref<1x44x4x11xbf16, #tpu.memory_space<vmem>>, vector<1x8x4x8xbf16>
    %90 = vector.shape_cast %89 : vector<1x8x4x8xbf16> to vector<8x4x8xbf16>
    %c0_171 = arith.constant 0 : index
    %c116 = arith.constant 116 : index
    %c0_172 = arith.constant 0 : index
    %91 = vector.load %arg7[%c0_171, %c116, %c0_172] : memref<8x208x8xbf16, #tpu.memory_space<vmem>>, vector<8x4x8xbf16>
    tpu.vector_store %arg7[%c0_171, %c116, %c0_172], %90 {strides = array<i32>} : memref<8x208x8xbf16, #tpu.memory_space<vmem>>, vector<8x4x8xbf16>,
    %c0_173 = arith.constant 0 : index
    %c2_174 = arith.constant 2 : index
    %c0_175 = arith.constant 0 : index
    %c1_176 = arith.constant 1 : index
    %92 = vector.load %arg1[%c0_173, %c2_174, %c0_175, %c1_176] : memref<1x44x4x11xbf16, #tpu.memory_space<vmem>>, vector<1x8x4x8xbf16>
    %93 = vector.shape_cast %92 : vector<1x8x4x8xbf16> to vector<8x4x8xbf16>
    %c0_177 = arith.constant 0 : index
    %c120 = arith.constant 120 : index
    %c0_178 = arith.constant 0 : index
    %94 = vector.load %arg7[%c0_177, %c120, %c0_178] : memref<8x208x8xbf16, #tpu.memory_space<vmem>>, vector<8x4x8xbf16>
    tpu.vector_store %arg7[%c0_177, %c120, %c0_178], %93 {strides = array<i32>} : memref<8x208x8xbf16, #tpu.memory_space<vmem>>, vector<8x4x8xbf16>,
    %c0_179 = arith.constant 0 : index
    %c13_180 = arith.constant 13 : index
    %c0_181 = arith.constant 0 : index
    %c1_182 = arith.constant 1 : index
    %95 = vector.load %arg1[%c0_179, %c13_180, %c0_181, %c1_182] : memref<1x44x4x11xbf16, #tpu.memory_space<vmem>>, vector<1x8x4x8xbf16>
    %96 = vector.shape_cast %95 : vector<1x8x4x8xbf16> to vector<8x4x8xbf16>
    %c0_183 = arith.constant 0 : index
    %c124 = arith.constant 124 : index
    %c0_184 = arith.constant 0 : index
    %97 = vector.load %arg7[%c0_183, %c124, %c0_184] : memref<8x208x8xbf16, #tpu.memory_space<vmem>>, vector<8x4x8xbf16>
    tpu.vector_store %arg7[%c0_183, %c124, %c0_184], %96 {strides = array<i32>} : memref<8x208x8xbf16, #tpu.memory_space<vmem>>, vector<8x4x8xbf16>,
    %c0_185 = arith.constant 0 : index
    %c2_186 = arith.constant 2 : index
    %c0_187 = arith.constant 0 : index
    %c2_188 = arith.constant 2 : index
    %98 = vector.load %arg1[%c0_185, %c2_186, %c0_187, %c2_188] : memref<1x44x4x11xbf16, #tpu.memory_space<vmem>>, vector<1x8x4x8xbf16>
    %99 = vector.shape_cast %98 : vector<1x8x4x8xbf16> to vector<8x4x8xbf16>
    %c0_189 = arith.constant 0 : index
    %c128 = arith.constant 128 : index
    %c0_190 = arith.constant 0 : index
    %100 = vector.load %arg7[%c0_189, %c128, %c0_190] : memref<8x208x8xbf16, #tpu.memory_space<vmem>>, vector<8x4x8xbf16>
    tpu.vector_store %arg7[%c0_189, %c128, %c0_190], %99 {strides = array<i32>} : memref<8x208x8xbf16, #tpu.memory_space<vmem>>, vector<8x4x8xbf16>,
    %c0_191 = arith.constant 0 : index
    %c13_192 = arith.constant 13 : index
    %c0_193 = arith.constant 0 : index
    %c2_194 = arith.constant 2 : index
    %101 = vector.load %arg1[%c0_191, %c13_192, %c0_193, %c2_194] : memref<1x44x4x11xbf16, #tpu.memory_space<vmem>>, vector<1x8x4x8xbf16>
    %102 = vector.shape_cast %101 : vector<1x8x4x8xbf16> to vector<8x4x8xbf16>
    %c0_195 = arith.constant 0 : index
    %c132 = arith.constant 132 : index
    %c0_196 = arith.constant 0 : index
    %103 = vector.load %arg7[%c0_195, %c132, %c0_196] : memref<8x208x8xbf16, #tpu.memory_space<vmem>>, vector<8x4x8xbf16>
    tpu.vector_store %arg7[%c0_195, %c132, %c0_196], %102 {strides = array<i32>} : memref<8x208x8xbf16, #tpu.memory_space<vmem>>, vector<8x4x8xbf16>,
    %c0_197 = arith.constant 0 : index
    %c2_198 = arith.constant 2 : index
    %c0_199 = arith.constant 0 : index
    %c3_200 = arith.constant 3 : index
    %104 = vector.load %arg1[%c0_197, %c2_198, %c0_199, %c3_200] : memref<1x44x4x11xbf16, #tpu.memory_space<vmem>>, vector<1x8x4x8xbf16>
    %105 = vector.shape_cast %104 : vector<1x8x4x8xbf16> to vector<8x4x8xbf16>
    %c0_201 = arith.constant 0 : index
    %c136 = arith.constant 136 : index
    %c0_202 = arith.constant 0 : index
    %106 = vector.load %arg7[%c0_201, %c136, %c0_202] : memref<8x208x8xbf16, #tpu.memory_space<vmem>>, vector<8x4x8xbf16>
    tpu.vector_store %arg7[%c0_201, %c136, %c0_202], %105 {strides = array<i32>} : memref<8x208x8xbf16, #tpu.memory_space<vmem>>, vector<8x4x8xbf16>,
    %c0_203 = arith.constant 0 : index
    %c24_204 = arith.constant 24 : index
    %c0_205 = arith.constant 0 : index
    %c0_206 = arith.constant 0 : index
    %107 = vector.load %arg1[%c0_203, %c24_204, %c0_205, %c0_206] : memref<1x44x4x11xbf16, #tpu.memory_space<vmem>>, vector<1x8x4x8xbf16>
    %108 = vector.shape_cast %107 : vector<1x8x4x8xbf16> to vector<8x4x8xbf16>
    %c0_207 = arith.constant 0 : index
    %c140 = arith.constant 140 : index
    %c0_208 = arith.constant 0 : index
    %109 = vector.load %arg7[%c0_207, %c140, %c0_208] : memref<8x208x8xbf16, #tpu.memory_space<vmem>>, vector<8x4x8xbf16>
    tpu.vector_store %arg7[%c0_207, %c140, %c0_208], %108 {strides = array<i32>} : memref<8x208x8xbf16, #tpu.memory_space<vmem>>, vector<8x4x8xbf16>,
    %c0_209 = arith.constant 0 : index
    %c35 = arith.constant 35 : index
    %c0_210 = arith.constant 0 : index
    %c0_211 = arith.constant 0 : index
    %110 = vector.load %arg1[%c0_209, %c35, %c0_210, %c0_211] : memref<1x44x4x11xbf16, #tpu.memory_space<vmem>>, vector<1x8x4x8xbf16>
    %111 = vector.shape_cast %110 : vector<1x8x4x8xbf16> to vector<8x4x8xbf16>
    %c0_212 = arith.constant 0 : index
    %c144 = arith.constant 144 : index
    %c0_213 = arith.constant 0 : index
    %112 = vector.load %arg7[%c0_212, %c144, %c0_213] : memref<8x208x8xbf16, #tpu.memory_space<vmem>>, vector<8x4x8xbf16>
    tpu.vector_store %arg7[%c0_212, %c144, %c0_213], %111 {strides = array<i32>} : memref<8x208x8xbf16, #tpu.memory_space<vmem>>, vector<8x4x8xbf16>,
    %c0_214 = arith.constant 0 : index
    %c24_215 = arith.constant 24 : index
    %c0_216 = arith.constant 0 : index
    %c1_217 = arith.constant 1 : index
    %113 = vector.load %arg1[%c0_214, %c24_215, %c0_216, %c1_217] : memref<1x44x4x11xbf16, #tpu.memory_space<vmem>>, vector<1x8x4x8xbf16>
    %114 = vector.shape_cast %113 : vector<1x8x4x8xbf16> to vector<8x4x8xbf16>
    %c0_218 = arith.constant 0 : index
    %c148 = arith.constant 148 : index
    %c0_219 = arith.constant 0 : index
    %115 = vector.load %arg7[%c0_218, %c148, %c0_219] : memref<8x208x8xbf16, #tpu.memory_space<vmem>>, vector<8x4x8xbf16>
    tpu.vector_store %arg7[%c0_218, %c148, %c0_219], %114 {strides = array<i32>} : memref<8x208x8xbf16, #tpu.memory_space<vmem>>, vector<8x4x8xbf16>,
    %c0_220 = arith.constant 0 : index
    %c35_221 = arith.constant 35 : index
    %c0_222 = arith.constant 0 : index
    %c1_223 = arith.constant 1 : index
    %116 = vector.load %arg1[%c0_220, %c35_221, %c0_222, %c1_223] : memref<1x44x4x11xbf16, #tpu.memory_space<vmem>>, vector<1x8x4x8xbf16>
    %117 = vector.shape_cast %116 : vector<1x8x4x8xbf16> to vector<8x4x8xbf16>
    %c0_224 = arith.constant 0 : index
    %c152 = arith.constant 152 : index
    %c0_225 = arith.constant 0 : index
    %118 = vector.load %arg7[%c0_224, %c152, %c0_225] : memref<8x208x8xbf16, #tpu.memory_space<vmem>>, vector<8x4x8xbf16>
    tpu.vector_store %arg7[%c0_224, %c152, %c0_225], %117 {strides = array<i32>} : memref<8x208x8xbf16, #tpu.memory_space<vmem>>, vector<8x4x8xbf16>,
    %c0_226 = arith.constant 0 : index
    %c24_227 = arith.constant 24 : index
    %c0_228 = arith.constant 0 : index
    %c2_229 = arith.constant 2 : index
    %119 = vector.load %arg1[%c0_226, %c24_227, %c0_228, %c2_229] : memref<1x44x4x11xbf16, #tpu.memory_space<vmem>>, vector<1x8x4x8xbf16>
    %120 = vector.shape_cast %119 : vector<1x8x4x8xbf16> to vector<8x4x8xbf16>
    %c0_230 = arith.constant 0 : index
    %c156 = arith.constant 156 : index
    %c0_231 = arith.constant 0 : index
    %121 = vector.load %arg7[%c0_230, %c156, %c0_231] : memref<8x208x8xbf16, #tpu.memory_space<vmem>>, vector<8x4x8xbf16>
    tpu.vector_store %arg7[%c0_230, %c156, %c0_231], %120 {strides = array<i32>} : memref<8x208x8xbf16, #tpu.memory_space<vmem>>, vector<8x4x8xbf16>,
    %c0_232 = arith.constant 0 : index
    %c35_233 = arith.constant 35 : index
    %c0_234 = arith.constant 0 : index
    %c2_235 = arith.constant 2 : index
    %122 = vector.load %arg1[%c0_232, %c35_233, %c0_234, %c2_235] : memref<1x44x4x11xbf16, #tpu.memory_space<vmem>>, vector<1x8x4x8xbf16>
    %123 = vector.shape_cast %122 : vector<1x8x4x8xbf16> to vector<8x4x8xbf16>
    %c0_236 = arith.constant 0 : index
    %c160 = arith.constant 160 : index
    %c0_237 = arith.constant 0 : index
    %124 = vector.load %arg7[%c0_236, %c160, %c0_237] : memref<8x208x8xbf16, #tpu.memory_space<vmem>>, vector<8x4x8xbf16>
    tpu.vector_store %arg7[%c0_236, %c160, %c0_237], %123 {strides = array<i32>} : memref<8x208x8xbf16, #tpu.memory_space<vmem>>, vector<8x4x8xbf16>,
    %c0_238 = arith.constant 0 : index
    %c24_239 = arith.constant 24 : index
    %c0_240 = arith.constant 0 : index
    %c3_241 = arith.constant 3 : index
    %125 = vector.load %arg1[%c0_238, %c24_239, %c0_240, %c3_241] : memref<1x44x4x11xbf16, #tpu.memory_space<vmem>>, vector<1x8x4x8xbf16>
    %126 = vector.shape_cast %125 : vector<1x8x4x8xbf16> to vector<8x4x8xbf16>
    %c0_242 = arith.constant 0 : index
    %c164 = arith.constant 164 : index
    %c0_243 = arith.constant 0 : index
    %127 = vector.load %arg7[%c0_242, %c164, %c0_243] : memref<8x208x8xbf16, #tpu.memory_space<vmem>>, vector<8x4x8xbf16>
    tpu.vector_store %arg7[%c0_242, %c164, %c0_243], %126 {strides = array<i32>} : memref<8x208x8xbf16, #tpu.memory_space<vmem>>, vector<8x4x8xbf16>,
    %c0_244 = arith.constant 0 : index
    %c3_245 = arith.constant 3 : index
    %c0_246 = arith.constant 0 : index
    %c0_247 = arith.constant 0 : index
    %128 = vector.load %arg1[%c0_244, %c3_245, %c0_246, %c0_247] : memref<1x44x4x11xbf16, #tpu.memory_space<vmem>>, vector<1x8x4x8xbf16>
    %129 = vector.shape_cast %128 : vector<1x8x4x8xbf16> to vector<8x4x8xbf16>
    %c0_248 = arith.constant 0 : index
    %c168 = arith.constant 168 : index
    %c0_249 = arith.constant 0 : index
    %130 = vector.load %arg7[%c0_248, %c168, %c0_249] : memref<8x208x8xbf16, #tpu.memory_space<vmem>>, vector<8x4x8xbf16>
    tpu.vector_store %arg7[%c0_248, %c168, %c0_249], %129 {strides = array<i32>} : memref<8x208x8xbf16, #tpu.memory_space<vmem>>, vector<8x4x8xbf16>,
    %c0_250 = arith.constant 0 : index
    %c14 = arith.constant 14 : index
    %c0_251 = arith.constant 0 : index
    %c0_252 = arith.constant 0 : index
    %131 = vector.load %arg1[%c0_250, %c14, %c0_251, %c0_252] : memref<1x44x4x11xbf16, #tpu.memory_space<vmem>>, vector<1x8x4x8xbf16>
    %132 = vector.shape_cast %131 : vector<1x8x4x8xbf16> to vector<8x4x8xbf16>
    %c0_253 = arith.constant 0 : index
    %c172 = arith.constant 172 : index
    %c0_254 = arith.constant 0 : index
    %133 = vector.load %arg7[%c0_253, %c172, %c0_254] : memref<8x208x8xbf16, #tpu.memory_space<vmem>>, vector<8x4x8xbf16>
    tpu.vector_store %arg7[%c0_253, %c172, %c0_254], %132 {strides = array<i32>} : memref<8x208x8xbf16, #tpu.memory_space<vmem>>, vector<8x4x8xbf16>,
    %c0_255 = arith.constant 0 : index
    %c3_256 = arith.constant 3 : index
    %c0_257 = arith.constant 0 : index
    %c1_258 = arith.constant 1 : index
    %134 = vector.load %arg1[%c0_255, %c3_256, %c0_257, %c1_258] : memref<1x44x4x11xbf16, #tpu.memory_space<vmem>>, vector<1x8x4x8xbf16>
    %135 = vector.shape_cast %134 : vector<1x8x4x8xbf16> to vector<8x4x8xbf16>
    %c0_259 = arith.constant 0 : index
    %c176 = arith.constant 176 : index
    %c0_260 = arith.constant 0 : index
    %136 = vector.load %arg7[%c0_259, %c176, %c0_260] : memref<8x208x8xbf16, #tpu.memory_space<vmem>>, vector<8x4x8xbf16>
    tpu.vector_store %arg7[%c0_259, %c176, %c0_260], %135 {strides = array<i32>} : memref<8x208x8xbf16, #tpu.memory_space<vmem>>, vector<8x4x8xbf16>,
    %c0_261 = arith.constant 0 : index
    %c14_262 = arith.constant 14 : index
    %c0_263 = arith.constant 0 : index
    %c1_264 = arith.constant 1 : index
    %137 = vector.load %arg1[%c0_261, %c14_262, %c0_263, %c1_264] : memref<1x44x4x11xbf16, #tpu.memory_space<vmem>>, vector<1x8x4x8xbf16>
    %138 = vector.shape_cast %137 : vector<1x8x4x8xbf16> to vector<8x4x8xbf16>
    %c0_265 = arith.constant 0 : index
    %c180 = arith.constant 180 : index
    %c0_266 = arith.constant 0 : index
    %139 = vector.load %arg7[%c0_265, %c180, %c0_266] : memref<8x208x8xbf16, #tpu.memory_space<vmem>>, vector<8x4x8xbf16>
    tpu.vector_store %arg7[%c0_265, %c180, %c0_266], %138 {strides = array<i32>} : memref<8x208x8xbf16, #tpu.memory_space<vmem>>, vector<8x4x8xbf16>,
    %c0_267 = arith.constant 0 : index
    %c3_268 = arith.constant 3 : index
    %c0_269 = arith.constant 0 : index
    %c2_270 = arith.constant 2 : index
    %140 = vector.load %arg1[%c0_267, %c3_268, %c0_269, %c2_270] : memref<1x44x4x11xbf16, #tpu.memory_space<vmem>>, vector<1x8x4x8xbf16>
    %141 = vector.shape_cast %140 : vector<1x8x4x8xbf16> to vector<8x4x8xbf16>
    %c0_271 = arith.constant 0 : index
    %c184 = arith.constant 184 : index
    %c0_272 = arith.constant 0 : index
    %142 = vector.load %arg7[%c0_271, %c184, %c0_272] : memref<8x208x8xbf16, #tpu.memory_space<vmem>>, vector<8x4x8xbf16>
    tpu.vector_store %arg7[%c0_271, %c184, %c0_272], %141 {strides = array<i32>} : memref<8x208x8xbf16, #tpu.memory_space<vmem>>, vector<8x4x8xbf16>,
    %c0_273 = arith.constant 0 : index
    %c14_274 = arith.constant 14 : index
    %c0_275 = arith.constant 0 : index
    %c2_276 = arith.constant 2 : index
    %143 = vector.load %arg1[%c0_273, %c14_274, %c0_275, %c2_276] : memref<1x44x4x11xbf16, #tpu.memory_space<vmem>>, vector<1x8x4x8xbf16>
    %144 = vector.shape_cast %143 : vector<1x8x4x8xbf16> to vector<8x4x8xbf16>
    %c0_277 = arith.constant 0 : index
    %c188 = arith.constant 188 : index
    %c0_278 = arith.constant 0 : index
    %145 = vector.load %arg7[%c0_277, %c188, %c0_278] : memref<8x208x8xbf16, #tpu.memory_space<vmem>>, vector<8x4x8xbf16>
    tpu.vector_store %arg7[%c0_277, %c188, %c0_278], %144 {strides = array<i32>} : memref<8x208x8xbf16, #tpu.memory_space<vmem>>, vector<8x4x8xbf16>,
    %c0_279 = arith.constant 0 : index
    %c3_280 = arith.constant 3 : index
    %c0_281 = arith.constant 0 : index
    %c3_282 = arith.constant 3 : index
    %146 = vector.load %arg1[%c0_279, %c3_280, %c0_281, %c3_282] : memref<1x44x4x11xbf16, #tpu.memory_space<vmem>>, vector<1x8x4x8xbf16>
    %147 = vector.shape_cast %146 : vector<1x8x4x8xbf16> to vector<8x4x8xbf16>
    %c0_283 = arith.constant 0 : index
    %c192 = arith.constant 192 : index
    %c0_284 = arith.constant 0 : index
    %148 = vector.load %arg7[%c0_283, %c192, %c0_284] : memref<8x208x8xbf16, #tpu.memory_space<vmem>>, vector<8x4x8xbf16>
    tpu.vector_store %arg7[%c0_283, %c192, %c0_284], %147 {strides = array<i32>} : memref<8x208x8xbf16, #tpu.memory_space<vmem>>, vector<8x4x8xbf16>,
    %c0_285 = arith.constant 0 : index
    %c0_286 = arith.constant 0 : index
    %149 = vector.load %arg2[%c0_285, %c0_286] : memref<8x208xbf16, #tpu.memory_space<vmem>>, vector<8x208xbf16>
    %150 = vector.shape_cast %149 : vector<8x208xbf16> to vector<1x8x208xbf16>
    %151 = vector.shape_cast %150 : vector<1x8x208xbf16> to vector<1x8x208xbf16>
    %152 = vector.broadcast %151 : vector<1x8x208xbf16> to vector<8x8x208xbf16>
    %c0_287 = arith.constant 0 : index
    %c0_288 = arith.constant 0 : index
    %c0_289 = arith.constant 0 : index
    %153 = vector.load %arg7[%c0_287, %c0_288, %c0_289] : memref<8x208x8xbf16, #tpu.memory_space<vmem>>, vector<8x208x8xbf16>
    "tpu.trace_start"() <{level = 10 : i32, message = "hck,hkw->hcw"}> : () -> ()
    %cst_290 = arith.constant dense<0.000000e+00> : vector<8x8x8xf32>
    %154 = tpu.matmul %152, %153, %cst_290 {dimension_numbers = #tpu.dot_dimension_numbers<[2], [1], [1], [2], [0, 0, 0, 1, 1, 2], [0], [0]>} : vector<8x8x208xbf16>, vector<8x208x8xbf16>, vector<8x8x8xf32> -> vector<8x8x8xf32>
    "tpu.trace_stop"() : () -> ()
    %cst_291 = arith.constant dense<0.000000e+00> : vector<8x8xf32>
    %155 = vector.multi_reduction <add>, %154, %cst_291 [2] : vector<8x8x8xf32> to vector<8x8xf32>
    %156 = vector.shape_cast %155 : vector<8x8xf32> to vector<8x8x1xf32>
    %cst_292 = arith.constant dense<0.000000e+00> : vector<8x1xf32>
    %157 = vector.multi_reduction <add>, %156, %cst_292 [0] : vector<8x8x1xf32> to vector<8x1xf32>
    %158 = vector.shape_cast %157 : vector<8x1xf32> to vector<1x8x1xf32>
    %cst_293 = arith.constant 1.562500e-02 : f32
    %159 = vector.broadcast %cst_293 : f32 to vector<1x8x1xf32>
    %160 = arith.mulf %158, %159 : vector<1x8x1xf32>
    %161 = vector.broadcast %160 : vector<1x8x1xf32> to vector<8x8x8xf32>
    %162 = arith.subf %154, %161 : vector<8x8x8xf32>
    %163 = arith.mulf %162, %162 : vector<8x8x8xf32>
    %cst_294 = arith.constant dense<0.000000e+00> : vector<8x8xf32>
    %164 = vector.multi_reduction <add>, %163, %cst_294 [2] : vector<8x8x8xf32> to vector<8x8xf32>
    %165 = vector.shape_cast %164 : vector<8x8xf32> to vector<8x8x1xf32>
    %cst_295 = arith.constant dense<0.000000e+00> : vector<8x1xf32>
    %166 = vector.multi_reduction <add>, %165, %cst_295 [0] : vector<8x8x1xf32> to vector<8x1xf32>
    %167 = vector.shape_cast %166 : vector<8x1xf32> to vector<1x8x1xf32>
    %cst_296 = arith.constant 1.562500e-02 : f32
    %168 = vector.broadcast %cst_296 : f32 to vector<1x8x1xf32>
    %169 = arith.mulf %167, %168 : vector<1x8x1xf32>
    %c0_297 = arith.constant 0 : index
    %c0_298 = arith.constant 0 : index
    %170 = vector.load %arg3[%c0_297, %c0_298] : memref<8x1xf32, #tpu.memory_space<vmem>>, vector<8x1xf32>
    %171 = vector.shape_cast %170 : vector<8x1xf32> to vector<1x8x1xf32>
    %cst_299 = arith.constant 9.99999974E-6 : f32
    %172 = vector.broadcast %cst_299 : f32 to vector<1x8x1xf32>
    %173 = arith.addf %169, %172 : vector<1x8x1xf32>
    %174 = math.rsqrt %173 : vector<1x8x1xf32>
    %175 = arith.mulf %171, %174 : vector<1x8x1xf32>
    %176 = vector.broadcast %175 : vector<1x8x1xf32> to vector<8x8x8xf32>
    %177 = arith.mulf %162, %176 : vector<8x8x8xf32>
    %c0_300 = arith.constant 0 : index
    %c0_301 = arith.constant 0 : index
    %178 = vector.load %arg4[%c0_300, %c0_301] : memref<8x1xf32, #tpu.memory_space<vmem>>, vector<8x1xf32>
    %179 = vector.shape_cast %178 : vector<8x1xf32> to vector<1x8x1xf32>
    %180 = vector.broadcast %179 : vector<1x8x1xf32> to vector<8x8x8xf32>
    %181 = arith.addf %177, %180 : vector<8x8x8xf32>
    %cst_302 = arith.constant 0.000000e+00 : f32
    %182 = vector.broadcast %cst_302 : f32 to vector<8x8x8xf32>
    %183 = arith.maximumf %181, %182 : vector<8x8x8xf32>
    %184 = vector.shape_cast %183 : vector<8x8x8xf32> to vector<4x2x8x8xf32>
    %185 = vector.extract_strided_slice %184 {offsets = [0, 0, 0, 0], sizes = [4, 1, 8, 8], strides = [1, 1, 1, 1]} : vector<4x2x8x8xf32> to vector<4x1x8x8xf32>
    %186 = vector.shape_cast %185 : vector<4x1x8x8xf32> to vector<4x8x8xf32>
    %187 = vector.extract_strided_slice %184 {offsets = [0, 1, 0, 0], sizes = [4, 1, 8, 8], strides = [1, 1, 1, 1]} : vector<4x2x8x8xf32> to vector<4x1x8x8xf32>
    %188 = vector.shape_cast %187 : vector<4x1x8x8xf32> to vector<4x8x8xf32>
    %cst_303 = arith.constant 0.000000e+00 : f32
    %189 = vector.broadcast %cst_303 : f32 to vector<1x8x8xf32>
    %190 = vector.extract_strided_slice %188 {offsets = [0, 0, 0], sizes = [3, 8, 8], strides = [1, 1, 1]} : vector<4x8x8xf32> to vector<3x8x8xf32>
    %191 = tpu.concatenate %189, %190 in 0 : vector<1x8x8xf32>, vector<3x8x8xf32> -> vector<4x8x8xf32>
    %192 = arith.maximumf %186, %188 : vector<4x8x8xf32>
    %193 = arith.maximumf %192, %191 : vector<4x8x8xf32>
    %194 = vector.shape_cast %193 : vector<4x8x8xf32> to vector<32x8xf32>
    %c0_304 = arith.constant 0 : index
    %c0_305 = arith.constant 0 : index
    %c0_306 = arith.constant 0 : index
    %195 = vector.load %arg5[%c0_304, %c0_305, %c0_306] : memref<3x8x4xf32, #tpu.memory_space<vmem>>, vector<1x8x4xf32>
    %196 = vector.shape_cast %195 : vector<1x8x4xf32> to vector<8x4xf32>
    %cst_307 = arith.constant dense<0.000000e+00> : vector<32x4xf32>
    %197 = tpu.matmul %194, %196, %cst_307 {dimension_numbers = #tpu.dot_dimension_numbers<[1], [0], [0], [1], [0, 0, 1, 1], [], []>} : vector<32x8xf32>, vector<8x4xf32>, vector<32x4xf32> -> vector<32x4xf32>
    %c1_308 = arith.constant 1 : index
    %c0_309 = arith.constant 0 : index
    %c0_310 = arith.constant 0 : index
    %198 = vector.load %arg5[%c1_308, %c0_309, %c0_310] : memref<3x8x4xf32, #tpu.memory_space<vmem>>, vector<1x8x4xf32>
    %199 = vector.shape_cast %198 : vector<1x8x4xf32> to vector<8x4xf32>
    %cst_311 = arith.constant dense<0.000000e+00> : vector<32x4xf32>
    %200 = tpu.matmul %194, %199, %cst_311 {dimension_numbers = #tpu.dot_dimension_numbers<[1], [0], [0], [1], [0, 0, 1, 1], [], []>} : vector<32x8xf32>, vector<8x4xf32>, vector<32x4xf32> -> vector<32x4xf32>
    %c2_312 = arith.constant 2 : index
    %c0_313 = arith.constant 0 : index
    %c0_314 = arith.constant 0 : index
    %201 = vector.load %arg5[%c2_312, %c0_313, %c0_314] : memref<3x8x4xf32, #tpu.memory_space<vmem>>, vector<1x8x4xf32>
    %202 = vector.shape_cast %201 : vector<1x8x4xf32> to vector<8x4xf32>
    %cst_315 = arith.constant dense<0.000000e+00> : vector<32x4xf32>
    %203 = tpu.matmul %194, %202, %cst_315 {dimension_numbers = #tpu.dot_dimension_numbers<[1], [0], [0], [1], [0, 0, 1, 1], [], []>} : vector<32x8xf32>, vector<8x4xf32>, vector<32x4xf32> -> vector<32x4xf32>
    %204 = arith.maximumf %197, %200 : vector<32x4xf32>
    %205 = arith.maximumf %204, %203 : vector<32x4xf32>
    %206 = vector.shape_cast %205 : vector<32x4xf32> to vector<4x8x4xf32>
    %c0_316 = arith.constant 0 : index
    %c0_317 = arith.constant 0 : index
    %c0_318 = arith.constant 0 : index
    %c0_319 = arith.constant 0 : index
    %207 = vector.load %arg6[%c0_316, %c0_317, %c0_318, %c0_319] : memref<1x4x8x4xf32, #tpu.memory_space<vmem>>, vector<1x4x8x4xf32>
    %208 = vector.shape_cast %207 : vector<1x4x8x4xf32> to vector<4x8x4xf32>
    %209 = vector.shape_cast %206 : vector<4x8x4xf32> to vector<1x4x8x4xf32>
    tpu.vector_store %arg6[%c0_316, %c0_317, %c0_318, %c0_319], %209 {strides = array<i32>} : memref<1x4x8x4xf32, #tpu.memory_space<vmem>>, vector<1x4x8x4xf32>,
    return
  }
  func.func @transform_0(%arg0: i32) -> (i32, i32, i32, i32) {
    %c0_i32 = arith.constant 0 : i32
    %c0_i32_0 = arith.constant 0 : i32
    %c0_i32_1 = arith.constant 0 : i32
    %c0_i32_2 = arith.constant 0 : i32
    return %arg0, %c0_i32, %c0_i32_0, %c0_i32_1 : i32, i32, i32, i32
  }
  func.func @transform_1(%arg0: i32) -> (i32, i32) {
    %c0_i32 = arith.constant 0 : i32
    %c0_i32_0 = arith.constant 0 : i32
    %c0_i32_1 = arith.constant 0 : i32
    return %c0_i32, %c0_i32_0 : i32, i32
  }
  func.func @transform_2(%arg0: i32) -> (i32, i32) {
    %c0_i32 = arith.constant 0 : i32
    %c0_i32_0 = arith.constant 0 : i32
    %c0_i32_1 = arith.constant 0 : i32
    return %c0_i32, %c0_i32_0 : i32, i32
  }
  func.func @transform_3(%arg0: i32) -> (i32, i32) {
    %c0_i32 = arith.constant 0 : i32
    %c0_i32_0 = arith.constant 0 : i32
    %c0_i32_1 = arith.constant 0 : i32
    return %c0_i32, %c0_i32_0 : i32, i32
  }
  func.func @transform_4(%arg0: i32) -> (i32, i32, i32) {
    %c0_i32 = arith.constant 0 : i32
    %c0_i32_0 = arith.constant 0 : i32
    %c0_i32_1 = arith.constant 0 : i32
    %c0_i32_2 = arith.constant 0 : i32
    return %c0_i32, %c0_i32_0, %c0_i32_1 : i32, i32, i32
  }
  func.func @transform_5(%arg0: i32) -> (i32, i32, i32, i32) {
    %c0_i32 = arith.constant 0 : i32
    %c0_i32_0 = arith.constant 0 : i32
    %c0_i32_1 = arith.constant 0 : i32
    %c0_i32_2 = arith.constant 0 : i32
    return %arg0, %c0_i32, %c0_i32_0, %c0_i32_1 : i32, i32, i32, i32
  }
}

</mosaic_0001>

<llo_original>
// kernel: tpu_custom_call.1
$region0: #{tpu_custom_call.1}
  #allocation0 [shape = 'u32[]', space=smem, size = 0x4, offset = 0x4, fixed_abs, tag = 'smem constant byte address 0x4 - core index']
  #allocation1 [shape = 'u32[144,128]{1,0:T(1,128)}', space=vmem, size = 0x12000, scoped, tag = 'internal scratch']
  #allocation2 [shape = 'bf16[8,208,8]{2,1,0:T(16,128)(2,1)}', space=vmem, size = 0x68000, scoped, tag = 'scratch operand']
  %s0 = inlined_call_operand.vmem [shape: bf16[2,44,4,11], index: 0, kind: input, shape index: {}]
  %s1 = inlined_call_operand.vmem [shape: bf16[8,208], index: 1, kind: input, shape index: {}]
  %s2 = inlined_call_operand.vmem [shape: f32[8,1], index: 2, kind: input, shape index: {}]
  %s3 = inlined_call_operand.vmem [shape: f32[8,1], index: 3, kind: input, shape index: {}]
  %s4 = inlined_call_operand.vmem [shape: f32[3,8,4], index: 4, kind: input, shape index: {}]
  %s5 = inlined_call_operand.vmem [shape: f32[2,4,8,4], index: 5, kind: output, shape index: {}]
  %s6 = sld [smem:[#allocation0]]
  $region53: #{tpu_custom_call.1} parent=0
    _
  %s8 = ssub.s32 1, %s6
  %s9 = scalar_select 0, %s8, %s6
  loop: start=0, step=1, limit=4
  $region2: #{tpu_custom_call.1} parent=0 // loop_pre_header
    _
  $region3: #{tpu_custom_call.1} parent=0 // loop_header
    %s11 = sphi 0, %s15
    %p12 = scmp.ge.s32.totalorder %s11, 4
    %s21 = sphi 0, %s23
    %s24 = sphi 0, %s21
    %s25 = sphi 0, %s24
    %s41 = sphi 0, %s25
    %s45 = sphi 0, %s45
    %s47 = sphi 0, %s45
    %s48 = sphi 0, %s47
    %s62 = sphi 0, %s48
    %s66 = sphi 0, %s66
    %s68 = sphi 0, %s66
    %s69 = sphi 0, %s68
    %s83 = sphi 0, %s69
    %s87 = sphi 0, %s87
    %s89 = sphi 0, %s87
    %s90 = sphi 0, %s89
    %s104 = sphi 0, %s90
    %s108 = sphi 0, %s108
    %s110 = sphi 0, %s108
    %s111 = sphi 0, %s110
    %s125 = sphi 0, %s111
    %s131 = sphi 0, %s133
    %s134 = sphi 0, %s131
    %s135 = sphi 0, %s134
    %s151 = sphi 0, %s135
  $region4: #{tpu_custom_call.1} parent=0 // loop_header_branch
    %14 = sbr.rel (%p12) target = $region8
  $region5: #{tpu_custom_call.1} parent=0 // loop_body
    %s16 = ssub.s32 %s11, 1
    %s17 = ssub.s32 %s11, 2
    %s18 = sadd.s32 %s11, 1
    %s19 = ssub.s32 %s11, %s18
    %p20 = scmp.eq.s32.totalorder %s19, 0
    %s22 = sadd.s32 %s21, 1
    %s23 = scalar_select %p20, %s21, %s22
    %p26 = pneg %p20
    %p27 = scmp.eq.s32.totalorder %s11, 1
    %p28 = por %p26, %p27
    %p29 = scmp.ne.s32.totalorder %s21, %s24
    %p30 = scmp.eq.s32.totalorder %s11, 0
    %p31 = por %p29, %p30
    %p32 = scmp.ne.s32.totalorder %s21, %s24
    %p33 = scmp.eq.s32.totalorder %s16, 1
    %p34 = por %p32, %p33
    %p35 = scmp.ne.s32.totalorder %s24, %s25
    %p36 = scmp.eq.s32.totalorder %s16, 0
    %p37 = por %p35, %p36
    %p38 = scmp.ne.s32.totalorder %s24, %s25
    %p39 = scmp.eq.s32.totalorder %s17, 1
    %p40 = por %p38, %p39
    %p42 = scmp.ne.s32.totalorder %s25, %s41
    %p43 = scmp.eq.s32.totalorder %s17, 0
    %p44 = por %p42, %p43
    %s46 = sadd.s32 %s45, 1
    %p49 = scmp.eq.s32.totalorder %s11, 1
    %p50 = scmp.ne.s32.totalorder %s45, %s47
    %p51 = scmp.eq.s32.totalorder %s11, 0
    %p52 = por %p50, %p51
    %p53 = scmp.ne.s32.totalorder %s45, %s47
    %p54 = scmp.eq.s32.totalorder %s16, 1
    %p55 = por %p53, %p54
    %p56 = scmp.ne.s32.totalorder %s47, %s48
    %p57 = scmp.eq.s32.totalorder %s16, 0
    %p58 = por %p56, %p57
    %p59 = scmp.ne.s32.totalorder %s47, %s48
    %p60 = scmp.eq.s32.totalorder %s17, 1
    %p61 = por %p59, %p60
    %p63 = scmp.ne.s32.totalorder %s48, %s62
    %p64 = scmp.eq.s32.totalorder %s17, 0
    %p65 = por %p63, %p64
    %s67 = sadd.s32 %s66, 1
    %p70 = scmp.eq.s32.totalorder %s11, 1
    %p71 = scmp.ne.s32.totalorder %s66, %s68
    %p72 = scmp.eq.s32.totalorder %s11, 0
    %p73 = por %p71, %p72
    %p74 = scmp.ne.s32.totalorder %s66, %s68
    %p75 = scmp.eq.s32.totalorder %s16, 1
    %p76 = por %p74, %p75
    %p77 = scmp.ne.s32.totalorder %s68, %s69
    %p78 = scmp.eq.s32.totalorder %s16, 0
    %p79 = por %p77, %p78
    %p80 = scmp.ne.s32.totalorder %s68, %s69
    %p81 = scmp.eq.s32.totalorder %s17, 1
    %p82 = por %p80, %p81
    %p84 = scmp.ne.s32.totalorder %s69, %s83
    %p85 = scmp.eq.s32.totalorder %s17, 0
    %p86 = por %p84, %p85
    %s88 = sadd.s32 %s87, 1
    %p91 = scmp.eq.s32.totalorder %s11, 1
    %p92 = scmp.ne.s32.totalorder %s87, %s89
    %p93 = scmp.eq.s32.totalorder %s11, 0
    %p94 = por %p92, %p93
    %p95 = scmp.ne.s32.totalorder %s87, %s89
    %p96 = scmp.eq.s32.totalorder %s16, 1
    %p97 = por %p95, %p96
    %p98 = scmp.ne.s32.totalorder %s89, %s90
    %p99 = scmp.eq.s32.totalorder %s16, 0
    %p100 = por %p98, %p99
    %p101 = scmp.ne.s32.totalorder %s89, %s90
    %p102 = scmp.eq.s32.totalorder %s17, 1
    %p103 = por %p101, %p102
    %p105 = scmp.ne.s32.totalorder %s90, %s104
    %p106 = scmp.eq.s32.totalorder %s17, 0
    %p107 = por %p105, %p106
    %s109 = sadd.s32 %s108, 1
    %p112 = scmp.eq.s32.totalorder %s11, 1
    %p113 = scmp.ne.s32.totalorder %s108, %s110
    %p114 = scmp.eq.s32.totalorder %s11, 0
    %p115 = por %p113, %p114
    %p116 = scmp.ne.s32.totalorder %s108, %s110
    %p117 = scmp.eq.s32.totalorder %s16, 1
    %p118 = por %p116, %p117
    %p119 = scmp.ne.s32.totalorder %s110, %s111
    %p120 = scmp.eq.s32.totalorder %s16, 0
    %p121 = por %p119, %p120
    %p122 = scmp.ne.s32.totalorder %s110, %s111
    %p123 = scmp.eq.s32.totalorder %s17, 1
    %p124 = por %p122, %p123
    %p126 = scmp.ne.s32.totalorder %s111, %s125
    %p127 = scmp.eq.s32.totalorder %s17, 0
    %p128 = por %p126, %p127
    %s129 = ssub.s32 %s11, %s18
    %p130 = scmp.eq.s32.totalorder %s129, 0
    %s132 = sadd.s32 %s131, 1
    %s133 = scalar_select %p130, %s131, %s132
    %p136 = pneg %p130
    %p137 = scmp.eq.s32.totalorder %s11, 1
    %p138 = por %p136, %p137
    %p139 = scmp.ne.s32.totalorder %s131, %s134
    %p140 = scmp.eq.s32.totalorder %s11, 0
    %p141 = por %p139, %p140
    %p142 = scmp.ne.s32.totalorder %s131, %s134
    %p143 = scmp.eq.s32.totalorder %s16, 1
    %p144 = por %p142, %p143
    %p145 = scmp.ne.s32.totalorder %s134, %s135
    %p146 = scmp.eq.s32.totalorder %s16, 0
    %p147 = por %p145, %p146
    %p148 = scmp.ne.s32.totalorder %s134, %s135
    %p149 = scmp.eq.s32.totalorder %s17, 1
    %p150 = por %p148, %p149
    %p152 = scmp.ne.s32.totalorder %s135, %s151
    %p153 = scmp.eq.s32.totalorder %s17, 0
    %p154 = por %p152, %p153
    %p155 = scmp.le.s32.totalorder 1, %s11
    %p156 = scmp.lt.s32.totalorder %s11, 3
    %p157 = pnand %p155, %p156
    %p158 = pneg %p157
    // Predicated region
    $region9: #{tpu_custom_call.1} parent=5 // pred_check
      _
    $region10: #{tpu_custom_call.1} parent=5 // pred_check_branch
      %160 = sbr.rel (%p157) target = $region12
    $region11: #{tpu_custom_call.1} parent=5 // pred_region
      %s161 = ssub.s32 %s11, 1
      // Predicated region
      $region13: #{tpu_custom_call.1} parent=11 // pred_check
        %p162 = pneg %p58
      $region14: #{tpu_custom_call.1} parent=11 // pred_check_branch
        %164 = sbr.rel (%p162) target = $region16
      $region15: #{tpu_custom_call.1} parent=11 // pred_region
        _
      $region16: #{tpu_custom_call.1} parent=11 // pred_fallthru
        _
      // Predicated region
      $region17: #{tpu_custom_call.1} parent=11 // pred_check
        %p165 = pneg %p79
      $region18: #{tpu_custom_call.1} parent=11 // pred_check_branch
        %167 = sbr.rel (%p165) target = $region20
      $region19: #{tpu_custom_call.1} parent=11 // pred_region
        _
      $region20: #{tpu_custom_call.1} parent=11 // pred_fallthru
        _
      // Predicated region
      $region21: #{tpu_custom_call.1} parent=11 // pred_check
        %p168 = pneg %p100
      $region22: #{tpu_custom_call.1} parent=11 // pred_check_branch
        %170 = sbr.rel (%p168) target = $region24
      $region23: #{tpu_custom_call.1} parent=11 // pred_region
        _
      $region24: #{tpu_custom_call.1} parent=11 // pred_fallthru
        _
      // Predicated region
      $region25: #{tpu_custom_call.1} parent=11 // pred_check
        %p171 = pneg %p121
      $region26: #{tpu_custom_call.1} parent=11 // pred_check_branch
        %173 = sbr.rel (%p171) target = $region28
      $region27: #{tpu_custom_call.1} parent=11 // pred_region
        _
      $region28: #{tpu_custom_call.1} parent=11 // pred_fallthru
        _
    $region12: #{tpu_custom_call.1} parent=5 // pred_fallthru
      _
    %p174 = scmp.lt.s32.totalorder %s11, 2
    // Predicated region
    $region29: #{tpu_custom_call.1} parent=5 // pred_check
      %p175 = pneg %p174
    $region30: #{tpu_custom_call.1} parent=5 // pred_check_branch
      %177 = sbr.rel (%p175) target = $region32
    $region31: #{tpu_custom_call.1} parent=5 // pred_region
      // Predicated region
      $region33: #{tpu_custom_call.1} parent=31 // pred_check
        %p178 = pneg %p31
      $region34: #{tpu_custom_call.1} parent=31 // pred_check_branch
        %180 = sbr.rel (%p178) target = $region36
      $region35: #{tpu_custom_call.1} parent=31 // pred_region
        %p181 = scmp.lt.s32.totalorder %s11, 1
        %s182 = scalar_select %p181, %s11, 1
        %s183 = smul.addr %s182, 44
        %s184 = smul.addr %s183, 2
        %s185 = scalar_lea.vmem %s0, %s184
      $region36: #{tpu_custom_call.1} parent=31 // pred_fallthru
        _
    $region32: #{tpu_custom_call.1} parent=5 // pred_fallthru
      _
    %p186 = scmp.le.s32.totalorder 1, %s11
    %p187 = scmp.lt.s32.totalorder %s11, 3
    %p188 = pnand %p186, %p187
    %p189 = pneg %p188
    // Predicated region
    $region37: #{tpu_custom_call.1} parent=5 // pred_check
      _
    $region38: #{tpu_custom_call.1} parent=5 // pred_check_branch
      %191 = sbr.rel (%p188) target = $region40
    $region39: #{tpu_custom_call.1} parent=5 // pred_region
      %s192 = ssub.s32 %s11, 1
      %p193 = scmp.lt.s32.totalorder %s16, 1
      %s194 = scalar_select %p193, %s16, 1
      %s195 = smul.addr %s194, 44
      %s196 = smul.addr %s195, 2
      %s197 = scalar_lea.vmem %s0, %s196
      %p198 = pneg %p37
      %p199 = pneg %p34
      %p200 = pneg %p58
      %p201 = pneg %p55
      %p202 = pneg %p79
      %p203 = pneg %p76
      %p204 = pneg %p100
      %p205 = pneg %p97
      %p206 = pneg %p121
      %p207 = pneg %p118
      %p208 = pneg %p147
      %p209 = pneg %p144
      %p210 = scmp.lt.s32.totalorder %s16, 1
      %s211 = scalar_select %p210, %s16, 1
      %s212 = smul.addr %s211, 4
      %s213 = smul.addr %s212, 8
      %s214 = scalar_lea.vmem %s5, %s213
      %p215 = scmp.lt.s32.totalorder %s16, 1
      %s216 = scalar_select %p215, %s16, 1
      %s217 = smul.addr %s216, 44
      %s218 = smul.addr %s217, 2
      %s219 = scalar_lea.vmem %s0, %s218
      %p220 = scmp.lt.s32.totalorder %s16, 1
      %s221 = scalar_select %p220, %s16, 1
      %s222 = smul.addr %s221, 4
      %s223 = smul.addr %s222, 8
      %s224 = scalar_lea.vmem %s5, %s223
      %vm226 = vcmask 64514
      %227 = vst.msk [vmem:[#allocation2 + $0x60] sm:$0xfc] %vm226, 0
      %228 = vst.msk [vmem:[#allocation2 + $0xc8] sm:$0xfc] %vm226, 0
      %229 = vst.msk [vmem:[#allocation2 + $0x130] sm:$0xfc] %vm226, 0
      %230 = vst.msk [vmem:[#allocation2 + $0x198] sm:$0xfc] %vm226, 0
      %231 = vst.msk [vmem:[#allocation2 + $0x200] sm:$0xfc] %vm226, 0
      %232 = vst.msk [vmem:[#allocation2 + $0x268] sm:$0xfc] %vm226, 0
      %233 = vst.msk [vmem:[#allocation2 + $0x2d0] sm:$0xfc] %vm226, 0
      %234 = vst.msk [vmem:[#allocation2 + $0x338] sm:$0xfc] %vm226, 0
      %v235 = vld [vmem:[%s219] sm:$0x3]
      %v236 = vld [vmem:[%s219 + $0x2] sm:$0x3]
      %v237 = vld [vmem:[%s219 + $0x4] sm:$0x3]
      %v238 = vld [vmem:[%s219 + $0x6] sm:$0x3]
      %v239 = vld [vmem:[%s219 + $0x8] sm:$0x3]
      %v240 = vld [vmem:[%s219 + $0xa] sm:$0x3]
      %v241 = vld [vmem:[%s219 + $0xc] sm:$0x3]
      %v242 = vld [vmem:[%s219 + $0xe] sm:$0x3]
      %vm243 = vcmask 58368
      %244 = vst.msk [vmem:[#allocation2] sm:$0x3] %vm243, %v235
      %245 = vst.msk [vmem:[#allocation2 + $0x68] sm:$0x3] %vm243, %v236
      %246 = vst.msk [vmem:[#allocation2 + $0xd0] sm:$0x3] %vm243, %v237
      %247 = vst.msk [vmem:[#allocation2 + $0x138] sm:$0x3] %vm243, %v238
      %248 = vst.msk [vmem:[#allocation2 + $0x1a0] sm:$0x3] %vm243, %v239
      %249 = vst.msk [vmem:[#allocation2 + $0x208] sm:$0x3] %vm243, %v240
      %250 = vst.msk [vmem:[#allocation2 + $0x270] sm:$0x3] %vm243, %v241
      %251 = vst.msk [vmem:[#allocation2 + $0x2d8] sm:$0x3] %vm243, %v242
      %s252 = scalar_lea.vmem %s219, 22
      %v253 = vld [vmem:[%s252] sm:$0x3]
      %v254 = vld [vmem:[%s252 + $0x2] sm:$0x3]
      %v255 = vld [vmem:[%s252 + $0x4] sm:$0x3]
      %v256 = vld [vmem:[%s252 + $0x6] sm:$0x3]
      %v257 = vld [vmem:[%s252 + $0x8] sm:$0x3]
      %v258 = vld [vmem:[%s252 + $0xa] sm:$0x3]
      %v259 = vld [vmem:[%s252 + $0xc] sm:$0x3]
      %v260 = vld [vmem:[%s252 + $0xe] sm:$0x3]
      %v269 = vcombine.low %v253, %v253
      %v271 = vunpack.c.l.s4 1983009808
      %v272 = vunpack.c.0.s8 %v271
      %v273 = vlaneseq
      %v274 = vshrl.u32 %v273, 7
      %v275 = vsub.s32 %v272, %v274
      %v276 = vrot.slane %v269, %v275
      %v277 = vcombine.low %v254, %v254
      %v279 = vunpack.c.l.s4 1983009808
      %v280 = vunpack.c.0.s8 %v279
      %v281 = vlaneseq
      %v282 = vshrl.u32 %v281, 7
      %v283 = vsub.s32 %v280, %v282
      %v284 = vrot.slane %v277, %v283
      %v285 = vcombine.low %v255, %v255
      %v287 = vunpack.c.l.s4 1983009808
      %v288 = vunpack.c.0.s8 %v287
      %v289 = vlaneseq
      %v290 = vshrl.u32 %v289, 7
      %v291 = vsub.s32 %v288, %v290
      %v292 = vrot.slane %v285, %v291
      %v293 = vcombine.low %v256, %v256
      %v295 = vunpack.c.l.s4 1983009808
      %v296 = vunpack.c.0.s8 %v295
      %v297 = vlaneseq
      %v298 = vshrl.u32 %v297, 7
      %v299 = vsub.s32 %v296, %v298
      %v300 = vrot.slane %v293, %v299
      %v301 = vcombine.low %v257, %v257
      %v303 = vunpack.c.l.s4 1983009808
      %v304 = vunpack.c.0.s8 %v303
      %v305 = vlaneseq
      %v306 = vshrl.u32 %v305, 7
      %v307 = vsub.s32 %v304, %v306
      %v308 = vrot.slane %v301, %v307
      %v309 = vcombine.low %v258, %v258
      %v311 = vunpack.c.l.s4 1983009808
      %v312 = vunpack.c.0.s8 %v311
      %v313 = vlaneseq
      %v314 = vshrl.u32 %v313, 7
      %v315 = vsub.s32 %v312, %v314
      %v316 = vrot.slane %v309, %v315
      %v317 = vcombine.low %v259, %v259
      %v319 = vunpack.c.l.s4 1983009808
      %v320 = vunpack.c.0.s8 %v319
      %v321 = vlaneseq
      %v322 = vshrl.u32 %v321, 7
      %v323 = vsub.s32 %v320, %v322
      %v324 = vrot.slane %v317, %v323
      %v325 = vcombine.low %v260, %v260
      %v327 = vunpack.c.l.s4 1983009808
      %v328 = vunpack.c.0.s8 %v327
      %v329 = vlaneseq
      %v330 = vshrl.u32 %v329, 7
      %v331 = vsub.s32 %v328, %v330
      %v332 = vrot.slane %v325, %v331
      %vm341 = vcmask 60418
      %342 = vst.msk [vmem:[#allocation2] sm:$0xc] %vm341, %v276
      %343 = vst.msk [vmem:[#allocation2 + $0x68] sm:$0xc] %vm341, %v284
      %344 = vst.msk [vmem:[#allocation2 + $0xd0] sm:$0xc] %vm341, %v292
      %345 = vst.msk [vmem:[#allocation2 + $0x138] sm:$0xc] %vm341, %v300
      %346 = vst.msk [vmem:[#allocation2 + $0x1a0] sm:$0xc] %vm341, %v308
      %347 = vst.msk [vmem:[#allocation2 + $0x208] sm:$0xc] %vm341, %v316
      %348 = vst.msk [vmem:[#allocation2 + $0x270] sm:$0xc] %vm341, %v324
      %349 = vst.msk [vmem:[#allocation2 + $0x2d8] sm:$0xc] %vm341, %v332
      %v350 = vld [vmem:[%s219] sm:$0x3]
      %v351 = vld [vmem:[%s219 + $0x2] sm:$0x3]
      %v352 = vld [vmem:[%s219 + $0x4] sm:$0x3]
      %v353 = vld [vmem:[%s219 + $0x6] sm:$0x3]
      %v354 = vld [vmem:[%s219 + $0x8] sm:$0x3]
      %v355 = vld [vmem:[%s219 + $0xa] sm:$0x3]
      %v356 = vld [vmem:[%s219 + $0xc] sm:$0x3]
      %v357 = vld [vmem:[%s219 + $0xe] sm:$0x3]
      %v367 = vunpack.c.l.s4 1983009808
      %v368 = vunpack.c.0.s8 %v367
      %v369 = vlaneseq
      %v370 = vshrl.u32 %v369, 7
      %v371 = vsub.s32 %v368, %v370
      %v372 = vrot.slane %v350, %v371
      %v373 = vcombine.low %v372, %v372
      %v375 = vunpack.c.l.s4 1983009808
      %v376 = vunpack.c.0.s8 %v375
      %v377 = vlaneseq
      %v378 = vshrl.u32 %v377, 7
      %v379 = vsub.s32 %v376, %v378
      %v380 = vrot.slane %v351, %v379
      %v381 = vcombine.low %v380, %v380
      %v383 = vunpack.c.l.s4 1983009808
      %v384 = vunpack.c.0.s8 %v383
      %v385 = vlaneseq
      %v386 = vshrl.u32 %v385, 7
      %v387 = vsub.s32 %v384, %v386
      %v388 = vrot.slane %v352, %v387
      %v389 = vcombine.low %v388, %v388
      %v391 = vunpack.c.l.s4 1983009808
      %v392 = vunpack.c.0.s8 %v391
      %v393 = vlaneseq
      %v394 = vshrl.u32 %v393, 7
      %v395 = vsub.s32 %v392, %v394
      %v396 = vrot.slane %v353, %v395
      %v397 = vcombine.low %v396, %v396
      %v399 = vunpack.c.l.s4 1983009808
      %v400 = vunpack.c.0.s8 %v399
      %v401 = vlaneseq
      %v402 = vshrl.u32 %v401, 7
      %v403 = vsub.s32 %v400, %v402
      %v404 = vrot.slane %v354, %v403
      %v405 = vcombine.low %v404, %v404
      %v407 = vunpack.c.l.s4 1983009808
      %v408 = vunpack.c.0.s8 %v407
      %v409 = vlaneseq
      %v410 = vshrl.u32 %v409, 7
      %v411 = vsub.s32 %v408, %v410
      %v412 = vrot.slane %v355, %v411
      %v413 = vcombine.low %v412, %v412
      %v415 = vunpack.c.l.s4 1983009808
      %v416 = vunpack.c.0.s8 %v415
      %v417 = vlaneseq
      %v418 = vshrl.u32 %v417, 7
      %v419 = vsub.s32 %v416, %v418
      %v420 = vrot.slane %v356, %v419
      %v421 = vcombine.low %v420, %v420
      %v423 = vunpack.c.l.s4 1983009808
      %v424 = vunpack.c.0.s8 %v423
      %v425 = vlaneseq
      %v426 = vshrl.u32 %v425, 7
      %v427 = vsub.s32 %v424, %v426
      %v428 = vrot.slane %v357, %v427
      %v429 = vcombine.low %v428, %v428
      %430 = vrot.lane.b32.xlu0 %v373, 127
      %v431 = vpop.permute.xlu0 %430
      %432 = vrot.lane.b32.xlu0 %v381, 127
      %v433 = vpop.permute.xlu0 %432
      %434 = vrot.lane.b32.xlu0 %v389, 127
      %v435 = vpop.permute.xlu0 %434
      %436 = vrot.lane.b32.xlu0 %v397, 127
      %v437 = vpop.permute.xlu0 %436
      %438 = vrot.lane.b32.xlu0 %v405, 127
      %v439 = vpop.permute.xlu0 %438
      %440 = vrot.lane.b32.xlu0 %v413, 127
      %v441 = vpop.permute.xlu0 %440
      %442 = vrot.lane.b32.xlu0 %v421, 127
      %v443 = vpop.permute.xlu0 %442
      %444 = vrot.lane.b32.xlu0 %v429, 127
      %v445 = vpop.permute.xlu0 %444
      %vm454 = vcmask 62468
      %455 = vst.msk [vmem:[#allocation2] sm:$0x30] %vm454, %v431
      %456 = vst.msk [vmem:[#allocation2 + $0x68] sm:$0x30] %vm454, %v433
      %457 = vst.msk [vmem:[#allocation2 + $0xd0] sm:$0x30] %vm454, %v435
      %458 = vst.msk [vmem:[#allocation2 + $0x138] sm:$0x30] %vm454, %v437
      %459 = vst.msk [vmem:[#allocation2 + $0x1a0] sm:$0x30] %vm454, %v439
      %460 = vst.msk [vmem:[#allocation2 + $0x208] sm:$0x30] %vm454, %v441
      %461 = vst.msk [vmem:[#allocation2 + $0x270] sm:$0x30] %vm454, %v443
      %462 = vst.msk [vmem:[#allocation2 + $0x2d8] sm:$0x30] %vm454, %v445
      %v463 = vld [vmem:[%s252] sm:$0x3]
      %v464 = vld [vmem:[%s252 + $0x2] sm:$0x3]
      %v465 = vld [vmem:[%s252 + $0x4] sm:$0x3]
      %v466 = vld [vmem:[%s252 + $0x6] sm:$0x3]
      %v467 = vld [vmem:[%s252 + $0x8] sm:$0x3]
      %v468 = vld [vmem:[%s252 + $0xa] sm:$0x3]
      %v469 = vld [vmem:[%s252 + $0xc] sm:$0x3]
      %v470 = vld [vmem:[%s252 + $0xe] sm:$0x3]
      %v479 = vcombine.low %v463, %v463
      %v481 = vunpack.c.l.s4 1983009808
      %v482 = vunpack.c.0.s8 %v481
      %v483 = vlaneseq
      %v484 = vshrl.u32 %v483, 7
      %v485 = vsub.s32 %v482, %v484
      %v486 = vrot.slane %v479, %v485
      %v487 = vcombine.low %v486, %v486
      %v488 = vcombine.low %v464, %v464
      %v490 = vunpack.c.l.s4 1983009808
      %v491 = vunpack.c.0.s8 %v490
      %v492 = vlaneseq
      %v493 = vshrl.u32 %v492, 7
      %v494 = vsub.s32 %v491, %v493
      %v495 = vrot.slane %v488, %v494
      %v496 = vcombine.low %v495, %v495
      %v497 = vcombine.low %v465, %v465
      %v499 = vunpack.c.l.s4 1983009808
      %v500 = vunpack.c.0.s8 %v499
      %v501 = vlaneseq
      %v502 = vshrl.u32 %v501, 7
      %v503 = vsub.s32 %v500, %v502
      %v504 = vrot.slane %v497, %v503
      %v505 = vcombine.low %v504, %v504
      %v506 = vcombine.low %v466, %v466
      %v508 = vunpack.c.l.s4 1983009808
      %v509 = vunpack.c.0.s8 %v508
      %v510 = vlaneseq
      %v511 = vshrl.u32 %v510, 7
      %v512 = vsub.s32 %v509, %v511
      %v513 = vrot.slane %v506, %v512
      %v514 = vcombine.low %v513, %v513
      %v515 = vcombine.low %v467, %v467
      %v517 = vunpack.c.l.s4 1983009808
      %v518 = vunpack.c.0.s8 %v517
      %v519 = vlaneseq
      %v520 = vshrl.u32 %v519, 7
      %v521 = vsub.s32 %v518, %v520
      %v522 = vrot.slane %v515, %v521
      %v523 = vcombine.low %v522, %v522
      %v524 = vcombine.low %v468, %v468
      %v526 = vunpack.c.l.s4 1983009808
      %v527 = vunpack.c.0.s8 %v526
      %v528 = vlaneseq
      %v529 = vshrl.u32 %v528, 7
      %v530 = vsub.s32 %v527, %v529
      %v531 = vrot.slane %v524, %v530
      %v532 = vcombine.low %v531, %v531
      %v533 = vcombine.low %v469, %v469
      %v535 = vunpack.c.l.s4 1983009808
      %v536 = vunpack.c.0.s8 %v535
      %v537 = vlaneseq
      %v538 = vshrl.u32 %v537, 7
      %v539 = vsub.s32 %v536, %v538
      %v540 = vrot.slane %v533, %v539
      %v541 = vcombine.low %v540, %v540
      %v542 = vcombine.low %v470, %v470
      %v544 = vunpack.c.l.s4 1983009808
      %v545 = vunpack.c.0.s8 %v544
      %v546 = vlaneseq
      %v547 = vshrl.u32 %v546, 7
      %v548 = vsub.s32 %v545, %v547
      %v549 = vrot.slane %v542, %v548
      %v550 = vcombine.low %v549, %v549
      %551 = vrot.lane.b32.xlu0 %v487, 127
      %v552 = vpop.permute.xlu0 %551
      %553 = vrot.lane.b32.xlu0 %v496, 127
      %v554 = vpop.permute.xlu0 %553
      %555 = vrot.lane.b32.xlu0 %v505, 127
      %v556 = vpop.permute.xlu0 %555
      %557 = vrot.lane.b32.xlu0 %v514, 127
      %v558 = vpop.permute.xlu0 %557
      %559 = vrot.lane.b32.xlu0 %v523, 127
      %v560 = vpop.permute.xlu0 %559
      %561 = vrot.lane.b32.xlu0 %v532, 127
      %v562 = vpop.permute.xlu0 %561
      %563 = vrot.lane.b32.xlu0 %v541, 127
      %v564 = vpop.permute.xlu0 %563
      %565 = vrot.lane.b32.xlu0 %v550, 127
      %v566 = vpop.permute.xlu0 %565
      %vm575 = vcmask 64518
      %576 = vst.msk [vmem:[#allocation2] sm:$0xc0] %vm575, %v552
      %577 = vst.msk [vmem:[#allocation2 + $0x68] sm:$0xc0] %vm575, %v554
      %578 = vst.msk [vmem:[#allocation2 + $0xd0] sm:$0xc0] %vm575, %v556
      %579 = vst.msk [vmem:[#allocation2 + $0x138] sm:$0xc0] %vm575, %v558
      %580 = vst.msk [vmem:[#allocation2 + $0x1a0] sm:$0xc0] %vm575, %v560
      %581 = vst.msk [vmem:[#allocation2 + $0x208] sm:$0xc0] %vm575, %v562
      %582 = vst.msk [vmem:[#allocation2 + $0x270] sm:$0xc0] %vm575, %v564
      %583 = vst.msk [vmem:[#allocation2 + $0x2d8] sm:$0xc0] %vm575, %v566
      %v584 = vld [vmem:[%s219] sm:$0x3]
      %v585 = vld [vmem:[%s219 + $0x2] sm:$0x3]
      %v586 = vld [vmem:[%s219 + $0x4] sm:$0x3]
      %v587 = vld [vmem:[%s219 + $0x6] sm:$0x3]
      %v588 = vld [vmem:[%s219 + $0x8] sm:$0x3]
      %v589 = vld [vmem:[%s219 + $0xa] sm:$0x3]
      %v590 = vld [vmem:[%s219 + $0xc] sm:$0x3]
      %v591 = vld [vmem:[%s219 + $0xe] sm:$0x3]
      %v601 = vunpack.c.l.s4 1983009808
      %v602 = vunpack.c.0.s8 %v601
      %v603 = vlaneseq
      %v604 = vshrl.u32 %v603, 7
      %v605 = vsub.s32 %v602, %v604
      %v606 = vrot.slane %v584, %v605
      %v608 = vunpack.c.l.s4 1983009808
      %v609 = vunpack.c.0.s8 %v608
      %v610 = vlaneseq
      %v611 = vshrl.u32 %v610, 7
      %v612 = vsub.s32 %v609, %v611
      %v613 = vrot.slane %v585, %v612
      %v615 = vunpack.c.l.s4 1983009808
      %v616 = vunpack.c.0.s8 %v615
      %v617 = vlaneseq
      %v618 = vshrl.u32 %v617, 7
      %v619 = vsub.s32 %v616, %v618
      %v620 = vrot.slane %v586, %v619
      %v622 = vunpack.c.l.s4 1983009808
      %v623 = vunpack.c.0.s8 %v622
      %v624 = vlaneseq
      %v625 = vshrl.u32 %v624, 7
      %v626 = vsub.s32 %v623, %v625
      %v627 = vrot.slane %v587, %v626
      %v629 = vunpack.c.l.s4 1983009808
      %v630 = vunpack.c.0.s8 %v629
      %v631 = vlaneseq
      %v632 = vshrl.u32 %v631, 7
      %v633 = vsub.s32 %v630, %v632
      %v634 = vrot.slane %v588, %v633
      %v636 = vunpack.c.l.s4 1983009808
      %v637 = vunpack.c.0.s8 %v636
      %v638 = vlaneseq
      %v639 = vshrl.u32 %v638, 7
      %v640 = vsub.s32 %v637, %v639
      %v641 = vrot.slane %v589, %v640
      %v643 = vunpack.c.l.s4 1983009808
      %v644 = vunpack.c.0.s8 %v643
      %v645 = vlaneseq
      %v646 = vshrl.u32 %v645, 7
      %v647 = vsub.s32 %v644, %v646
      %v648 = vrot.slane %v590, %v647
      %v650 = vunpack.c.l.s4 1983009808
      %v651 = vunpack.c.0.s8 %v650
      %v652 = vlaneseq
      %v653 = vshrl.u32 %v652, 7
      %v654 = vsub.s32 %v651, %v653
      %v655 = vrot.slane %v591, %v654
      %656 = vrot.lane.b32.xlu0 %v606, 126
      %v657 = vpop.permute.xlu0 %656
      %658 = vrot.lane.b32.xlu0 %v613, 126
      %v659 = vpop.permute.xlu0 %658
      %660 = vrot.lane.b32.xlu0 %v620, 126
      %v661 = vpop.permute.xlu0 %660
      %662 = vrot.lane.b32.xlu0 %v627, 126
      %v663 = vpop.permute.xlu0 %662
      %664 = vrot.lane.b32.xlu0 %v634, 126
      %v665 = vpop.permute.xlu0 %664
      %666 = vrot.lane.b32.xlu0 %v641, 126
      %v667 = vpop.permute.xlu0 %666
      %668 = vrot.lane.b32.xlu0 %v648, 126
      %v669 = vpop.permute.xlu0 %668
      %670 = vrot.lane.b32.xlu0 %v655, 126
      %v671 = vpop.permute.xlu0 %670
      %680 = vst.msk [vmem:[#allocation2 + $0x8] sm:$0x3] %vm243, %v657
      %681 = vst.msk [vmem:[#allocation2 + $0x70] sm:$0x3] %vm243, %v659
      %682 = vst.msk [vmem:[#allocation2 + $0xd8] sm:$0x3] %vm243, %v661
      %683 = vst.msk [vmem:[#allocation2 + $0x140] sm:$0x3] %vm243, %v663
      %684 = vst.msk [vmem:[#allocation2 + $0x1a8] sm:$0x3] %vm243, %v665
      %685 = vst.msk [vmem:[#allocation2 + $0x210] sm:$0x3] %vm243, %v667
      %686 = vst.msk [vmem:[#allocation2 + $0x278] sm:$0x3] %vm243, %v669
      %687 = vst.msk [vmem:[#allocation2 + $0x2e0] sm:$0x3] %vm243, %v671
      %v688 = vld [vmem:[%s252] sm:$0x3]
      %v689 = vld [vmem:[%s252 + $0x2] sm:$0x3]
      %v690 = vld [vmem:[%s252 + $0x4] sm:$0x3]
      %v691 = vld [vmem:[%s252 + $0x6] sm:$0x3]
      %v692 = vld [vmem:[%s252 + $0x8] sm:$0x3]
      %v693 = vld [vmem:[%s252 + $0xa] sm:$0x3]
      %v694 = vld [vmem:[%s252 + $0xc] sm:$0x3]
      %v695 = vld [vmem:[%s252 + $0xe] sm:$0x3]
      %v704 = vcombine.low %v688, %v688
      %v706 = vunpack.c.l.s4 1983009808
      %v707 = vunpack.c.0.s8 %v706
      %v708 = vlaneseq
      %v709 = vshrl.u32 %v708, 7
      %v710 = vsub.s32 %v707, %v709
      %v711 = vrot.slane %v704, %v710
      %v712 = vcombine.low %v689, %v689
      %v714 = vunpack.c.l.s4 1983009808
      %v715 = vunpack.c.0.s8 %v714
      %v716 = vlaneseq
      %v717 = vshrl.u32 %v716, 7
      %v718 = vsub.s32 %v715, %v717
      %v719 = vrot.slane %v712, %v718
      %v720 = vcombine.low %v690, %v690
      %v722 = vunpack.c.l.s4 1983009808
      %v723 = vunpack.c.0.s8 %v722
      %v724 = vlaneseq
      %v725 = vshrl.u32 %v724, 7
      %v726 = vsub.s32 %v723, %v725
      %v727 = vrot.slane %v720, %v726
      %v728 = vcombine.low %v691, %v691
      %v730 = vunpack.c.l.s4 1983009808
      %v731 = vunpack.c.0.s8 %v730
      %v732 = vlaneseq
      %v733 = vshrl.u32 %v732, 7
      %v734 = vsub.s32 %v731, %v733
      %v735 = vrot.slane %v728, %v734
      %v736 = vcombine.low %v692, %v692
      %v738 = vunpack.c.l.s4 1983009808
      %v739 = vunpack.c.0.s8 %v738
      %v740 = vlaneseq
      %v741 = vshrl.u32 %v740, 7
      %v742 = vsub.s32 %v739, %v741
      %v743 = vrot.slane %v736, %v742
      %v744 = vcombine.low %v693, %v693
      %v746 = vunpack.c.l.s4 1983009808
      %v747 = vunpack.c.0.s8 %v746
      %v748 = vlaneseq
      %v749 = vshrl.u32 %v748, 7
      %v750 = vsub.s32 %v747, %v749
      %v751 = vrot.slane %v744, %v750
      %v752 = vcombine.low %v694, %v694
      %v754 = vunpack.c.l.s4 1983009808
      %v755 = vunpack.c.0.s8 %v754
      %v756 = vlaneseq
      %v757 = vshrl.u32 %v756, 7
      %v758 = vsub.s32 %v755, %v757
      %v759 = vrot.slane %v752, %v758
      %v760 = vcombine.low %v695, %v695
      %v762 = vunpack.c.l.s4 1983009808
      %v763 = vunpack.c.0.s8 %v762
      %v764 = vlaneseq
      %v765 = vshrl.u32 %v764, 7
      %v766 = vsub.s32 %v763, %v765
      %v767 = vrot.slane %v760, %v766
      %768 = vrot.lane.b32.xlu0 %v711, 126
      %v769 = vpop.permute.xlu0 %768
      %770 = vrot.lane.b32.xlu0 %v719, 126
      %v771 = vpop.permute.xlu0 %770
      %772 = vrot.lane.b32.xlu0 %v727, 126
      %v773 = vpop.permute.xlu0 %772
      %774 = vrot.lane.b32.xlu0 %v735, 126
      %v775 = vpop.permute.xlu0 %774
      %776 = vrot.lane.b32.xlu0 %v743, 126
      %v777 = vpop.permute.xlu0 %776
      %778 = vrot.lane.b32.xlu0 %v751, 126
      %v779 = vpop.permute.xlu0 %778
      %780 = vrot.lane.b32.xlu0 %v759, 126
      %v781 = vpop.permute.xlu0 %780
      %782 = vrot.lane.b32.xlu0 %v767, 126
      %v783 = vpop.permute.xlu0 %782
      %792 = vst.msk [vmem:[#allocation2 + $0x8] sm:$0xc] %vm341, %v769
      %793 = vst.msk [vmem:[#allocation2 + $0x70] sm:$0xc] %vm341, %v771
      %794 = vst.msk [vmem:[#allocation2 + $0xd8] sm:$0xc] %vm341, %v773
      %795 = vst.msk [vmem:[#allocation2 + $0x140] sm:$0xc] %vm341, %v775
      %796 = vst.msk [vmem:[#allocation2 + $0x1a8] sm:$0xc] %vm341, %v777
      %797 = vst.msk [vmem:[#allocation2 + $0x210] sm:$0xc] %vm341, %v779
      %798 = vst.msk [vmem:[#allocation2 + $0x278] sm:$0xc] %vm341, %v781
      %799 = vst.msk [vmem:[#allocation2 + $0x2e0] sm:$0xc] %vm341, %v783
      %v800 = vld [vmem:[%s219] sm:$0x3]
      %v801 = vld [vmem:[%s219 + $0x2] sm:$0x3]
      %v802 = vld [vmem:[%s219 + $0x4] sm:$0x3]
      %v803 = vld [vmem:[%s219 + $0x6] sm:$0x3]
      %v804 = vld [vmem:[%s219 + $0x8] sm:$0x3]
      %v805 = vld [vmem:[%s219 + $0xa] sm:$0x3]
      %v806 = vld [vmem:[%s219 + $0xc] sm:$0x3]
      %v807 = vld [vmem:[%s219 + $0xe] sm:$0x3]
      %v817 = vunpack.c.l.s4 1983009808
      %v818 = vunpack.c.0.s8 %v817
      %v819 = vlaneseq
      %v820 = vshrl.u32 %v819, 7
      %v821 = vsub.s32 %v818, %v820
      %v822 = vrot.slane %v800, %v821
      %v823 = vcombine.low %v822, %v822
      %v825 = vunpack.c.l.s4 1983009808
      %v826 = vunpack.c.0.s8 %v825
      %v827 = vlaneseq
      %v828 = vshrl.u32 %v827, 7
      %v829 = vsub.s32 %v826, %v828
      %v830 = vrot.slane %v801, %v829
      %v831 = vcombine.low %v830, %v830
      %v833 = vunpack.c.l.s4 1983009808
      %v834 = vunpack.c.0.s8 %v833
      %v835 = vlaneseq
      %v836 = vshrl.u32 %v835, 7
      %v837 = vsub.s32 %v834, %v836
      %v838 = vrot.slane %v802, %v837
      %v839 = vcombine.low %v838, %v838
      %v841 = vunpack.c.l.s4 1983009808
      %v842 = vunpack.c.0.s8 %v841
      %v843 = vlaneseq
      %v844 = vshrl.u32 %v843, 7
      %v845 = vsub.s32 %v842, %v844
      %v846 = vrot.slane %v803, %v845
      %v847 = vcombine.low %v846, %v846
      %v849 = vunpack.c.l.s4 1983009808
      %v850 = vunpack.c.0.s8 %v849
      %v851 = vlaneseq
      %v852 = vshrl.u32 %v851, 7
      %v853 = vsub.s32 %v850, %v852
      %v854 = vrot.slane %v804, %v853
      %v855 = vcombine.low %v854, %v854
      %v857 = vunpack.c.l.s4 1983009808
      %v858 = vunpack.c.0.s8 %v857
      %v859 = vlaneseq
      %v860 = vshrl.u32 %v859, 7
      %v861 = vsub.s32 %v858, %v860
      %v862 = vrot.slane %v805, %v861
      %v863 = vcombine.low %v862, %v862
      %v865 = vunpack.c.l.s4 1983009808
      %v866 = vunpack.c.0.s8 %v865
      %v867 = vlaneseq
      %v868 = vshrl.u32 %v867, 7
      %v869 = vsub.s32 %v866, %v868
      %v870 = vrot.slane %v806, %v869
      %v871 = vcombine.low %v870, %v870
      %v873 = vunpack.c.l.s4 1983009808
      %v874 = vunpack.c.0.s8 %v873
      %v875 = vlaneseq
      %v876 = vshrl.u32 %v875, 7
      %v877 = vsub.s32 %v874, %v876
      %v878 = vrot.slane %v807, %v877
      %v879 = vcombine.low %v878, %v878
      %880 = vrot.lane.b32.xlu0 %v823, 125
      %v881 = vpop.permute.xlu0 %880
      %882 = vrot.lane.b32.xlu0 %v831, 125
      %v883 = vpop.permute.xlu0 %882
      %884 = vrot.lane.b32.xlu0 %v839, 125
      %v885 = vpop.permute.xlu0 %884
      %886 = vrot.lane.b32.xlu0 %v847, 125
      %v887 = vpop.permute.xlu0 %886
      %888 = vrot.lane.b32.xlu0 %v855, 125
      %v889 = vpop.permute.xlu0 %888
      %890 = vrot.lane.b32.xlu0 %v863, 125
      %v891 = vpop.permute.xlu0 %890
      %892 = vrot.lane.b32.xlu0 %v871, 125
      %v893 = vpop.permute.xlu0 %892
      %894 = vrot.lane.b32.xlu0 %v879, 125
      %v895 = vpop.permute.xlu0 %894
      %904 = vst.msk [vmem:[#allocation2 + $0x8] sm:$0x30] %vm454, %v881
      %905 = vst.msk [vmem:[#allocation2 + $0x70] sm:$0x30] %vm454, %v883
      %906 = vst.msk [vmem:[#allocation2 + $0xd8] sm:$0x30] %vm454, %v885
      %907 = vst.msk [vmem:[#allocation2 + $0x140] sm:$0x30] %vm454, %v887
      %908 = vst.msk [vmem:[#allocation2 + $0x1a8] sm:$0x30] %vm454, %v889
      %909 = vst.msk [vmem:[#allocation2 + $0x210] sm:$0x30] %vm454, %v891
      %910 = vst.msk [vmem:[#allocation2 + $0x278] sm:$0x30] %vm454, %v893
      %911 = vst.msk [vmem:[#allocation2 + $0x2e0] sm:$0x30] %vm454, %v895
      %s912 = scalar_lea.vmem %s219, 44
      %v913 = vld [vmem:[%s912] sm:$0x3]
      %v914 = vld [vmem:[%s912 + $0x2] sm:$0x3]
      %v915 = vld [vmem:[%s912 + $0x4] sm:$0x3]
      %v916 = vld [vmem:[%s912 + $0x6] sm:$0x3]
      %v917 = vld [vmem:[%s912 + $0x8] sm:$0x3]
      %v918 = vld [vmem:[%s912 + $0xa] sm:$0x3]
      %v919 = vld [vmem:[%s912 + $0xc] sm:$0x3]
      %v920 = vld [vmem:[%s912 + $0xe] sm:$0x3]
      %v929 = vcombine.low %v913, %v913
      %v931 = vunpack.c.l.s4 1983009808
      %v932 = vunpack.c.0.s8 %v931
      %v933 = vlaneseq
      %v934 = vshrl.u32 %v933, 7
      %v935 = vsub.s32 %v932, %v934
      %v936 = vrot.slane %v929, %v935
      %v937 = vcombine.low %v936, %v936
      %v938 = vcombine.low %v914, %v914
      %v940 = vunpack.c.l.s4 1983009808
      %v941 = vunpack.c.0.s8 %v940
      %v942 = vlaneseq
      %v943 = vshrl.u32 %v942, 7
      %v944 = vsub.s32 %v941, %v943
      %v945 = vrot.slane %v938, %v944
      %v946 = vcombine.low %v945, %v945
      %v947 = vcombine.low %v915, %v915
      %v949 = vunpack.c.l.s4 1983009808
      %v950 = vunpack.c.0.s8 %v949
      %v951 = vlaneseq
      %v952 = vshrl.u32 %v951, 7
      %v953 = vsub.s32 %v950, %v952
      %v954 = vrot.slane %v947, %v953
      %v955 = vcombine.low %v954, %v954
      %v956 = vcombine.low %v916, %v916
      %v958 = vunpack.c.l.s4 1983009808
      %v959 = vunpack.c.0.s8 %v958
      %v960 = vlaneseq
      %v961 = vshrl.u32 %v960, 7
      %v962 = vsub.s32 %v959, %v961
      %v963 = vrot.slane %v956, %v962
      %v964 = vcombine.low %v963, %v963
      %v965 = vcombine.low %v917, %v917
      %v967 = vunpack.c.l.s4 1983009808
      %v968 = vunpack.c.0.s8 %v967
      %v969 = vlaneseq
      %v970 = vshrl.u32 %v969, 7
      %v971 = vsub.s32 %v968, %v970
      %v972 = vrot.slane %v965, %v971
      %v973 = vcombine.low %v972, %v972
      %v974 = vcombine.low %v918, %v918
      %v976 = vunpack.c.l.s4 1983009808
      %v977 = vunpack.c.0.s8 %v976
      %v978 = vlaneseq
      %v979 = vshrl.u32 %v978, 7
      %v980 = vsub.s32 %v977, %v979
      %v981 = vrot.slane %v974, %v980
      %v982 = vcombine.low %v981, %v981
      %v983 = vcombine.low %v919, %v919
      %v985 = vunpack.c.l.s4 1983009808
      %v986 = vunpack.c.0.s8 %v985
      %v987 = vlaneseq
      %v988 = vshrl.u32 %v987, 7
      %v989 = vsub.s32 %v986, %v988
      %v990 = vrot.slane %v983, %v989
      %v991 = vcombine.low %v990, %v990
      %v992 = vcombine.low %v920, %v920
      %v994 = vunpack.c.l.s4 1983009808
      %v995 = vunpack.c.0.s8 %v994
      %v996 = vlaneseq
      %v997 = vshrl.u32 %v996, 7
      %v998 = vsub.s32 %v995, %v997
      %v999 = vrot.slane %v992, %v998
      %v1000 = vcombine.low %v999, %v999
      %1009 = vst.msk [vmem:[#allocation2 + $0x8] sm:$0xc0] %vm575, %v937
      %1010 = vst.msk [vmem:[#allocation2 + $0x70] sm:$0xc0] %vm575, %v946
      %1011 = vst.msk [vmem:[#allocation2 + $0xd8] sm:$0xc0] %vm575, %v955
      %1012 = vst.msk [vmem:[#allocation2 + $0x140] sm:$0xc0] %vm575, %v964
      %1013 = vst.msk [vmem:[#allocation2 + $0x1a8] sm:$0xc0] %vm575, %v973
      %1014 = vst.msk [vmem:[#allocation2 + $0x210] sm:$0xc0] %vm575, %v982
      %1015 = vst.msk [vmem:[#allocation2 + $0x278] sm:$0xc0] %vm575, %v991
      %1016 = vst.msk [vmem:[#allocation2 + $0x2e0] sm:$0xc0] %vm575, %v1000
      %s1017 = scalar_lea.vmem %s219, 66
      %v1018 = vld [vmem:[%s1017] sm:$0x3]
      %v1019 = vld [vmem:[%s1017 + $0x2] sm:$0x3]
      %v1020 = vld [vmem:[%s1017 + $0x4] sm:$0x3]
      %v1021 = vld [vmem:[%s1017 + $0x6] sm:$0x3]
      %v1022 = vld [vmem:[%s1017 + $0x8] sm:$0x3]
      %v1023 = vld [vmem:[%s1017 + $0xa] sm:$0x3]
      %v1024 = vld [vmem:[%s1017 + $0xc] sm:$0x3]
      %v1025 = vld [vmem:[%s1017 + $0xe] sm:$0x3]
      %1026 = vst.msk [vmem:[#allocation2 + $0x10] sm:$0x3] %vm243, %v1018
      %1027 = vst.msk [vmem:[#allocation2 + $0x78] sm:$0x3] %vm243, %v1019
      %1028 = vst.msk [vmem:[#allocation2 + $0xe0] sm:$0x3] %vm243, %v1020
      %1029 = vst.msk [vmem:[#allocation2 + $0x148] sm:$0x3] %vm243, %v1021
      %1030 = vst.msk [vmem:[#allocation2 + $0x1b0] sm:$0x3] %vm243, %v1022
      %1031 = vst.msk [vmem:[#allocation2 + $0x218] sm:$0x3] %vm243, %v1023
      %1032 = vst.msk [vmem:[#allocation2 + $0x280] sm:$0x3] %vm243, %v1024
      %1033 = vst.msk [vmem:[#allocation2 + $0x2e8] sm:$0x3] %vm243, %v1025
      %v1034 = vld [vmem:[%s912] sm:$0x3]
      %v1035 = vld [vmem:[%s912 + $0x2] sm:$0x3]
      %v1036 = vld [vmem:[%s912 + $0x4] sm:$0x3]
      %v1037 = vld [vmem:[%s912 + $0x6] sm:$0x3]
      %v1038 = vld [vmem:[%s912 + $0x8] sm:$0x3]
      %v1039 = vld [vmem:[%s912 + $0xa] sm:$0x3]
      %v1040 = vld [vmem:[%s912 + $0xc] sm:$0x3]
      %v1041 = vld [vmem:[%s912 + $0xe] sm:$0x3]
      %v1050 = vcombine.low %v1034, %v1034
      %v1052 = vunpack.c.l.s4 1983009808
      %v1053 = vunpack.c.0.s8 %v1052
      %v1054 = vlaneseq
      %v1055 = vshrl.u32 %v1054, 7
      %v1056 = vsub.s32 %v1053, %v1055
      %v1057 = vrot.slane %v1050, %v1056
      %v1058 = vcombine.low %v1035, %v1035
      %v1060 = vunpack.c.l.s4 1983009808
      %v1061 = vunpack.c.0.s8 %v1060
      %v1062 = vlaneseq
      %v1063 = vshrl.u32 %v1062, 7
      %v1064 = vsub.s32 %v1061, %v1063
      %v1065 = vrot.slane %v1058, %v1064
      %v1066 = vcombine.low %v1036, %v1036
      %v1068 = vunpack.c.l.s4 1983009808
      %v1069 = vunpack.c.0.s8 %v1068
      %v1070 = vlaneseq
      %v1071 = vshrl.u32 %v1070, 7
      %v1072 = vsub.s32 %v1069, %v1071
      %v1073 = vrot.slane %v1066, %v1072
      %v1074 = vcombine.low %v1037, %v1037
      %v1076 = vunpack.c.l.s4 1983009808
      %v1077 = vunpack.c.0.s8 %v1076
      %v1078 = vlaneseq
      %v1079 = vshrl.u32 %v1078, 7
      %v1080 = vsub.s32 %v1077, %v1079
      %v1081 = vrot.slane %v1074, %v1080
      %v1082 = vcombine.low %v1038, %v1038
      %v1084 = vunpack.c.l.s4 1983009808
      %v1085 = vunpack.c.0.s8 %v1084
      %v1086 = vlaneseq
      %v1087 = vshrl.u32 %v1086, 7
      %v1088 = vsub.s32 %v1085, %v1087
      %v1089 = vrot.slane %v1082, %v1088
      %v1090 = vcombine.low %v1039, %v1039
      %v1092 = vunpack.c.l.s4 1983009808
      %v1093 = vunpack.c.0.s8 %v1092
      %v1094 = vlaneseq
      %v1095 = vshrl.u32 %v1094, 7
      %v1096 = vsub.s32 %v1093, %v1095
      %v1097 = vrot.slane %v1090, %v1096
      %v1098 = vcombine.low %v1040, %v1040
      %v1100 = vunpack.c.l.s4 1983009808
      %v1101 = vunpack.c.0.s8 %v1100
      %v1102 = vlaneseq
      %v1103 = vshrl.u32 %v1102, 7
      %v1104 = vsub.s32 %v1101, %v1103
      %v1105 = vrot.slane %v1098, %v1104
      %v1106 = vcombine.low %v1041, %v1041
      %v1108 = vunpack.c.l.s4 1983009808
      %v1109 = vunpack.c.0.s8 %v1108
      %v1110 = vlaneseq
      %v1111 = vshrl.u32 %v1110, 7
      %v1112 = vsub.s32 %v1109, %v1111
      %v1113 = vrot.slane %v1106, %v1112
      %1114 = vrot.lane.b32.xlu0 %v1057, 127
      %v1115 = vpop.permute.xlu0 %1114
      %1116 = vrot.lane.b32.xlu0 %v1065, 127
      %v1117 = vpop.permute.xlu0 %1116
      %1118 = vrot.lane.b32.xlu0 %v1073, 127
      %v1119 = vpop.permute.xlu0 %1118
      %1120 = vrot.lane.b32.xlu0 %v1081, 127
      %v1121 = vpop.permute.xlu0 %1120
      %1122 = vrot.lane.b32.xlu0 %v1089, 127
      %v1123 = vpop.permute.xlu0 %1122
      %1124 = vrot.lane.b32.xlu0 %v1097, 127
      %v1125 = vpop.permute.xlu0 %1124
      %1126 = vrot.lane.b32.xlu0 %v1105, 127
      %v1127 = vpop.permute.xlu0 %1126
      %1128 = vrot.lane.b32.xlu0 %v1113, 127
      %v1129 = vpop.permute.xlu0 %1128
      %1138 = vst.msk [vmem:[#allocation2 + $0x10] sm:$0xc] %vm341, %v1115
      %1139 = vst.msk [vmem:[#allocation2 + $0x78] sm:$0xc] %vm341, %v1117
      %1140 = vst.msk [vmem:[#allocation2 + $0xe0] sm:$0xc] %vm341, %v1119
      %1141 = vst.msk [vmem:[#allocation2 + $0x148] sm:$0xc] %vm341, %v1121
      %1142 = vst.msk [vmem:[#allocation2 + $0x1b0] sm:$0xc] %vm341, %v1123
      %1143 = vst.msk [vmem:[#allocation2 + $0x218] sm:$0xc] %vm341, %v1125
      %1144 = vst.msk [vmem:[#allocation2 + $0x280] sm:$0xc] %vm341, %v1127
      %1145 = vst.msk [vmem:[#allocation2 + $0x2e8] sm:$0xc] %vm341, %v1129
      %v1146 = vld [vmem:[%s1017] sm:$0x3]
      %v1147 = vld [vmem:[%s1017 + $0x2] sm:$0x3]
      %v1148 = vld [vmem:[%s1017 + $0x4] sm:$0x3]
      %v1149 = vld [vmem:[%s1017 + $0x6] sm:$0x3]
      %v1150 = vld [vmem:[%s1017 + $0x8] sm:$0x3]
      %v1151 = vld [vmem:[%s1017 + $0xa] sm:$0x3]
      %v1152 = vld [vmem:[%s1017 + $0xc] sm:$0x3]
      %v1153 = vld [vmem:[%s1017 + $0xe] sm:$0x3]
      %v1163 = vunpack.c.l.s4 1983009808
      %v1164 = vunpack.c.0.s8 %v1163
      %v1165 = vlaneseq
      %v1166 = vshrl.u32 %v1165, 7
      %v1167 = vsub.s32 %v1164, %v1166
      %v1168 = vrot.slane %v1146, %v1167
      %v1169 = vcombine.low %v1168, %v1168
      %v1171 = vunpack.c.l.s4 1983009808
      %v1172 = vunpack.c.0.s8 %v1171
      %v1173 = vlaneseq
      %v1174 = vshrl.u32 %v1173, 7
      %v1175 = vsub.s32 %v1172, %v1174
      %v1176 = vrot.slane %v1147, %v1175
      %v1177 = vcombine.low %v1176, %v1176
      %v1179 = vunpack.c.l.s4 1983009808
      %v1180 = vunpack.c.0.s8 %v1179
      %v1181 = vlaneseq
      %v1182 = vshrl.u32 %v1181, 7
      %v1183 = vsub.s32 %v1180, %v1182
      %v1184 = vrot.slane %v1148, %v1183
      %v1185 = vcombine.low %v1184, %v1184
      %v1187 = vunpack.c.l.s4 1983009808
      %v1188 = vunpack.c.0.s8 %v1187
      %v1189 = vlaneseq
      %v1190 = vshrl.u32 %v1189, 7
      %v1191 = vsub.s32 %v1188, %v1190
      %v1192 = vrot.slane %v1149, %v1191
      %v1193 = vcombine.low %v1192, %v1192
      %v1195 = vunpack.c.l.s4 1983009808
      %v1196 = vunpack.c.0.s8 %v1195
      %v1197 = vlaneseq
      %v1198 = vshrl.u32 %v1197, 7
      %v1199 = vsub.s32 %v1196, %v1198
      %v1200 = vrot.slane %v1150, %v1199
      %v1201 = vcombine.low %v1200, %v1200
      %v1203 = vunpack.c.l.s4 1983009808
      %v1204 = vunpack.c.0.s8 %v1203
      %v1205 = vlaneseq
      %v1206 = vshrl.u32 %v1205, 7
      %v1207 = vsub.s32 %v1204, %v1206
      %v1208 = vrot.slane %v1151, %v1207
      %v1209 = vcombine.low %v1208, %v1208
      %v1211 = vunpack.c.l.s4 1983009808
      %v1212 = vunpack.c.0.s8 %v1211
      %v1213 = vlaneseq
      %v1214 = vshrl.u32 %v1213, 7
      %v1215 = vsub.s32 %v1212, %v1214
      %v1216 = vrot.slane %v1152, %v1215
      %v1217 = vcombine.low %v1216, %v1216
      %v1219 = vunpack.c.l.s4 1983009808
      %v1220 = vunpack.c.0.s8 %v1219
      %v1221 = vlaneseq
      %v1222 = vshrl.u32 %v1221, 7
      %v1223 = vsub.s32 %v1220, %v1222
      %v1224 = vrot.slane %v1153, %v1223
      %v1225 = vcombine.low %v1224, %v1224
      %1226 = vrot.lane.b32.xlu0 %v1169, 127
      %v1227 = vpop.permute.xlu0 %1226
      %1228 = vrot.lane.b32.xlu0 %v1177, 127
      %v1229 = vpop.permute.xlu0 %1228
      %1230 = vrot.lane.b32.xlu0 %v1185, 127
      %v1231 = vpop.permute.xlu0 %1230
      %1232 = vrot.lane.b32.xlu0 %v1193, 127
      %v1233 = vpop.permute.xlu0 %1232
      %1234 = vrot.lane.b32.xlu0 %v1201, 127
      %v1235 = vpop.permute.xlu0 %1234
      %1236 = vrot.lane.b32.xlu0 %v1209, 127
      %v1237 = vpop.permute.xlu0 %1236
      %1238 = vrot.lane.b32.xlu0 %v1217, 127
      %v1239 = vpop.permute.xlu0 %1238
      %1240 = vrot.lane.b32.xlu0 %v1225, 127
      %v1241 = vpop.permute.xlu0 %1240
      %1250 = vst.msk [vmem:[#allocation2 + $0x10] sm:$0x30] %vm454, %v1227
      %1251 = vst.msk [vmem:[#allocation2 + $0x78] sm:$0x30] %vm454, %v1229
      %1252 = vst.msk [vmem:[#allocation2 + $0xe0] sm:$0x30] %vm454, %v1231
      %1253 = vst.msk [vmem:[#allocation2 + $0x148] sm:$0x30] %vm454, %v1233
      %1254 = vst.msk [vmem:[#allocation2 + $0x1b0] sm:$0x30] %vm454, %v1235
      %1255 = vst.msk [vmem:[#allocation2 + $0x218] sm:$0x30] %vm454, %v1237
      %1256 = vst.msk [vmem:[#allocation2 + $0x280] sm:$0x30] %vm454, %v1239
      %1257 = vst.msk [vmem:[#allocation2 + $0x2e8] sm:$0x30] %vm454, %v1241
      %v1258 = vld [vmem:[%s912] sm:$0x3]
      %v1259 = vld [vmem:[%s912 + $0x2] sm:$0x3]
      %v1260 = vld [vmem:[%s912 + $0x4] sm:$0x3]
      %v1261 = vld [vmem:[%s912 + $0x6] sm:$0x3]
      %v1262 = vld [vmem:[%s912 + $0x8] sm:$0x3]
      %v1263 = vld [vmem:[%s912 + $0xa] sm:$0x3]
      %v1264 = vld [vmem:[%s912 + $0xc] sm:$0x3]
      %v1265 = vld [vmem:[%s912 + $0xe] sm:$0x3]
      %v1274 = vcombine.low %v1258, %v1258
      %v1276 = vunpack.c.l.s4 1983009808
      %v1277 = vunpack.c.0.s8 %v1276
      %v1278 = vlaneseq
      %v1279 = vshrl.u32 %v1278, 7
      %v1280 = vsub.s32 %v1277, %v1279
      %v1281 = vrot.slane %v1274, %v1280
      %v1282 = vcombine.low %v1281, %v1281
      %v1283 = vcombine.low %v1259, %v1259
      %v1285 = vunpack.c.l.s4 1983009808
      %v1286 = vunpack.c.0.s8 %v1285
      %v1287 = vlaneseq
      %v1288 = vshrl.u32 %v1287, 7
      %v1289 = vsub.s32 %v1286, %v1288
      %v1290 = vrot.slane %v1283, %v1289
      %v1291 = vcombine.low %v1290, %v1290
      %v1292 = vcombine.low %v1260, %v1260
      %v1294 = vunpack.c.l.s4 1983009808
      %v1295 = vunpack.c.0.s8 %v1294
      %v1296 = vlaneseq
      %v1297 = vshrl.u32 %v1296, 7
      %v1298 = vsub.s32 %v1295, %v1297
      %v1299 = vrot.slane %v1292, %v1298
      %v1300 = vcombine.low %v1299, %v1299
      %v1301 = vcombine.low %v1261, %v1261
      %v1303 = vunpack.c.l.s4 1983009808
      %v1304 = vunpack.c.0.s8 %v1303
      %v1305 = vlaneseq
      %v1306 = vshrl.u32 %v1305, 7
      %v1307 = vsub.s32 %v1304, %v1306
      %v1308 = vrot.slane %v1301, %v1307
      %v1309 = vcombine.low %v1308, %v1308
      %v1310 = vcombine.low %v1262, %v1262
      %v1312 = vunpack.c.l.s4 1983009808
      %v1313 = vunpack.c.0.s8 %v1312
      %v1314 = vlaneseq
      %v1315 = vshrl.u32 %v1314, 7
      %v1316 = vsub.s32 %v1313, %v1315
      %v1317 = vrot.slane %v1310, %v1316
      %v1318 = vcombine.low %v1317, %v1317
      %v1319 = vcombine.low %v1263, %v1263
      %v1321 = vunpack.c.l.s4 1983009808
      %v1322 = vunpack.c.0.s8 %v1321
      %v1323 = vlaneseq
      %v1324 = vshrl.u32 %v1323, 7
      %v1325 = vsub.s32 %v1322, %v1324
      %v1326 = vrot.slane %v1319, %v1325
      %v1327 = vcombine.low %v1326, %v1326
      %v1328 = vcombine.low %v1264, %v1264
      %v1330 = vunpack.c.l.s4 1983009808
      %v1331 = vunpack.c.0.s8 %v1330
      %v1332 = vlaneseq
      %v1333 = vshrl.u32 %v1332, 7
      %v1334 = vsub.s32 %v1331, %v1333
      %v1335 = vrot.slane %v1328, %v1334
      %v1336 = vcombine.low %v1335, %v1335
      %v1337 = vcombine.low %v1265, %v1265
      %v1339 = vunpack.c.l.s4 1983009808
      %v1340 = vunpack.c.0.s8 %v1339
      %v1341 = vlaneseq
      %v1342 = vshrl.u32 %v1341, 7
      %v1343 = vsub.s32 %v1340, %v1342
      %v1344 = vrot.slane %v1337, %v1343
      %v1345 = vcombine.low %v1344, %v1344
      %1346 = vrot.lane.b32.xlu0 %v1282, 126
      %v1347 = vpop.permute.xlu0 %1346
      %1348 = vrot.lane.b32.xlu0 %v1291, 126
      %v1349 = vpop.permute.xlu0 %1348
      %1350 = vrot.lane.b32.xlu0 %v1300, 126
      %v1351 = vpop.permute.xlu0 %1350
      %1352 = vrot.lane.b32.xlu0 %v1309, 126
      %v1353 = vpop.permute.xlu0 %1352
      %1354 = vrot.lane.b32.xlu0 %v1318, 126
      %v1355 = vpop.permute.xlu0 %1354
      %1356 = vrot.lane.b32.xlu0 %v1327, 126
      %v1357 = vpop.permute.xlu0 %1356
      %1358 = vrot.lane.b32.xlu0 %v1336, 126
      %v1359 = vpop.permute.xlu0 %1358
      %1360 = vrot.lane.b32.xlu0 %v1345, 126
      %v1361 = vpop.permute.xlu0 %1360
      %1370 = vst.msk [vmem:[#allocation2 + $0x10] sm:$0xc0] %vm575, %v1347
      %1371 = vst.msk [vmem:[#allocation2 + $0x78] sm:$0xc0] %vm575, %v1349
      %1372 = vst.msk [vmem:[#allocation2 + $0xe0] sm:$0xc0] %vm575, %v1351
      %1373 = vst.msk [vmem:[#allocation2 + $0x148] sm:$0xc0] %vm575, %v1353
      %1374 = vst.msk [vmem:[#allocation2 + $0x1b0] sm:$0xc0] %vm575, %v1355
      %1375 = vst.msk [vmem:[#allocation2 + $0x218] sm:$0xc0] %vm575, %v1357
      %1376 = vst.msk [vmem:[#allocation2 + $0x280] sm:$0xc0] %vm575, %v1359
      %1377 = vst.msk [vmem:[#allocation2 + $0x2e8] sm:$0xc0] %vm575, %v1361
      %v1378 = vld [vmem:[%s1017] sm:$0x3]
      %v1379 = vld [vmem:[%s1017 + $0x2] sm:$0x3]
      %v1380 = vld [vmem:[%s1017 + $0x4] sm:$0x3]
      %v1381 = vld [vmem:[%s1017 + $0x6] sm:$0x3]
      %v1382 = vld [vmem:[%s1017 + $0x8] sm:$0x3]
      %v1383 = vld [vmem:[%s1017 + $0xa] sm:$0x3]
      %v1384 = vld [vmem:[%s1017 + $0xc] sm:$0x3]
      %v1385 = vld [vmem:[%s1017 + $0xe] sm:$0x3]
      %v1395 = vunpack.c.l.s4 1983009808
      %v1396 = vunpack.c.0.s8 %v1395
      %v1397 = vlaneseq
      %v1398 = vshrl.u32 %v1397, 7
      %v1399 = vsub.s32 %v1396, %v1398
      %v1400 = vrot.slane %v1378, %v1399
      %v1402 = vunpack.c.l.s4 1983009808
      %v1403 = vunpack.c.0.s8 %v1402
      %v1404 = vlaneseq
      %v1405 = vshrl.u32 %v1404, 7
      %v1406 = vsub.s32 %v1403, %v1405
      %v1407 = vrot.slane %v1379, %v1406
      %v1409 = vunpack.c.l.s4 1983009808
      %v1410 = vunpack.c.0.s8 %v1409
      %v1411 = vlaneseq
      %v1412 = vshrl.u32 %v1411, 7
      %v1413 = vsub.s32 %v1410, %v1412
      %v1414 = vrot.slane %v1380, %v1413
      %v1416 = vunpack.c.l.s4 1983009808
      %v1417 = vunpack.c.0.s8 %v1416
      %v1418 = vlaneseq
      %v1419 = vshrl.u32 %v1418, 7
      %v1420 = vsub.s32 %v1417, %v1419
      %v1421 = vrot.slane %v1381, %v1420
      %v1423 = vunpack.c.l.s4 1983009808
      %v1424 = vunpack.c.0.s8 %v1423
      %v1425 = vlaneseq
      %v1426 = vshrl.u32 %v1425, 7
      %v1427 = vsub.s32 %v1424, %v1426
      %v1428 = vrot.slane %v1382, %v1427
      %v1430 = vunpack.c.l.s4 1983009808
      %v1431 = vunpack.c.0.s8 %v1430
      %v1432 = vlaneseq
      %v1433 = vshrl.u32 %v1432, 7
      %v1434 = vsub.s32 %v1431, %v1433
      %v1435 = vrot.slane %v1383, %v1434
      %v1437 = vunpack.c.l.s4 1983009808
      %v1438 = vunpack.c.0.s8 %v1437
      %v1439 = vlaneseq
      %v1440 = vshrl.u32 %v1439, 7
      %v1441 = vsub.s32 %v1438, %v1440
      %v1442 = vrot.slane %v1384, %v1441
      %v1444 = vunpack.c.l.s4 1983009808
      %v1445 = vunpack.c.0.s8 %v1444
      %v1446 = vlaneseq
      %v1447 = vshrl.u32 %v1446, 7
      %v1448 = vsub.s32 %v1445, %v1447
      %v1449 = vrot.slane %v1385, %v1448
      %1450 = vrot.lane.b32.xlu0 %v1400, 126
      %v1451 = vpop.permute.xlu0 %1450
      %1452 = vrot.lane.b32.xlu0 %v1407, 126
      %v1453 = vpop.permute.xlu0 %1452
      %1454 = vrot.lane.b32.xlu0 %v1414, 126
      %v1455 = vpop.permute.xlu0 %1454
      %1456 = vrot.lane.b32.xlu0 %v1421, 126
      %v1457 = vpop.permute.xlu0 %1456
      %1458 = vrot.lane.b32.xlu0 %v1428, 126
      %v1459 = vpop.permute.xlu0 %1458
      %1460 = vrot.lane.b32.xlu0 %v1435, 126
      %v1461 = vpop.permute.xlu0 %1460
      %1462 = vrot.lane.b32.xlu0 %v1442, 126
      %v1463 = vpop.permute.xlu0 %1462
      %1464 = vrot.lane.b32.xlu0 %v1449, 126
      %v1465 = vpop.permute.xlu0 %1464
      %1474 = vst.msk [vmem:[#allocation2 + $0x18] sm:$0x3] %vm243, %v1451
      %1475 = vst.msk [vmem:[#allocation2 + $0x80] sm:$0x3] %vm243, %v1453
      %1476 = vst.msk [vmem:[#allocation2 + $0xe8] sm:$0x3] %vm243, %v1455
      %1477 = vst.msk [vmem:[#allocation2 + $0x150] sm:$0x3] %vm243, %v1457
      %1478 = vst.msk [vmem:[#allocation2 + $0x1b8] sm:$0x3] %vm243, %v1459
      %1479 = vst.msk [vmem:[#allocation2 + $0x220] sm:$0x3] %vm243, %v1461
      %1480 = vst.msk [vmem:[#allocation2 + $0x288] sm:$0x3] %vm243, %v1463
      %1481 = vst.msk [vmem:[#allocation2 + $0x2f0] sm:$0x3] %vm243, %v1465
      %v1482 = vld [vmem:[%s912] sm:$0x3]
      %v1483 = vld [vmem:[%s912 + $0x2] sm:$0x3]
      %v1484 = vld [vmem:[%s912 + $0x4] sm:$0x3]
      %v1485 = vld [vmem:[%s912 + $0x6] sm:$0x3]
      %v1486 = vld [vmem:[%s912 + $0x8] sm:$0x3]
      %v1487 = vld [vmem:[%s912 + $0xa] sm:$0x3]
      %v1488 = vld [vmem:[%s912 + $0xc] sm:$0x3]
      %v1489 = vld [vmem:[%s912 + $0xe] sm:$0x3]
      %v1498 = vcombine.low %v1482, %v1482
      %v1500 = vunpack.c.l.s4 1983009808
      %v1501 = vunpack.c.0.s8 %v1500
      %v1502 = vlaneseq
      %v1503 = vshrl.u32 %v1502, 7
      %v1504 = vsub.s32 %v1501, %v1503
      %v1505 = vrot.slane %v1498, %v1504
      %v1506 = vcombine.low %v1483, %v1483
      %v1508 = vunpack.c.l.s4 1983009808
      %v1509 = vunpack.c.0.s8 %v1508
      %v1510 = vlaneseq
      %v1511 = vshrl.u32 %v1510, 7
      %v1512 = vsub.s32 %v1509, %v1511
      %v1513 = vrot.slane %v1506, %v1512
      %v1514 = vcombine.low %v1484, %v1484
      %v1516 = vunpack.c.l.s4 1983009808
      %v1517 = vunpack.c.0.s8 %v1516
      %v1518 = vlaneseq
      %v1519 = vshrl.u32 %v1518, 7
      %v1520 = vsub.s32 %v1517, %v1519
      %v1521 = vrot.slane %v1514, %v1520
      %v1522 = vcombine.low %v1485, %v1485
      %v1524 = vunpack.c.l.s4 1983009808
      %v1525 = vunpack.c.0.s8 %v1524
      %v1526 = vlaneseq
      %v1527 = vshrl.u32 %v1526, 7
      %v1528 = vsub.s32 %v1525, %v1527
      %v1529 = vrot.slane %v1522, %v1528
      %v1530 = vcombine.low %v1486, %v1486
      %v1532 = vunpack.c.l.s4 1983009808
      %v1533 = vunpack.c.0.s8 %v1532
      %v1534 = vlaneseq
      %v1535 = vshrl.u32 %v1534, 7
      %v1536 = vsub.s32 %v1533, %v1535
      %v1537 = vrot.slane %v1530, %v1536
      %v1538 = vcombine.low %v1487, %v1487
      %v1540 = vunpack.c.l.s4 1983009808
      %v1541 = vunpack.c.0.s8 %v1540
      %v1542 = vlaneseq
      %v1543 = vshrl.u32 %v1542, 7
      %v1544 = vsub.s32 %v1541, %v1543
      %v1545 = vrot.slane %v1538, %v1544
      %v1546 = vcombine.low %v1488, %v1488
      %v1548 = vunpack.c.l.s4 1983009808
      %v1549 = vunpack.c.0.s8 %v1548
      %v1550 = vlaneseq
      %v1551 = vshrl.u32 %v1550, 7
      %v1552 = vsub.s32 %v1549, %v1551
      %v1553 = vrot.slane %v1546, %v1552
      %v1554 = vcombine.low %v1489, %v1489
      %v1556 = vunpack.c.l.s4 1983009808
      %v1557 = vunpack.c.0.s8 %v1556
      %v1558 = vlaneseq
      %v1559 = vshrl.u32 %v1558, 7
      %v1560 = vsub.s32 %v1557, %v1559
      %v1561 = vrot.slane %v1554, %v1560
      %1562 = vrot.lane.b32.xlu0 %v1505, 125
      %v1563 = vpop.permute.xlu0 %1562
      %1564 = vrot.lane.b32.xlu0 %v1513, 125
      %v1565 = vpop.permute.xlu0 %1564
      %1566 = vrot.lane.b32.xlu0 %v1521, 125
      %v1567 = vpop.permute.xlu0 %1566
      %1568 = vrot.lane.b32.xlu0 %v1529, 125
      %v1569 = vpop.permute.xlu0 %1568
      %1570 = vrot.lane.b32.xlu0 %v1537, 125
      %v1571 = vpop.permute.xlu0 %1570
      %1572 = vrot.lane.b32.xlu0 %v1545, 125
      %v1573 = vpop.permute.xlu0 %1572
      %1574 = vrot.lane.b32.xlu0 %v1553, 125
      %v1575 = vpop.permute.xlu0 %1574
      %1576 = vrot.lane.b32.xlu0 %v1561, 125
      %v1577 = vpop.permute.xlu0 %1576
      %1586 = vst.msk [vmem:[#allocation2 + $0x18] sm:$0xc] %vm341, %v1563
      %1587 = vst.msk [vmem:[#allocation2 + $0x80] sm:$0xc] %vm341, %v1565
      %1588 = vst.msk [vmem:[#allocation2 + $0xe8] sm:$0xc] %vm341, %v1567
      %1589 = vst.msk [vmem:[#allocation2 + $0x150] sm:$0xc] %vm341, %v1569
      %1590 = vst.msk [vmem:[#allocation2 + $0x1b8] sm:$0xc] %vm341, %v1571
      %1591 = vst.msk [vmem:[#allocation2 + $0x220] sm:$0xc] %vm341, %v1573
      %1592 = vst.msk [vmem:[#allocation2 + $0x288] sm:$0xc] %vm341, %v1575
      %1593 = vst.msk [vmem:[#allocation2 + $0x2f0] sm:$0xc] %vm341, %v1577
      %s1594 = scalar_lea.vmem %s219, 2
      %v1595 = vld [vmem:[%s1594] sm:$0x3]
      %v1596 = vld [vmem:[%s1594 + $0x2] sm:$0x3]
      %v1597 = vld [vmem:[%s1594 + $0x4] sm:$0x3]
      %v1598 = vld [vmem:[%s1594 + $0x6] sm:$0x3]
      %v1599 = vld [vmem:[%s1594 + $0x8] sm:$0x3]
      %v1600 = vld [vmem:[%s1594 + $0xa] sm:$0x3]
      %v1601 = vld [vmem:[%s1594 + $0xc] sm:$0x3]
      %v1602 = vld [vmem:[%s1594 + $0xe] sm:$0x3]
      %v1612 = vunpack.c.l.s4 1983009808
      %v1613 = vunpack.c.0.s8 %v1612
      %v1614 = vlaneseq
      %v1615 = vshrl.u32 %v1614, 7
      %v1616 = vsub.s32 %v1613, %v1615
      %v1617 = vrot.slane %v1595, %v1616
      %v1618 = vcombine.low %v1617, %v1617
      %v1620 = vunpack.c.l.s4 1983009808
      %v1621 = vunpack.c.0.s8 %v1620
      %v1622 = vlaneseq
      %v1623 = vshrl.u32 %v1622, 7
      %v1624 = vsub.s32 %v1621, %v1623
      %v1625 = vrot.slane %v1596, %v1624
      %v1626 = vcombine.low %v1625, %v1625
      %v1628 = vunpack.c.l.s4 1983009808
      %v1629 = vunpack.c.0.s8 %v1628
      %v1630 = vlaneseq
      %v1631 = vshrl.u32 %v1630, 7
      %v1632 = vsub.s32 %v1629, %v1631
      %v1633 = vrot.slane %v1597, %v1632
      %v1634 = vcombine.low %v1633, %v1633
      %v1636 = vunpack.c.l.s4 1983009808
      %v1637 = vunpack.c.0.s8 %v1636
      %v1638 = vlaneseq
      %v1639 = vshrl.u32 %v1638, 7
      %v1640 = vsub.s32 %v1637, %v1639
      %v1641 = vrot.slane %v1598, %v1640
      %v1642 = vcombine.low %v1641, %v1641
      %v1644 = vunpack.c.l.s4 1983009808
      %v1645 = vunpack.c.0.s8 %v1644
      %v1646 = vlaneseq
      %v1647 = vshrl.u32 %v1646, 7
      %v1648 = vsub.s32 %v1645, %v1647
      %v1649 = vrot.slane %v1599, %v1648
      %v1650 = vcombine.low %v1649, %v1649
      %v1652 = vunpack.c.l.s4 1983009808
      %v1653 = vunpack.c.0.s8 %v1652
      %v1654 = vlaneseq
      %v1655 = vshrl.u32 %v1654, 7
      %v1656 = vsub.s32 %v1653, %v1655
      %v1657 = vrot.slane %v1600, %v1656
      %v1658 = vcombine.low %v1657, %v1657
      %v1660 = vunpack.c.l.s4 1983009808
      %v1661 = vunpack.c.0.s8 %v1660
      %v1662 = vlaneseq
      %v1663 = vshrl.u32 %v1662, 7
      %v1664 = vsub.s32 %v1661, %v1663
      %v1665 = vrot.slane %v1601, %v1664
      %v1666 = vcombine.low %v1665, %v1665
      %v1668 = vunpack.c.l.s4 1983009808
      %v1669 = vunpack.c.0.s8 %v1668
      %v1670 = vlaneseq
      %v1671 = vshrl.u32 %v1670, 7
      %v1672 = vsub.s32 %v1669, %v1671
      %v1673 = vrot.slane %v1602, %v1672
      %v1674 = vcombine.low %v1673, %v1673
      %1683 = vst.msk [vmem:[#allocation2 + $0x18] sm:$0x30] %vm454, %v1618
      %1684 = vst.msk [vmem:[#allocation2 + $0x80] sm:$0x30] %vm454, %v1626
      %1685 = vst.msk [vmem:[#allocation2 + $0xe8] sm:$0x30] %vm454, %v1634
      %1686 = vst.msk [vmem:[#allocation2 + $0x150] sm:$0x30] %vm454, %v1642
      %1687 = vst.msk [vmem:[#allocation2 + $0x1b8] sm:$0x30] %vm454, %v1650
      %1688 = vst.msk [vmem:[#allocation2 + $0x220] sm:$0x30] %vm454, %v1658
      %1689 = vst.msk [vmem:[#allocation2 + $0x288] sm:$0x30] %vm454, %v1666
      %1690 = vst.msk [vmem:[#allocation2 + $0x2f0] sm:$0x30] %vm454, %v1674
      %s1691 = scalar_lea.vmem %s219, 24
      %v1692 = vld [vmem:[%s1691] sm:$0x3]
      %v1693 = vld [vmem:[%s1691 + $0x2] sm:$0x3]
      %v1694 = vld [vmem:[%s1691 + $0x4] sm:$0x3]
      %v1695 = vld [vmem:[%s1691 + $0x6] sm:$0x3]
      %v1696 = vld [vmem:[%s1691 + $0x8] sm:$0x3]
      %v1697 = vld [vmem:[%s1691 + $0xa] sm:$0x3]
      %v1698 = vld [vmem:[%s1691 + $0xc] sm:$0x3]
      %v1699 = vld [vmem:[%s1691 + $0xe] sm:$0x3]
      %v1708 = vcombine.low %v1692, %v1692
      %v1710 = vunpack.c.l.s4 1983009808
      %v1711 = vunpack.c.0.s8 %v1710
      %v1712 = vlaneseq
      %v1713 = vshrl.u32 %v1712, 7
      %v1714 = vsub.s32 %v1711, %v1713
      %v1715 = vrot.slane %v1708, %v1714
      %v1716 = vcombine.low %v1715, %v1715
      %v1717 = vcombine.low %v1693, %v1693
      %v1719 = vunpack.c.l.s4 1983009808
      %v1720 = vunpack.c.0.s8 %v1719
      %v1721 = vlaneseq
      %v1722 = vshrl.u32 %v1721, 7
      %v1723 = vsub.s32 %v1720, %v1722
      %v1724 = vrot.slane %v1717, %v1723
      %v1725 = vcombine.low %v1724, %v1724
      %v1726 = vcombine.low %v1694, %v1694
      %v1728 = vunpack.c.l.s4 1983009808
      %v1729 = vunpack.c.0.s8 %v1728
      %v1730 = vlaneseq
      %v1731 = vshrl.u32 %v1730, 7
      %v1732 = vsub.s32 %v1729, %v1731
      %v1733 = vrot.slane %v1726, %v1732
      %v1734 = vcombine.low %v1733, %v1733
      %v1735 = vcombine.low %v1695, %v1695
      %v1737 = vunpack.c.l.s4 1983009808
      %v1738 = vunpack.c.0.s8 %v1737
      %v1739 = vlaneseq
      %v1740 = vshrl.u32 %v1739, 7
      %v1741 = vsub.s32 %v1738, %v1740
      %v1742 = vrot.slane %v1735, %v1741
      %v1743 = vcombine.low %v1742, %v1742
      %v1744 = vcombine.low %v1696, %v1696
      %v1746 = vunpack.c.l.s4 1983009808
      %v1747 = vunpack.c.0.s8 %v1746
      %v1748 = vlaneseq
      %v1749 = vshrl.u32 %v1748, 7
      %v1750 = vsub.s32 %v1747, %v1749
      %v1751 = vrot.slane %v1744, %v1750
      %v1752 = vcombine.low %v1751, %v1751
      %v1753 = vcombine.low %v1697, %v1697
      %v1755 = vunpack.c.l.s4 1983009808
      %v1756 = vunpack.c.0.s8 %v1755
      %v1757 = vlaneseq
      %v1758 = vshrl.u32 %v1757, 7
      %v1759 = vsub.s32 %v1756, %v1758
      %v1760 = vrot.slane %v1753, %v1759
      %v1761 = vcombine.low %v1760, %v1760
      %v1762 = vcombine.low %v1698, %v1698
      %v1764 = vunpack.c.l.s4 1983009808
      %v1765 = vunpack.c.0.s8 %v1764
      %v1766 = vlaneseq
      %v1767 = vshrl.u32 %v1766, 7
      %v1768 = vsub.s32 %v1765, %v1767
      %v1769 = vrot.slane %v1762, %v1768
      %v1770 = vcombine.low %v1769, %v1769
      %v1771 = vcombine.low %v1699, %v1699
      %v1773 = vunpack.c.l.s4 1983009808
      %v1774 = vunpack.c.0.s8 %v1773
      %v1775 = vlaneseq
      %v1776 = vshrl.u32 %v1775, 7
      %v1777 = vsub.s32 %v1774, %v1776
      %v1778 = vrot.slane %v1771, %v1777
      %v1779 = vcombine.low %v1778, %v1778
      %1788 = vst.msk [vmem:[#allocation2 + $0x18] sm:$0xc0] %vm575, %v1716
      %1789 = vst.msk [vmem:[#allocation2 + $0x80] sm:$0xc0] %vm575, %v1725
      %1790 = vst.msk [vmem:[#allocation2 + $0xe8] sm:$0xc0] %vm575, %v1734
      %1791 = vst.msk [vmem:[#allocation2 + $0x150] sm:$0xc0] %vm575, %v1743
      %1792 = vst.msk [vmem:[#allocation2 + $0x1b8] sm:$0xc0] %vm575, %v1752
      %1793 = vst.msk [vmem:[#allocation2 + $0x220] sm:$0xc0] %vm575, %v1761
      %1794 = vst.msk [vmem:[#allocation2 + $0x288] sm:$0xc0] %vm575, %v1770
      %1795 = vst.msk [vmem:[#allocation2 + $0x2f0] sm:$0xc0] %vm575, %v1779
      %v1796 = vld [vmem:[%s1594] sm:$0x3]
      %v1797 = vld [vmem:[%s1594 + $0x2] sm:$0x3]
      %v1798 = vld [vmem:[%s1594 + $0x4] sm:$0x3]
      %v1799 = vld [vmem:[%s1594 + $0x6] sm:$0x3]
      %v1800 = vld [vmem:[%s1594 + $0x8] sm:$0x3]
      %v1801 = vld [vmem:[%s1594 + $0xa] sm:$0x3]
      %v1802 = vld [vmem:[%s1594 + $0xc] sm:$0x3]
      %v1803 = vld [vmem:[%s1594 + $0xe] sm:$0x3]
      %v1813 = vunpack.c.l.s4 1983009808
      %v1814 = vunpack.c.0.s8 %v1813
      %v1815 = vlaneseq
      %v1816 = vshrl.u32 %v1815, 7
      %v1817 = vsub.s32 %v1814, %v1816
      %v1818 = vrot.slane %v1796, %v1817
      %v1820 = vunpack.c.l.s4 1983009808
      %v1821 = vunpack.c.0.s8 %v1820
      %v1822 = vlaneseq
      %v1823 = vshrl.u32 %v1822, 7
      %v1824 = vsub.s32 %v1821, %v1823
      %v1825 = vrot.slane %v1797, %v1824
      %v1827 = vunpack.c.l.s4 1983009808
      %v1828 = vunpack.c.0.s8 %v1827
      %v1829 = vlaneseq
      %v1830 = vshrl.u32 %v1829, 7
      %v1831 = vsub.s32 %v1828, %v1830
      %v1832 = vrot.slane %v1798, %v1831
      %v1834 = vunpack.c.l.s4 1983009808
      %v1835 = vunpack.c.0.s8 %v1834
      %v1836 = vlaneseq
      %v1837 = vshrl.u32 %v1836, 7
      %v1838 = vsub.s32 %v1835, %v1837
      %v1839 = vrot.slane %v1799, %v1838
      %v1841 = vunpack.c.l.s4 1983009808
      %v1842 = vunpack.c.0.s8 %v1841
      %v1843 = vlaneseq
      %v1844 = vshrl.u32 %v1843, 7
      %v1845 = vsub.s32 %v1842, %v1844
      %v1846 = vrot.slane %v1800, %v1845
      %v1848 = vunpack.c.l.s4 1983009808
      %v1849 = vunpack.c.0.s8 %v1848
      %v1850 = vlaneseq
      %v1851 = vshrl.u32 %v1850, 7
      %v1852 = vsub.s32 %v1849, %v1851
      %v1853 = vrot.slane %v1801, %v1852
      %v1855 = vunpack.c.l.s4 1983009808
      %v1856 = vunpack.c.0.s8 %v1855
      %v1857 = vlaneseq
      %v1858 = vshrl.u32 %v1857, 7
      %v1859 = vsub.s32 %v1856, %v1858
      %v1860 = vrot.slane %v1802, %v1859
      %v1862 = vunpack.c.l.s4 1983009808
      %v1863 = vunpack.c.0.s8 %v1862
      %v1864 = vlaneseq
      %v1865 = vshrl.u32 %v1864, 7
      %v1866 = vsub.s32 %v1863, %v1865
      %v1867 = vrot.slane %v1803, %v1866
      %1868 = vrot.lane.b32.xlu0 %v1818, 127
      %v1869 = vpop.permute.xlu0 %1868
      %1870 = vrot.lane.b32.xlu0 %v1825, 127
      %v1871 = vpop.permute.xlu0 %1870
      %1872 = vrot.lane.b32.xlu0 %v1832, 127
      %v1873 = vpop.permute.xlu0 %1872
      %1874 = vrot.lane.b32.xlu0 %v1839, 127
      %v1875 = vpop.permute.xlu0 %1874
      %1876 = vrot.lane.b32.xlu0 %v1846, 127
      %v1877 = vpop.permute.xlu0 %1876
      %1878 = vrot.lane.b32.xlu0 %v1853, 127
      %v1879 = vpop.permute.xlu0 %1878
      %1880 = vrot.lane.b32.xlu0 %v1860, 127
      %v1881 = vpop.permute.xlu0 %1880
      %1882 = vrot.lane.b32.xlu0 %v1867, 127
      %v1883 = vpop.permute.xlu0 %1882
      %1892 = vst.msk [vmem:[#allocation2 + $0x20] sm:$0x3] %vm243, %v1869
      %1893 = vst.msk [vmem:[#allocation2 + $0x88] sm:$0x3] %vm243, %v1871
      %1894 = vst.msk [vmem:[#allocation2 + $0xf0] sm:$0x3] %vm243, %v1873
      %1895 = vst.msk [vmem:[#allocation2 + $0x158] sm:$0x3] %vm243, %v1875
      %1896 = vst.msk [vmem:[#allocation2 + $0x1c0] sm:$0x3] %vm243, %v1877
      %1897 = vst.msk [vmem:[#allocation2 + $0x228] sm:$0x3] %vm243, %v1879
      %1898 = vst.msk [vmem:[#allocation2 + $0x290] sm:$0x3] %vm243, %v1881
      %1899 = vst.msk [vmem:[#allocation2 + $0x2f8] sm:$0x3] %vm243, %v1883
      %v1900 = vld [vmem:[%s1691] sm:$0x3]
      %v1901 = vld [vmem:[%s1691 + $0x2] sm:$0x3]
      %v1902 = vld [vmem:[%s1691 + $0x4] sm:$0x3]
      %v1903 = vld [vmem:[%s1691 + $0x6] sm:$0x3]
      %v1904 = vld [vmem:[%s1691 + $0x8] sm:$0x3]
      %v1905 = vld [vmem:[%s1691 + $0xa] sm:$0x3]
      %v1906 = vld [vmem:[%s1691 + $0xc] sm:$0x3]
      %v1907 = vld [vmem:[%s1691 + $0xe] sm:$0x3]
      %v1916 = vcombine.low %v1900, %v1900
      %v1918 = vunpack.c.l.s4 1983009808
      %v1919 = vunpack.c.0.s8 %v1918
      %v1920 = vlaneseq
      %v1921 = vshrl.u32 %v1920, 7
      %v1922 = vsub.s32 %v1919, %v1921
      %v1923 = vrot.slane %v1916, %v1922
      %v1924 = vcombine.low %v1901, %v1901
      %v1926 = vunpack.c.l.s4 1983009808
      %v1927 = vunpack.c.0.s8 %v1926
      %v1928 = vlaneseq
      %v1929 = vshrl.u32 %v1928, 7
      %v1930 = vsub.s32 %v1927, %v1929
      %v1931 = vrot.slane %v1924, %v1930
      %v1932 = vcombine.low %v1902, %v1902
      %v1934 = vunpack.c.l.s4 1983009808
      %v1935 = vunpack.c.0.s8 %v1934
      %v1936 = vlaneseq
      %v1937 = vshrl.u32 %v1936, 7
      %v1938 = vsub.s32 %v1935, %v1937
      %v1939 = vrot.slane %v1932, %v1938
      %v1940 = vcombine.low %v1903, %v1903
      %v1942 = vunpack.c.l.s4 1983009808
      %v1943 = vunpack.c.0.s8 %v1942
      %v1944 = vlaneseq
      %v1945 = vshrl.u32 %v1944, 7
      %v1946 = vsub.s32 %v1943, %v1945
      %v1947 = vrot.slane %v1940, %v1946
      %v1948 = vcombine.low %v1904, %v1904
      %v1950 = vunpack.c.l.s4 1983009808
      %v1951 = vunpack.c.0.s8 %v1950
      %v1952 = vlaneseq
      %v1953 = vshrl.u32 %v1952, 7
      %v1954 = vsub.s32 %v1951, %v1953
      %v1955 = vrot.slane %v1948, %v1954
      %v1956 = vcombine.low %v1905, %v1905
      %v1958 = vunpack.c.l.s4 1983009808
      %v1959 = vunpack.c.0.s8 %v1958
      %v1960 = vlaneseq
      %v1961 = vshrl.u32 %v1960, 7
      %v1962 = vsub.s32 %v1959, %v1961
      %v1963 = vrot.slane %v1956, %v1962
      %v1964 = vcombine.low %v1906, %v1906
      %v1966 = vunpack.c.l.s4 1983009808
      %v1967 = vunpack.c.0.s8 %v1966
      %v1968 = vlaneseq
      %v1969 = vshrl.u32 %v1968, 7
      %v1970 = vsub.s32 %v1967, %v1969
      %v1971 = vrot.slane %v1964, %v1970
      %v1972 = vcombine.low %v1907, %v1907
      %v1974 = vunpack.c.l.s4 1983009808
      %v1975 = vunpack.c.0.s8 %v1974
      %v1976 = vlaneseq
      %v1977 = vshrl.u32 %v1976, 7
      %v1978 = vsub.s32 %v1975, %v1977
      %v1979 = vrot.slane %v1972, %v1978
      %1980 = vrot.lane.b32.xlu0 %v1923, 127
      %v1981 = vpop.permute.xlu0 %1980
      %1982 = vrot.lane.b32.xlu0 %v1931, 127
      %v1983 = vpop.permute.xlu0 %1982
      %1984 = vrot.lane.b32.xlu0 %v1939, 127
      %v1985 = vpop.permute.xlu0 %1984
      %1986 = vrot.lane.b32.xlu0 %v1947, 127
      %v1987 = vpop.permute.xlu0 %1986
      %1988 = vrot.lane.b32.xlu0 %v1955, 127
      %v1989 = vpop.permute.xlu0 %1988
      %1990 = vrot.lane.b32.xlu0 %v1963, 127
      %v1991 = vpop.permute.xlu0 %1990
      %1992 = vrot.lane.b32.xlu0 %v1971, 127
      %v1993 = vpop.permute.xlu0 %1992
      %1994 = vrot.lane.b32.xlu0 %v1979, 127
      %v1995 = vpop.permute.xlu0 %1994
      %2004 = vst.msk [vmem:[#allocation2 + $0x20] sm:$0xc] %vm341, %v1981
      %2005 = vst.msk [vmem:[#allocation2 + $0x88] sm:$0xc] %vm341, %v1983
      %2006 = vst.msk [vmem:[#allocation2 + $0xf0] sm:$0xc] %vm341, %v1985
      %2007 = vst.msk [vmem:[#allocation2 + $0x158] sm:$0xc] %vm341, %v1987
      %2008 = vst.msk [vmem:[#allocation2 + $0x1c0] sm:$0xc] %vm341, %v1989
      %2009 = vst.msk [vmem:[#allocation2 + $0x228] sm:$0xc] %vm341, %v1991
      %2010 = vst.msk [vmem:[#allocation2 + $0x290] sm:$0xc] %vm341, %v1993
      %2011 = vst.msk [vmem:[#allocation2 + $0x2f8] sm:$0xc] %vm341, %v1995
      %v2012 = vld [vmem:[%s1594] sm:$0x3]
      %v2013 = vld [vmem:[%s1594 + $0x2] sm:$0x3]
      %v2014 = vld [vmem:[%s1594 + $0x4] sm:$0x3]
      %v2015 = vld [vmem:[%s1594 + $0x6] sm:$0x3]
      %v2016 = vld [vmem:[%s1594 + $0x8] sm:$0x3]
      %v2017 = vld [vmem:[%s1594 + $0xa] sm:$0x3]
      %v2018 = vld [vmem:[%s1594 + $0xc] sm:$0x3]
      %v2019 = vld [vmem:[%s1594 + $0xe] sm:$0x3]
      %v2029 = vunpack.c.l.s4 1983009808
      %v2030 = vunpack.c.0.s8 %v2029
      %v2031 = vlaneseq
      %v2032 = vshrl.u32 %v2031, 7
      %v2033 = vsub.s32 %v2030, %v2032
      %v2034 = vrot.slane %v2012, %v2033
      %v2035 = vcombine.low %v2034, %v2034
      %v2037 = vunpack.c.l.s4 1983009808
      %v2038 = vunpack.c.0.s8 %v2037
      %v2039 = vlaneseq
      %v2040 = vshrl.u32 %v2039, 7
      %v2041 = vsub.s32 %v2038, %v2040
      %v2042 = vrot.slane %v2013, %v2041
      %v2043 = vcombine.low %v2042, %v2042
      %v2045 = vunpack.c.l.s4 1983009808
      %v2046 = vunpack.c.0.s8 %v2045
      %v2047 = vlaneseq
      %v2048 = vshrl.u32 %v2047, 7
      %v2049 = vsub.s32 %v2046, %v2048
      %v2050 = vrot.slane %v2014, %v2049
      %v2051 = vcombine.low %v2050, %v2050
      %v2053 = vunpack.c.l.s4 1983009808
      %v2054 = vunpack.c.0.s8 %v2053
      %v2055 = vlaneseq
      %v2056 = vshrl.u32 %v2055, 7
      %v2057 = vsub.s32 %v2054, %v2056
      %v2058 = vrot.slane %v2015, %v2057
      %v2059 = vcombine.low %v2058, %v2058
      %v2061 = vunpack.c.l.s4 1983009808
      %v2062 = vunpack.c.0.s8 %v2061
      %v2063 = vlaneseq
      %v2064 = vshrl.u32 %v2063, 7
      %v2065 = vsub.s32 %v2062, %v2064
      %v2066 = vrot.slane %v2016, %v2065
      %v2067 = vcombine.low %v2066, %v2066
      %v2069 = vunpack.c.l.s4 1983009808
      %v2070 = vunpack.c.0.s8 %v2069
      %v2071 = vlaneseq
      %v2072 = vshrl.u32 %v2071, 7
      %v2073 = vsub.s32 %v2070, %v2072
      %v2074 = vrot.slane %v2017, %v2073
      %v2075 = vcombine.low %v2074, %v2074
      %v2077 = vunpack.c.l.s4 1983009808
      %v2078 = vunpack.c.0.s8 %v2077
      %v2079 = vlaneseq
      %v2080 = vshrl.u32 %v2079, 7
      %v2081 = vsub.s32 %v2078, %v2080
      %v2082 = vrot.slane %v2018, %v2081
      %v2083 = vcombine.low %v2082, %v2082
      %v2085 = vunpack.c.l.s4 1983009808
      %v2086 = vunpack.c.0.s8 %v2085
      %v2087 = vlaneseq
      %v2088 = vshrl.u32 %v2087, 7
      %v2089 = vsub.s32 %v2086, %v2088
      %v2090 = vrot.slane %v2019, %v2089
      %v2091 = vcombine.low %v2090, %v2090
      %2092 = vrot.lane.b32.xlu0 %v2035, 126
      %v2093 = vpop.permute.xlu0 %2092
      %2094 = vrot.lane.b32.xlu0 %v2043, 126
      %v2095 = vpop.permute.xlu0 %2094
      %2096 = vrot.lane.b32.xlu0 %v2051, 126
      %v2097 = vpop.permute.xlu0 %2096
      %2098 = vrot.lane.b32.xlu0 %v2059, 126
      %v2099 = vpop.permute.xlu0 %2098
      %2100 = vrot.lane.b32.xlu0 %v2067, 126
      %v2101 = vpop.permute.xlu0 %2100
      %2102 = vrot.lane.b32.xlu0 %v2075, 126
      %v2103 = vpop.permute.xlu0 %2102
      %2104 = vrot.lane.b32.xlu0 %v2083, 126
      %v2105 = vpop.permute.xlu0 %2104
      %2106 = vrot.lane.b32.xlu0 %v2091, 126
      %v2107 = vpop.permute.xlu0 %2106
      %2116 = vst.msk [vmem:[#allocation2 + $0x20] sm:$0x30] %vm454, %v2093
      %2117 = vst.msk [vmem:[#allocation2 + $0x88] sm:$0x30] %vm454, %v2095
      %2118 = vst.msk [vmem:[#allocation2 + $0xf0] sm:$0x30] %vm454, %v2097
      %2119 = vst.msk [vmem:[#allocation2 + $0x158] sm:$0x30] %vm454, %v2099
      %2120 = vst.msk [vmem:[#allocation2 + $0x1c0] sm:$0x30] %vm454, %v2101
      %2121 = vst.msk [vmem:[#allocation2 + $0x228] sm:$0x30] %vm454, %v2103
      %2122 = vst.msk [vmem:[#allocation2 + $0x290] sm:$0x30] %vm454, %v2105
      %2123 = vst.msk [vmem:[#allocation2 + $0x2f8] sm:$0x30] %vm454, %v2107
      %v2124 = vld [vmem:[%s1691] sm:$0x3]
      %v2125 = vld [vmem:[%s1691 + $0x2] sm:$0x3]
      %v2126 = vld [vmem:[%s1691 + $0x4] sm:$0x3]
      %v2127 = vld [vmem:[%s1691 + $0x6] sm:$0x3]
      %v2128 = vld [vmem:[%s1691 + $0x8] sm:$0x3]
      %v2129 = vld [vmem:[%s1691 + $0xa] sm:$0x3]
      %v2130 = vld [vmem:[%s1691 + $0xc] sm:$0x3]
      %v2131 = vld [vmem:[%s1691 + $0xe] sm:$0x3]
      %v2140 = vcombine.low %v2124, %v2124
      %v2142 = vunpack.c.l.s4 1983009808
      %v2143 = vunpack.c.0.s8 %v2142
      %v2144 = vlaneseq
      %v2145 = vshrl.u32 %v2144, 7
      %v2146 = vsub.s32 %v2143, %v2145
      %v2147 = vrot.slane %v2140, %v2146
      %v2148 = vcombine.low %v2147, %v2147
      %v2149 = vcombine.low %v2125, %v2125
      %v2151 = vunpack.c.l.s4 1983009808
      %v2152 = vunpack.c.0.s8 %v2151
      %v2153 = vlaneseq
      %v2154 = vshrl.u32 %v2153, 7
      %v2155 = vsub.s32 %v2152, %v2154
      %v2156 = vrot.slane %v2149, %v2155
      %v2157 = vcombine.low %v2156, %v2156
      %v2158 = vcombine.low %v2126, %v2126
      %v2160 = vunpack.c.l.s4 1983009808
      %v2161 = vunpack.c.0.s8 %v2160
      %v2162 = vlaneseq
      %v2163 = vshrl.u32 %v2162, 7
      %v2164 = vsub.s32 %v2161, %v2163
      %v2165 = vrot.slane %v2158, %v2164
      %v2166 = vcombine.low %v2165, %v2165
      %v2167 = vcombine.low %v2127, %v2127
      %v2169 = vunpack.c.l.s4 1983009808
      %v2170 = vunpack.c.0.s8 %v2169
      %v2171 = vlaneseq
      %v2172 = vshrl.u32 %v2171, 7
      %v2173 = vsub.s32 %v2170, %v2172
      %v2174 = vrot.slane %v2167, %v2173
      %v2175 = vcombine.low %v2174, %v2174
      %v2176 = vcombine.low %v2128, %v2128
      %v2178 = vunpack.c.l.s4 1983009808
      %v2179 = vunpack.c.0.s8 %v2178
      %v2180 = vlaneseq
      %v2181 = vshrl.u32 %v2180, 7
      %v2182 = vsub.s32 %v2179, %v2181
      %v2183 = vrot.slane %v2176, %v2182
      %v2184 = vcombine.low %v2183, %v2183
      %v2185 = vcombine.low %v2129, %v2129
      %v2187 = vunpack.c.l.s4 1983009808
      %v2188 = vunpack.c.0.s8 %v2187
      %v2189 = vlaneseq
      %v2190 = vshrl.u32 %v2189, 7
      %v2191 = vsub.s32 %v2188, %v2190
      %v2192 = vrot.slane %v2185, %v2191
      %v2193 = vcombine.low %v2192, %v2192
      %v2194 = vcombine.low %v2130, %v2130
      %v2196 = vunpack.c.l.s4 1983009808
      %v2197 = vunpack.c.0.s8 %v2196
      %v2198 = vlaneseq
      %v2199 = vshrl.u32 %v2198, 7
      %v2200 = vsub.s32 %v2197, %v2199
      %v2201 = vrot.slane %v2194, %v2200
      %v2202 = vcombine.low %v2201, %v2201
      %v2203 = vcombine.low %v2131, %v2131
      %v2205 = vunpack.c.l.s4 1983009808
      %v2206 = vunpack.c.0.s8 %v2205
      %v2207 = vlaneseq
      %v2208 = vshrl.u32 %v2207, 7
      %v2209 = vsub.s32 %v2206, %v2208
      %v2210 = vrot.slane %v2203, %v2209
      %v2211 = vcombine.low %v2210, %v2210
      %2212 = vrot.lane.b32.xlu0 %v2148, 126
      %v2213 = vpop.permute.xlu0 %2212
      %2214 = vrot.lane.b32.xlu0 %v2157, 126
      %v2215 = vpop.permute.xlu0 %2214
      %2216 = vrot.lane.b32.xlu0 %v2166, 126
      %v2217 = vpop.permute.xlu0 %2216
      %2218 = vrot.lane.b32.xlu0 %v2175, 126
      %v2219 = vpop.permute.xlu0 %2218
      %2220 = vrot.lane.b32.xlu0 %v2184, 126
      %v2221 = vpop.permute.xlu0 %2220
      %2222 = vrot.lane.b32.xlu0 %v2193, 126
      %v2223 = vpop.permute.xlu0 %2222
      %2224 = vrot.lane.b32.xlu0 %v2202, 126
      %v2225 = vpop.permute.xlu0 %2224
      %2226 = vrot.lane.b32.xlu0 %v2211, 126
      %v2227 = vpop.permute.xlu0 %2226
      %2236 = vst.msk [vmem:[#allocation2 + $0x20] sm:$0xc0] %vm575, %v2213
      %2237 = vst.msk [vmem:[#allocation2 + $0x88] sm:$0xc0] %vm575, %v2215
      %2238 = vst.msk [vmem:[#allocation2 + $0xf0] sm:$0xc0] %vm575, %v2217
      %2239 = vst.msk [vmem:[#allocation2 + $0x158] sm:$0xc0] %vm575, %v2219
      %2240 = vst.msk [vmem:[#allocation2 + $0x1c0] sm:$0xc0] %vm575, %v2221
      %2241 = vst.msk [vmem:[#allocation2 + $0x228] sm:$0xc0] %vm575, %v2223
      %2242 = vst.msk [vmem:[#allocation2 + $0x290] sm:$0xc0] %vm575, %v2225
      %2243 = vst.msk [vmem:[#allocation2 + $0x2f8] sm:$0xc0] %vm575, %v2227
      %v2244 = vld [vmem:[%s1594] sm:$0x3]
      %v2245 = vld [vmem:[%s1594 + $0x2] sm:$0x3]
      %v2246 = vld [vmem:[%s1594 + $0x4] sm:$0x3]
      %v2247 = vld [vmem:[%s1594 + $0x6] sm:$0x3]
      %v2248 = vld [vmem:[%s1594 + $0x8] sm:$0x3]
      %v2249 = vld [vmem:[%s1594 + $0xa] sm:$0x3]
      %v2250 = vld [vmem:[%s1594 + $0xc] sm:$0x3]
      %v2251 = vld [vmem:[%s1594 + $0xe] sm:$0x3]
      %v2261 = vunpack.c.l.s4 1983009808
      %v2262 = vunpack.c.0.s8 %v2261
      %v2263 = vlaneseq
      %v2264 = vshrl.u32 %v2263, 7
      %v2265 = vsub.s32 %v2262, %v2264
      %v2266 = vrot.slane %v2244, %v2265
      %v2268 = vunpack.c.l.s4 1983009808
      %v2269 = vunpack.c.0.s8 %v2268
      %v2270 = vlaneseq
      %v2271 = vshrl.u32 %v2270, 7
      %v2272 = vsub.s32 %v2269, %v2271
      %v2273 = vrot.slane %v2245, %v2272
      %v2275 = vunpack.c.l.s4 1983009808
      %v2276 = vunpack.c.0.s8 %v2275
      %v2277 = vlaneseq
      %v2278 = vshrl.u32 %v2277, 7
      %v2279 = vsub.s32 %v2276, %v2278
      %v2280 = vrot.slane %v2246, %v2279
      %v2282 = vunpack.c.l.s4 1983009808
      %v2283 = vunpack.c.0.s8 %v2282
      %v2284 = vlaneseq
      %v2285 = vshrl.u32 %v2284, 7
      %v2286 = vsub.s32 %v2283, %v2285
      %v2287 = vrot.slane %v2247, %v2286
      %v2289 = vunpack.c.l.s4 1983009808
      %v2290 = vunpack.c.0.s8 %v2289
      %v2291 = vlaneseq
      %v2292 = vshrl.u32 %v2291, 7
      %v2293 = vsub.s32 %v2290, %v2292
      %v2294 = vrot.slane %v2248, %v2293
      %v2296 = vunpack.c.l.s4 1983009808
      %v2297 = vunpack.c.0.s8 %v2296
      %v2298 = vlaneseq
      %v2299 = vshrl.u32 %v2298, 7
      %v2300 = vsub.s32 %v2297, %v2299
      %v2301 = vrot.slane %v2249, %v2300
      %v2303 = vunpack.c.l.s4 1983009808
      %v2304 = vunpack.c.0.s8 %v2303
      %v2305 = vlaneseq
      %v2306 = vshrl.u32 %v2305, 7
      %v2307 = vsub.s32 %v2304, %v2306
      %v2308 = vrot.slane %v2250, %v2307
      %v2310 = vunpack.c.l.s4 1983009808
      %v2311 = vunpack.c.0.s8 %v2310
      %v2312 = vlaneseq
      %v2313 = vshrl.u32 %v2312, 7
      %v2314 = vsub.s32 %v2311, %v2313
      %v2315 = vrot.slane %v2251, %v2314
      %2316 = vrot.lane.b32.xlu0 %v2266, 125
      %v2317 = vpop.permute.xlu0 %2316
      %2318 = vrot.lane.b32.xlu0 %v2273, 125
      %v2319 = vpop.permute.xlu0 %2318
      %2320 = vrot.lane.b32.xlu0 %v2280, 125
      %v2321 = vpop.permute.xlu0 %2320
      %2322 = vrot.lane.b32.xlu0 %v2287, 125
      %v2323 = vpop.permute.xlu0 %2322
      %2324 = vrot.lane.b32.xlu0 %v2294, 125
      %v2325 = vpop.permute.xlu0 %2324
      %2326 = vrot.lane.b32.xlu0 %v2301, 125
      %v2327 = vpop.permute.xlu0 %2326
      %2328 = vrot.lane.b32.xlu0 %v2308, 125
      %v2329 = vpop.permute.xlu0 %2328
      %2330 = vrot.lane.b32.xlu0 %v2315, 125
      %v2331 = vpop.permute.xlu0 %2330
      %2340 = vst.msk [vmem:[#allocation2 + $0x28] sm:$0x3] %vm243, %v2317
      %2341 = vst.msk [vmem:[#allocation2 + $0x90] sm:$0x3] %vm243, %v2319
      %2342 = vst.msk [vmem:[#allocation2 + $0xf8] sm:$0x3] %vm243, %v2321
      %2343 = vst.msk [vmem:[#allocation2 + $0x160] sm:$0x3] %vm243, %v2323
      %2344 = vst.msk [vmem:[#allocation2 + $0x1c8] sm:$0x3] %vm243, %v2325
      %2345 = vst.msk [vmem:[#allocation2 + $0x230] sm:$0x3] %vm243, %v2327
      %2346 = vst.msk [vmem:[#allocation2 + $0x298] sm:$0x3] %vm243, %v2329
      %2347 = vst.msk [vmem:[#allocation2 + $0x300] sm:$0x3] %vm243, %v2331
      %s2348 = scalar_lea.vmem %s219, 46
      %v2349 = vld [vmem:[%s2348] sm:$0x3]
      %v2350 = vld [vmem:[%s2348 + $0x2] sm:$0x3]
      %v2351 = vld [vmem:[%s2348 + $0x4] sm:$0x3]
      %v2352 = vld [vmem:[%s2348 + $0x6] sm:$0x3]
      %v2353 = vld [vmem:[%s2348 + $0x8] sm:$0x3]
      %v2354 = vld [vmem:[%s2348 + $0xa] sm:$0x3]
      %v2355 = vld [vmem:[%s2348 + $0xc] sm:$0x3]
      %v2356 = vld [vmem:[%s2348 + $0xe] sm:$0x3]
      %v2365 = vcombine.low %v2349, %v2349
      %v2367 = vunpack.c.l.s4 1983009808
      %v2368 = vunpack.c.0.s8 %v2367
      %v2369 = vlaneseq
      %v2370 = vshrl.u32 %v2369, 7
      %v2371 = vsub.s32 %v2368, %v2370
      %v2372 = vrot.slane %v2365, %v2371
      %v2373 = vcombine.low %v2350, %v2350
      %v2375 = vunpack.c.l.s4 1983009808
      %v2376 = vunpack.c.0.s8 %v2375
      %v2377 = vlaneseq
      %v2378 = vshrl.u32 %v2377, 7
      %v2379 = vsub.s32 %v2376, %v2378
      %v2380 = vrot.slane %v2373, %v2379
      %v2381 = vcombine.low %v2351, %v2351
      %v2383 = vunpack.c.l.s4 1983009808
      %v2384 = vunpack.c.0.s8 %v2383
      %v2385 = vlaneseq
      %v2386 = vshrl.u32 %v2385, 7
      %v2387 = vsub.s32 %v2384, %v2386
      %v2388 = vrot.slane %v2381, %v2387
      %v2389 = vcombine.low %v2352, %v2352
      %v2391 = vunpack.c.l.s4 1983009808
      %v2392 = vunpack.c.0.s8 %v2391
      %v2393 = vlaneseq
      %v2394 = vshrl.u32 %v2393, 7
      %v2395 = vsub.s32 %v2392, %v2394
      %v2396 = vrot.slane %v2389, %v2395
      %v2397 = vcombine.low %v2353, %v2353
      %v2399 = vunpack.c.l.s4 1983009808
      %v2400 = vunpack.c.0.s8 %v2399
      %v2401 = vlaneseq
      %v2402 = vshrl.u32 %v2401, 7
      %v2403 = vsub.s32 %v2400, %v2402
      %v2404 = vrot.slane %v2397, %v2403
      %v2405 = vcombine.low %v2354, %v2354
      %v2407 = vunpack.c.l.s4 1983009808
      %v2408 = vunpack.c.0.s8 %v2407
      %v2409 = vlaneseq
      %v2410 = vshrl.u32 %v2409, 7
      %v2411 = vsub.s32 %v2408, %v2410
      %v2412 = vrot.slane %v2405, %v2411
      %v2413 = vcombine.low %v2355, %v2355
      %v2415 = vunpack.c.l.s4 1983009808
      %v2416 = vunpack.c.0.s8 %v2415
      %v2417 = vlaneseq
      %v2418 = vshrl.u32 %v2417, 7
      %v2419 = vsub.s32 %v2416, %v2418
      %v2420 = vrot.slane %v2413, %v2419
      %v2421 = vcombine.low %v2356, %v2356
      %v2423 = vunpack.c.l.s4 1983009808
      %v2424 = vunpack.c.0.s8 %v2423
      %v2425 = vlaneseq
      %v2426 = vshrl.u32 %v2425, 7
      %v2427 = vsub.s32 %v2424, %v2426
      %v2428 = vrot.slane %v2421, %v2427
      %2437 = vst.msk [vmem:[#allocation2 + $0x28] sm:$0xc] %vm341, %v2372
      %2438 = vst.msk [vmem:[#allocation2 + $0x90] sm:$0xc] %vm341, %v2380
      %2439 = vst.msk [vmem:[#allocation2 + $0xf8] sm:$0xc] %vm341, %v2388
      %2440 = vst.msk [vmem:[#allocation2 + $0x160] sm:$0xc] %vm341, %v2396
      %2441 = vst.msk [vmem:[#allocation2 + $0x1c8] sm:$0xc] %vm341, %v2404
      %2442 = vst.msk [vmem:[#allocation2 + $0x230] sm:$0xc] %vm341, %v2412
      %2443 = vst.msk [vmem:[#allocation2 + $0x298] sm:$0xc] %vm341, %v2420
      %2444 = vst.msk [vmem:[#allocation2 + $0x300] sm:$0xc] %vm341, %v2428
      %s2445 = scalar_lea.vmem %s219, 68
      %v2446 = vld [vmem:[%s2445] sm:$0x3]
      %v2447 = vld [vmem:[%s2445 + $0x2] sm:$0x3]
      %v2448 = vld [vmem:[%s2445 + $0x4] sm:$0x3]
      %v2449 = vld [vmem:[%s2445 + $0x6] sm:$0x3]
      %v2450 = vld [vmem:[%s2445 + $0x8] sm:$0x3]
      %v2451 = vld [vmem:[%s2445 + $0xa] sm:$0x3]
      %v2452 = vld [vmem:[%s2445 + $0xc] sm:$0x3]
      %v2453 = vld [vmem:[%s2445 + $0xe] sm:$0x3]
      %v2463 = vunpack.c.l.s4 1983009808
      %v2464 = vunpack.c.0.s8 %v2463
      %v2465 = vlaneseq
      %v2466 = vshrl.u32 %v2465, 7
      %v2467 = vsub.s32 %v2464, %v2466
      %v2468 = vrot.slane %v2446, %v2467
      %v2469 = vcombine.low %v2468, %v2468
      %v2471 = vunpack.c.l.s4 1983009808
      %v2472 = vunpack.c.0.s8 %v2471
      %v2473 = vlaneseq
      %v2474 = vshrl.u32 %v2473, 7
      %v2475 = vsub.s32 %v2472, %v2474
      %v2476 = vrot.slane %v2447, %v2475
      %v2477 = vcombine.low %v2476, %v2476
      %v2479 = vunpack.c.l.s4 1983009808
      %v2480 = vunpack.c.0.s8 %v2479
      %v2481 = vlaneseq
      %v2482 = vshrl.u32 %v2481, 7
      %v2483 = vsub.s32 %v2480, %v2482
      %v2484 = vrot.slane %v2448, %v2483
      %v2485 = vcombine.low %v2484, %v2484
      %v2487 = vunpack.c.l.s4 1983009808
      %v2488 = vunpack.c.0.s8 %v2487
      %v2489 = vlaneseq
      %v2490 = vshrl.u32 %v2489, 7
      %v2491 = vsub.s32 %v2488, %v2490
      %v2492 = vrot.slane %v2449, %v2491
      %v2493 = vcombine.low %v2492, %v2492
      %v2495 = vunpack.c.l.s4 1983009808
      %v2496 = vunpack.c.0.s8 %v2495
      %v2497 = vlaneseq
      %v2498 = vshrl.u32 %v2497, 7
      %v2499 = vsub.s32 %v2496, %v2498
      %v2500 = vrot.slane %v2450, %v2499
      %v2501 = vcombine.low %v2500, %v2500
      %v2503 = vunpack.c.l.s4 1983009808
      %v2504 = vunpack.c.0.s8 %v2503
      %v2505 = vlaneseq
      %v2506 = vshrl.u32 %v2505, 7
      %v2507 = vsub.s32 %v2504, %v2506
      %v2508 = vrot.slane %v2451, %v2507
      %v2509 = vcombine.low %v2508, %v2508
      %v2511 = vunpack.c.l.s4 1983009808
      %v2512 = vunpack.c.0.s8 %v2511
      %v2513 = vlaneseq
      %v2514 = vshrl.u32 %v2513, 7
      %v2515 = vsub.s32 %v2512, %v2514
      %v2516 = vrot.slane %v2452, %v2515
      %v2517 = vcombine.low %v2516, %v2516
      %v2519 = vunpack.c.l.s4 1983009808
      %v2520 = vunpack.c.0.s8 %v2519
      %v2521 = vlaneseq
      %v2522 = vshrl.u32 %v2521, 7
      %v2523 = vsub.s32 %v2520, %v2522
      %v2524 = vrot.slane %v2453, %v2523
      %v2525 = vcombine.low %v2524, %v2524
      %2534 = vst.msk [vmem:[#allocation2 + $0x28] sm:$0x30] %vm454, %v2469
      %2535 = vst.msk [vmem:[#allocation2 + $0x90] sm:$0x30] %vm454, %v2477
      %2536 = vst.msk [vmem:[#allocation2 + $0xf8] sm:$0x30] %vm454, %v2485
      %2537 = vst.msk [vmem:[#allocation2 + $0x160] sm:$0x30] %vm454, %v2493
      %2538 = vst.msk [vmem:[#allocation2 + $0x1c8] sm:$0x30] %vm454, %v2501
      %2539 = vst.msk [vmem:[#allocation2 + $0x230] sm:$0x30] %vm454, %v2509
      %2540 = vst.msk [vmem:[#allocation2 + $0x298] sm:$0x30] %vm454, %v2517
      %2541 = vst.msk [vmem:[#allocation2 + $0x300] sm:$0x30] %vm454, %v2525
      %v2542 = vld [vmem:[%s2348] sm:$0x3]
      %v2543 = vld [vmem:[%s2348 + $0x2] sm:$0x3]
      %v2544 = vld [vmem:[%s2348 + $0x4] sm:$0x3]
      %v2545 = vld [vmem:[%s2348 + $0x6] sm:$0x3]
      %v2546 = vld [vmem:[%s2348 + $0x8] sm:$0x3]
      %v2547 = vld [vmem:[%s2348 + $0xa] sm:$0x3]
      %v2548 = vld [vmem:[%s2348 + $0xc] sm:$0x3]
      %v2549 = vld [vmem:[%s2348 + $0xe] sm:$0x3]
      %v2558 = vcombine.low %v2542, %v2542
      %v2560 = vunpack.c.l.s4 1983009808
      %v2561 = vunpack.c.0.s8 %v2560
      %v2562 = vlaneseq
      %v2563 = vshrl.u32 %v2562, 7
      %v2564 = vsub.s32 %v2561, %v2563
      %v2565 = vrot.slane %v2558, %v2564
      %v2566 = vcombine.low %v2565, %v2565
      %v2567 = vcombine.low %v2543, %v2543
      %v2569 = vunpack.c.l.s4 1983009808
      %v2570 = vunpack.c.0.s8 %v2569
      %v2571 = vlaneseq
      %v2572 = vshrl.u32 %v2571, 7
      %v2573 = vsub.s32 %v2570, %v2572
      %v2574 = vrot.slane %v2567, %v2573
      %v2575 = vcombine.low %v2574, %v2574
      %v2576 = vcombine.low %v2544, %v2544
      %v2578 = vunpack.c.l.s4 1983009808
      %v2579 = vunpack.c.0.s8 %v2578
      %v2580 = vlaneseq
      %v2581 = vshrl.u32 %v2580, 7
      %v2582 = vsub.s32 %v2579, %v2581
      %v2583 = vrot.slane %v2576, %v2582
      %v2584 = vcombine.low %v2583, %v2583
      %v2585 = vcombine.low %v2545, %v2545
      %v2587 = vunpack.c.l.s4 1983009808
      %v2588 = vunpack.c.0.s8 %v2587
      %v2589 = vlaneseq
      %v2590 = vshrl.u32 %v2589, 7
      %v2591 = vsub.s32 %v2588, %v2590
      %v2592 = vrot.slane %v2585, %v2591
      %v2593 = vcombine.low %v2592, %v2592
      %v2594 = vcombine.low %v2546, %v2546
      %v2596 = vunpack.c.l.s4 1983009808
      %v2597 = vunpack.c.0.s8 %v2596
      %v2598 = vlaneseq
      %v2599 = vshrl.u32 %v2598, 7
      %v2600 = vsub.s32 %v2597, %v2599
      %v2601 = vrot.slane %v2594, %v2600
      %v2602 = vcombine.low %v2601, %v2601
      %v2603 = vcombine.low %v2547, %v2547
      %v2605 = vunpack.c.l.s4 1983009808
      %v2606 = vunpack.c.0.s8 %v2605
      %v2607 = vlaneseq
      %v2608 = vshrl.u32 %v2607, 7
      %v2609 = vsub.s32 %v2606, %v2608
      %v2610 = vrot.slane %v2603, %v2609
      %v2611 = vcombine.low %v2610, %v2610
      %v2612 = vcombine.low %v2548, %v2548
      %v2614 = vunpack.c.l.s4 1983009808
      %v2615 = vunpack.c.0.s8 %v2614
      %v2616 = vlaneseq
      %v2617 = vshrl.u32 %v2616, 7
      %v2618 = vsub.s32 %v2615, %v2617
      %v2619 = vrot.slane %v2612, %v2618
      %v2620 = vcombine.low %v2619, %v2619
      %v2621 = vcombine.low %v2549, %v2549
      %v2623 = vunpack.c.l.s4 1983009808
      %v2624 = vunpack.c.0.s8 %v2623
      %v2625 = vlaneseq
      %v2626 = vshrl.u32 %v2625, 7
      %v2627 = vsub.s32 %v2624, %v2626
      %v2628 = vrot.slane %v2621, %v2627
      %v2629 = vcombine.low %v2628, %v2628
      %2630 = vrot.lane.b32.xlu0 %v2566, 127
      %v2631 = vpop.permute.xlu0 %2630
      %2632 = vrot.lane.b32.xlu0 %v2575, 127
      %v2633 = vpop.permute.xlu0 %2632
      %2634 = vrot.lane.b32.xlu0 %v2584, 127
      %v2635 = vpop.permute.xlu0 %2634
      %2636 = vrot.lane.b32.xlu0 %v2593, 127
      %v2637 = vpop.permute.xlu0 %2636
      %2638 = vrot.lane.b32.xlu0 %v2602, 127
      %v2639 = vpop.permute.xlu0 %2638
      %2640 = vrot.lane.b32.xlu0 %v2611, 127
      %v2641 = vpop.permute.xlu0 %2640
      %2642 = vrot.lane.b32.xlu0 %v2620, 127
      %v2643 = vpop.permute.xlu0 %2642
      %2644 = vrot.lane.b32.xlu0 %v2629, 127
      %v2645 = vpop.permute.xlu0 %2644
      %2654 = vst.msk [vmem:[#allocation2 + $0x28] sm:$0xc0] %vm575, %v2631
      %2655 = vst.msk [vmem:[#allocation2 + $0x90] sm:$0xc0] %vm575, %v2633
      %2656 = vst.msk [vmem:[#allocation2 + $0xf8] sm:$0xc0] %vm575, %v2635
      %2657 = vst.msk [vmem:[#allocation2 + $0x160] sm:$0xc0] %vm575, %v2637
      %2658 = vst.msk [vmem:[#allocation2 + $0x1c8] sm:$0xc0] %vm575, %v2639
      %2659 = vst.msk [vmem:[#allocation2 + $0x230] sm:$0xc0] %vm575, %v2641
      %2660 = vst.msk [vmem:[#allocation2 + $0x298] sm:$0xc0] %vm575, %v2643
      %2661 = vst.msk [vmem:[#allocation2 + $0x300] sm:$0xc0] %vm575, %v2645
      %v2662 = vld [vmem:[%s2445] sm:$0x3]
      %v2663 = vld [vmem:[%s2445 + $0x2] sm:$0x3]
      %v2664 = vld [vmem:[%s2445 + $0x4] sm:$0x3]
      %v2665 = vld [vmem:[%s2445 + $0x6] sm:$0x3]
      %v2666 = vld [vmem:[%s2445 + $0x8] sm:$0x3]
      %v2667 = vld [vmem:[%s2445 + $0xa] sm:$0x3]
      %v2668 = vld [vmem:[%s2445 + $0xc] sm:$0x3]
      %v2669 = vld [vmem:[%s2445 + $0xe] sm:$0x3]
      %v2679 = vunpack.c.l.s4 1983009808
      %v2680 = vunpack.c.0.s8 %v2679
      %v2681 = vlaneseq
      %v2682 = vshrl.u32 %v2681, 7
      %v2683 = vsub.s32 %v2680, %v2682
      %v2684 = vrot.slane %v2662, %v2683
      %v2686 = vunpack.c.l.s4 1983009808
      %v2687 = vunpack.c.0.s8 %v2686
      %v2688 = vlaneseq
      %v2689 = vshrl.u32 %v2688, 7
      %v2690 = vsub.s32 %v2687, %v2689
      %v2691 = vrot.slane %v2663, %v2690
      %v2693 = vunpack.c.l.s4 1983009808
      %v2694 = vunpack.c.0.s8 %v2693
      %v2695 = vlaneseq
      %v2696 = vshrl.u32 %v2695, 7
      %v2697 = vsub.s32 %v2694, %v2696
      %v2698 = vrot.slane %v2664, %v2697
      %v2700 = vunpack.c.l.s4 1983009808
      %v2701 = vunpack.c.0.s8 %v2700
      %v2702 = vlaneseq
      %v2703 = vshrl.u32 %v2702, 7
      %v2704 = vsub.s32 %v2701, %v2703
      %v2705 = vrot.slane %v2665, %v2704
      %v2707 = vunpack.c.l.s4 1983009808
      %v2708 = vunpack.c.0.s8 %v2707
      %v2709 = vlaneseq
      %v2710 = vshrl.u32 %v2709, 7
      %v2711 = vsub.s32 %v2708, %v2710
      %v2712 = vrot.slane %v2666, %v2711
      %v2714 = vunpack.c.l.s4 1983009808
      %v2715 = vunpack.c.0.s8 %v2714
      %v2716 = vlaneseq
      %v2717 = vshrl.u32 %v2716, 7
      %v2718 = vsub.s32 %v2715, %v2717
      %v2719 = vrot.slane %v2667, %v2718
      %v2721 = vunpack.c.l.s4 1983009808
      %v2722 = vunpack.c.0.s8 %v2721
      %v2723 = vlaneseq
      %v2724 = vshrl.u32 %v2723, 7
      %v2725 = vsub.s32 %v2722, %v2724
      %v2726 = vrot.slane %v2668, %v2725
      %v2728 = vunpack.c.l.s4 1983009808
      %v2729 = vunpack.c.0.s8 %v2728
      %v2730 = vlaneseq
      %v2731 = vshrl.u32 %v2730, 7
      %v2732 = vsub.s32 %v2729, %v2731
      %v2733 = vrot.slane %v2669, %v2732
      %2734 = vrot.lane.b32.xlu0 %v2684, 127
      %v2735 = vpop.permute.xlu0 %2734
      %2736 = vrot.lane.b32.xlu0 %v2691, 127
      %v2737 = vpop.permute.xlu0 %2736
      %2738 = vrot.lane.b32.xlu0 %v2698, 127
      %v2739 = vpop.permute.xlu0 %2738
      %2740 = vrot.lane.b32.xlu0 %v2705, 127
      %v2741 = vpop.permute.xlu0 %2740
      %2742 = vrot.lane.b32.xlu0 %v2712, 127
      %v2743 = vpop.permute.xlu0 %2742
      %2744 = vrot.lane.b32.xlu0 %v2719, 127
      %v2745 = vpop.permute.xlu0 %2744
      %2746 = vrot.lane.b32.xlu0 %v2726, 127
      %v2747 = vpop.permute.xlu0 %2746
      %2748 = vrot.lane.b32.xlu0 %v2733, 127
      %v2749 = vpop.permute.xlu0 %2748
      %2758 = vst.msk [vmem:[#allocation2 + $0x30] sm:$0x3] %vm243, %v2735
      %2759 = vst.msk [vmem:[#allocation2 + $0x98] sm:$0x3] %vm243, %v2737
      %2760 = vst.msk [vmem:[#allocation2 + $0x100] sm:$0x3] %vm243, %v2739
      %2761 = vst.msk [vmem:[#allocation2 + $0x168] sm:$0x3] %vm243, %v2741
      %2762 = vst.msk [vmem:[#allocation2 + $0x1d0] sm:$0x3] %vm243, %v2743
      %2763 = vst.msk [vmem:[#allocation2 + $0x238] sm:$0x3] %vm243, %v2745
      %2764 = vst.msk [vmem:[#allocation2 + $0x2a0] sm:$0x3] %vm243, %v2747
      %2765 = vst.msk [vmem:[#allocation2 + $0x308] sm:$0x3] %vm243, %v2749
      %v2766 = vld [vmem:[%s2348] sm:$0x3]
      %v2767 = vld [vmem:[%s2348 + $0x2] sm:$0x3]
      %v2768 = vld [vmem:[%s2348 + $0x4] sm:$0x3]
      %v2769 = vld [vmem:[%s2348 + $0x6] sm:$0x3]
      %v2770 = vld [vmem:[%s2348 + $0x8] sm:$0x3]
      %v2771 = vld [vmem:[%s2348 + $0xa] sm:$0x3]
      %v2772 = vld [vmem:[%s2348 + $0xc] sm:$0x3]
      %v2773 = vld [vmem:[%s2348 + $0xe] sm:$0x3]
      %v2782 = vcombine.low %v2766, %v2766
      %v2784 = vunpack.c.l.s4 1983009808
      %v2785 = vunpack.c.0.s8 %v2784
      %v2786 = vlaneseq
      %v2787 = vshrl.u32 %v2786, 7
      %v2788 = vsub.s32 %v2785, %v2787
      %v2789 = vrot.slane %v2782, %v2788
      %v2790 = vcombine.low %v2767, %v2767
      %v2792 = vunpack.c.l.s4 1983009808
      %v2793 = vunpack.c.0.s8 %v2792
      %v2794 = vlaneseq
      %v2795 = vshrl.u32 %v2794, 7
      %v2796 = vsub.s32 %v2793, %v2795
      %v2797 = vrot.slane %v2790, %v2796
      %v2798 = vcombine.low %v2768, %v2768
      %v2800 = vunpack.c.l.s4 1983009808
      %v2801 = vunpack.c.0.s8 %v2800
      %v2802 = vlaneseq
      %v2803 = vshrl.u32 %v2802, 7
      %v2804 = vsub.s32 %v2801, %v2803
      %v2805 = vrot.slane %v2798, %v2804
      %v2806 = vcombine.low %v2769, %v2769
      %v2808 = vunpack.c.l.s4 1983009808
      %v2809 = vunpack.c.0.s8 %v2808
      %v2810 = vlaneseq
      %v2811 = vshrl.u32 %v2810, 7
      %v2812 = vsub.s32 %v2809, %v2811
      %v2813 = vrot.slane %v2806, %v2812
      %v2814 = vcombine.low %v2770, %v2770
      %v2816 = vunpack.c.l.s4 1983009808
      %v2817 = vunpack.c.0.s8 %v2816
      %v2818 = vlaneseq
      %v2819 = vshrl.u32 %v2818, 7
      %v2820 = vsub.s32 %v2817, %v2819
      %v2821 = vrot.slane %v2814, %v2820
      %v2822 = vcombine.low %v2771, %v2771
      %v2824 = vunpack.c.l.s4 1983009808
      %v2825 = vunpack.c.0.s8 %v2824
      %v2826 = vlaneseq
      %v2827 = vshrl.u32 %v2826, 7
      %v2828 = vsub.s32 %v2825, %v2827
      %v2829 = vrot.slane %v2822, %v2828
      %v2830 = vcombine.low %v2772, %v2772
      %v2832 = vunpack.c.l.s4 1983009808
      %v2833 = vunpack.c.0.s8 %v2832
      %v2834 = vlaneseq
      %v2835 = vshrl.u32 %v2834, 7
      %v2836 = vsub.s32 %v2833, %v2835
      %v2837 = vrot.slane %v2830, %v2836
      %v2838 = vcombine.low %v2773, %v2773
      %v2840 = vunpack.c.l.s4 1983009808
      %v2841 = vunpack.c.0.s8 %v2840
      %v2842 = vlaneseq
      %v2843 = vshrl.u32 %v2842, 7
      %v2844 = vsub.s32 %v2841, %v2843
      %v2845 = vrot.slane %v2838, %v2844
      %2846 = vrot.lane.b32.xlu0 %v2789, 126
      %v2847 = vpop.permute.xlu0 %2846
      %2848 = vrot.lane.b32.xlu0 %v2797, 126
      %v2849 = vpop.permute.xlu0 %2848
      %2850 = vrot.lane.b32.xlu0 %v2805, 126
      %v2851 = vpop.permute.xlu0 %2850
      %2852 = vrot.lane.b32.xlu0 %v2813, 126
      %v2853 = vpop.permute.xlu0 %2852
      %2854 = vrot.lane.b32.xlu0 %v2821, 126
      %v2855 = vpop.permute.xlu0 %2854
      %2856 = vrot.lane.b32.xlu0 %v2829, 126
      %v2857 = vpop.permute.xlu0 %2856
      %2858 = vrot.lane.b32.xlu0 %v2837, 126
      %v2859 = vpop.permute.xlu0 %2858
      %2860 = vrot.lane.b32.xlu0 %v2845, 126
      %v2861 = vpop.permute.xlu0 %2860
      %2870 = vst.msk [vmem:[#allocation2 + $0x30] sm:$0xc] %vm341, %v2847
      %2871 = vst.msk [vmem:[#allocation2 + $0x98] sm:$0xc] %vm341, %v2849
      %2872 = vst.msk [vmem:[#allocation2 + $0x100] sm:$0xc] %vm341, %v2851
      %2873 = vst.msk [vmem:[#allocation2 + $0x168] sm:$0xc] %vm341, %v2853
      %2874 = vst.msk [vmem:[#allocation2 + $0x1d0] sm:$0xc] %vm341, %v2855
      %2875 = vst.msk [vmem:[#allocation2 + $0x238] sm:$0xc] %vm341, %v2857
      %2876 = vst.msk [vmem:[#allocation2 + $0x2a0] sm:$0xc] %vm341, %v2859
      %2877 = vst.msk [vmem:[#allocation2 + $0x308] sm:$0xc] %vm341, %v2861
      %v2878 = vld [vmem:[%s2445] sm:$0x3]
      %v2879 = vld [vmem:[%s2445 + $0x2] sm:$0x3]
      %v2880 = vld [vmem:[%s2445 + $0x4] sm:$0x3]
      %v2881 = vld [vmem:[%s2445 + $0x6] sm:$0x3]
      %v2882 = vld [vmem:[%s2445 + $0x8] sm:$0x3]
      %v2883 = vld [vmem:[%s2445 + $0xa] sm:$0x3]
      %v2884 = vld [vmem:[%s2445 + $0xc] sm:$0x3]
      %v2885 = vld [vmem:[%s2445 + $0xe] sm:$0x3]
      %v2895 = vunpack.c.l.s4 1983009808
      %v2896 = vunpack.c.0.s8 %v2895
      %v2897 = vlaneseq
      %v2898 = vshrl.u32 %v2897, 7
      %v2899 = vsub.s32 %v2896, %v2898
      %v2900 = vrot.slane %v2878, %v2899
      %v2901 = vcombine.low %v2900, %v2900
      %v2903 = vunpack.c.l.s4 1983009808
      %v2904 = vunpack.c.0.s8 %v2903
      %v2905 = vlaneseq
      %v2906 = vshrl.u32 %v2905, 7
      %v2907 = vsub.s32 %v2904, %v2906
      %v2908 = vrot.slane %v2879, %v2907
      %v2909 = vcombine.low %v2908, %v2908
      %v2911 = vunpack.c.l.s4 1983009808
      %v2912 = vunpack.c.0.s8 %v2911
      %v2913 = vlaneseq
      %v2914 = vshrl.u32 %v2913, 7
      %v2915 = vsub.s32 %v2912, %v2914
      %v2916 = vrot.slane %v2880, %v2915
      %v2917 = vcombine.low %v2916, %v2916
      %v2919 = vunpack.c.l.s4 1983009808
      %v2920 = vunpack.c.0.s8 %v2919
      %v2921 = vlaneseq
      %v2922 = vshrl.u32 %v2921, 7
      %v2923 = vsub.s32 %v2920, %v2922
      %v2924 = vrot.slane %v2881, %v2923
      %v2925 = vcombine.low %v2924, %v2924
      %v2927 = vunpack.c.l.s4 1983009808
      %v2928 = vunpack.c.0.s8 %v2927
      %v2929 = vlaneseq
      %v2930 = vshrl.u32 %v2929, 7
      %v2931 = vsub.s32 %v2928, %v2930
      %v2932 = vrot.slane %v2882, %v2931
      %v2933 = vcombine.low %v2932, %v2932
      %v2935 = vunpack.c.l.s4 1983009808
      %v2936 = vunpack.c.0.s8 %v2935
      %v2937 = vlaneseq
      %v2938 = vshrl.u32 %v2937, 7
      %v2939 = vsub.s32 %v2936, %v2938
      %v2940 = vrot.slane %v2883, %v2939
      %v2941 = vcombine.low %v2940, %v2940
      %v2943 = vunpack.c.l.s4 1983009808
      %v2944 = vunpack.c.0.s8 %v2943
      %v2945 = vlaneseq
      %v2946 = vshrl.u32 %v2945, 7
      %v2947 = vsub.s32 %v2944, %v2946
      %v2948 = vrot.slane %v2884, %v2947
      %v2949 = vcombine.low %v2948, %v2948
      %v2951 = vunpack.c.l.s4 1983009808
      %v2952 = vunpack.c.0.s8 %v2951
      %v2953 = vlaneseq
      %v2954 = vshrl.u32 %v2953, 7
      %v2955 = vsub.s32 %v2952, %v2954
      %v2956 = vrot.slane %v2885, %v2955
      %v2957 = vcombine.low %v2956, %v2956
      %2958 = vrot.lane.b32.xlu0 %v2901, 126
      %v2959 = vpop.permute.xlu0 %2958
      %2960 = vrot.lane.b32.xlu0 %v2909, 126
      %v2961 = vpop.permute.xlu0 %2960
      %2962 = vrot.lane.b32.xlu0 %v2917, 126
      %v2963 = vpop.permute.xlu0 %2962
      %2964 = vrot.lane.b32.xlu0 %v2925, 126
      %v2965 = vpop.permute.xlu0 %2964
      %2966 = vrot.lane.b32.xlu0 %v2933, 126
      %v2967 = vpop.permute.xlu0 %2966
      %2968 = vrot.lane.b32.xlu0 %v2941, 126
      %v2969 = vpop.permute.xlu0 %2968
      %2970 = vrot.lane.b32.xlu0 %v2949, 126
      %v2971 = vpop.permute.xlu0 %2970
      %2972 = vrot.lane.b32.xlu0 %v2957, 126
      %v2973 = vpop.permute.xlu0 %2972
      %2982 = vst.msk [vmem:[#allocation2 + $0x30] sm:$0x30] %vm454, %v2959
      %2983 = vst.msk [vmem:[#allocation2 + $0x98] sm:$0x30] %vm454, %v2961
      %2984 = vst.msk [vmem:[#allocation2 + $0x100] sm:$0x30] %vm454, %v2963
      %2985 = vst.msk [vmem:[#allocation2 + $0x168] sm:$0x30] %vm454, %v2965
      %2986 = vst.msk [vmem:[#allocation2 + $0x1d0] sm:$0x30] %vm454, %v2967
      %2987 = vst.msk [vmem:[#allocation2 + $0x238] sm:$0x30] %vm454, %v2969
      %2988 = vst.msk [vmem:[#allocation2 + $0x2a0] sm:$0x30] %vm454, %v2971
      %2989 = vst.msk [vmem:[#allocation2 + $0x308] sm:$0x30] %vm454, %v2973
      %v2990 = vld [vmem:[%s2348] sm:$0x3]
      %v2991 = vld [vmem:[%s2348 + $0x2] sm:$0x3]
      %v2992 = vld [vmem:[%s2348 + $0x4] sm:$0x3]
      %v2993 = vld [vmem:[%s2348 + $0x6] sm:$0x3]
      %v2994 = vld [vmem:[%s2348 + $0x8] sm:$0x3]
      %v2995 = vld [vmem:[%s2348 + $0xa] sm:$0x3]
      %v2996 = vld [vmem:[%s2348 + $0xc] sm:$0x3]
      %v2997 = vld [vmem:[%s2348 + $0xe] sm:$0x3]
      %v3006 = vcombine.low %v2990, %v2990
      %v3008 = vunpack.c.l.s4 1983009808
      %v3009 = vunpack.c.0.s8 %v3008
      %v3010 = vlaneseq
      %v3011 = vshrl.u32 %v3010, 7
      %v3012 = vsub.s32 %v3009, %v3011
      %v3013 = vrot.slane %v3006, %v3012
      %v3014 = vcombine.low %v3013, %v3013
      %v3015 = vcombine.low %v2991, %v2991
      %v3017 = vunpack.c.l.s4 1983009808
      %v3018 = vunpack.c.0.s8 %v3017
      %v3019 = vlaneseq
      %v3020 = vshrl.u32 %v3019, 7
      %v3021 = vsub.s32 %v3018, %v3020
      %v3022 = vrot.slane %v3015, %v3021
      %v3023 = vcombine.low %v3022, %v3022
      %v3024 = vcombine.low %v2992, %v2992
      %v3026 = vunpack.c.l.s4 1983009808
      %v3027 = vunpack.c.0.s8 %v3026
      %v3028 = vlaneseq
      %v3029 = vshrl.u32 %v3028, 7
      %v3030 = vsub.s32 %v3027, %v3029
      %v3031 = vrot.slane %v3024, %v3030
      %v3032 = vcombine.low %v3031, %v3031
      %v3033 = vcombine.low %v2993, %v2993
      %v3035 = vunpack.c.l.s4 1983009808
      %v3036 = vunpack.c.0.s8 %v3035
      %v3037 = vlaneseq
      %v3038 = vshrl.u32 %v3037, 7
      %v3039 = vsub.s32 %v3036, %v3038
      %v3040 = vrot.slane %v3033, %v3039
      %v3041 = vcombine.low %v3040, %v3040
      %v3042 = vcombine.low %v2994, %v2994
      %v3044 = vunpack.c.l.s4 1983009808
      %v3045 = vunpack.c.0.s8 %v3044
      %v3046 = vlaneseq
      %v3047 = vshrl.u32 %v3046, 7
      %v3048 = vsub.s32 %v3045, %v3047
      %v3049 = vrot.slane %v3042, %v3048
      %v3050 = vcombine.low %v3049, %v3049
      %v3051 = vcombine.low %v2995, %v2995
      %v3053 = vunpack.c.l.s4 1983009808
      %v3054 = vunpack.c.0.s8 %v3053
      %v3055 = vlaneseq
      %v3056 = vshrl.u32 %v3055, 7
      %v3057 = vsub.s32 %v3054, %v3056
      %v3058 = vrot.slane %v3051, %v3057
      %v3059 = vcombine.low %v3058, %v3058
      %v3060 = vcombine.low %v2996, %v2996
      %v3062 = vunpack.c.l.s4 1983009808
      %v3063 = vunpack.c.0.s8 %v3062
      %v3064 = vlaneseq
      %v3065 = vshrl.u32 %v3064, 7
      %v3066 = vsub.s32 %v3063, %v3065
      %v3067 = vrot.slane %v3060, %v3066
      %v3068 = vcombine.low %v3067, %v3067
      %v3069 = vcombine.low %v2997, %v2997
      %v3071 = vunpack.c.l.s4 1983009808
      %v3072 = vunpack.c.0.s8 %v3071
      %v3073 = vlaneseq
      %v3074 = vshrl.u32 %v3073, 7
      %v3075 = vsub.s32 %v3072, %v3074
      %v3076 = vrot.slane %v3069, %v3075
      %v3077 = vcombine.low %v3076, %v3076
      %3078 = vrot.lane.b32.xlu0 %v3014, 125
      %v3079 = vpop.permute.xlu0 %3078
      %3080 = vrot.lane.b32.xlu0 %v3023, 125
      %v3081 = vpop.permute.xlu0 %3080
      %3082 = vrot.lane.b32.xlu0 %v3032, 125
      %v3083 = vpop.permute.xlu0 %3082
      %3084 = vrot.lane.b32.xlu0 %v3041, 125
      %v3085 = vpop.permute.xlu0 %3084
      %3086 = vrot.lane.b32.xlu0 %v3050, 125
      %v3087 = vpop.permute.xlu0 %3086
      %3088 = vrot.lane.b32.xlu0 %v3059, 125
      %v3089 = vpop.permute.xlu0 %3088
      %3090 = vrot.lane.b32.xlu0 %v3068, 125
      %v3091 = vpop.permute.xlu0 %3090
      %3092 = vrot.lane.b32.xlu0 %v3077, 125
      %v3093 = vpop.permute.xlu0 %3092
      %3102 = vst.msk [vmem:[#allocation2 + $0x30] sm:$0xc0] %vm575, %v3079
      %3103 = vst.msk [vmem:[#allocation2 + $0x98] sm:$0xc0] %vm575, %v3081
      %3104 = vst.msk [vmem:[#allocation2 + $0x100] sm:$0xc0] %vm575, %v3083
      %3105 = vst.msk [vmem:[#allocation2 + $0x168] sm:$0xc0] %vm575, %v3085
      %3106 = vst.msk [vmem:[#allocation2 + $0x1d0] sm:$0xc0] %vm575, %v3087
      %3107 = vst.msk [vmem:[#allocation2 + $0x238] sm:$0xc0] %vm575, %v3089
      %3108 = vst.msk [vmem:[#allocation2 + $0x2a0] sm:$0xc0] %vm575, %v3091
      %3109 = vst.msk [vmem:[#allocation2 + $0x308] sm:$0xc0] %vm575, %v3093
      %s3110 = scalar_lea.vmem %s219, 4
      %v3111 = vld [vmem:[%s3110] sm:$0x3]
      %v3112 = vld [vmem:[%s3110 + $0x2] sm:$0x3]
      %v3113 = vld [vmem:[%s3110 + $0x4] sm:$0x3]
      %v3114 = vld [vmem:[%s3110 + $0x6] sm:$0x3]
      %v3115 = vld [vmem:[%s3110 + $0x8] sm:$0x3]
      %v3116 = vld [vmem:[%s3110 + $0xa] sm:$0x3]
      %v3117 = vld [vmem:[%s3110 + $0xc] sm:$0x3]
      %v3118 = vld [vmem:[%s3110 + $0xe] sm:$0x3]
      %3119 = vst.msk [vmem:[#allocation2 + $0x38] sm:$0x3] %vm243, %v3111
      %3120 = vst.msk [vmem:[#allocation2 + $0xa0] sm:$0x3] %vm243, %v3112
      %3121 = vst.msk [vmem:[#allocation2 + $0x108] sm:$0x3] %vm243, %v3113
      %3122 = vst.msk [vmem:[#allocation2 + $0x170] sm:$0x3] %vm243, %v3114
      %3123 = vst.msk [vmem:[#allocation2 + $0x1d8] sm:$0x3] %vm243, %v3115
      %3124 = vst.msk [vmem:[#allocation2 + $0x240] sm:$0x3] %vm243, %v3116
      %3125 = vst.msk [vmem:[#allocation2 + $0x2a8] sm:$0x3] %vm243, %v3117
      %3126 = vst.msk [vmem:[#allocation2 + $0x310] sm:$0x3] %vm243, %v3118
      %s3127 = scalar_lea.vmem %s219, 26
      %v3128 = vld [vmem:[%s3127] sm:$0x3]
      %v3129 = vld [vmem:[%s3127 + $0x2] sm:$0x3]
      %v3130 = vld [vmem:[%s3127 + $0x4] sm:$0x3]
      %v3131 = vld [vmem:[%s3127 + $0x6] sm:$0x3]
      %v3132 = vld [vmem:[%s3127 + $0x8] sm:$0x3]
      %v3133 = vld [vmem:[%s3127 + $0xa] sm:$0x3]
      %v3134 = vld [vmem:[%s3127 + $0xc] sm:$0x3]
      %v3135 = vld [vmem:[%s3127 + $0xe] sm:$0x3]
      %v3144 = vcombine.low %v3128, %v3128
      %v3146 = vunpack.c.l.s4 1983009808
      %v3147 = vunpack.c.0.s8 %v3146
      %v3148 = vlaneseq
      %v3149 = vshrl.u32 %v3148, 7
      %v3150 = vsub.s32 %v3147, %v3149
      %v3151 = vrot.slane %v3144, %v3150
      %v3152 = vcombine.low %v3129, %v3129
      %v3154 = vunpack.c.l.s4 1983009808
      %v3155 = vunpack.c.0.s8 %v3154
      %v3156 = vlaneseq
      %v3157 = vshrl.u32 %v3156, 7
      %v3158 = vsub.s32 %v3155, %v3157
      %v3159 = vrot.slane %v3152, %v3158
      %v3160 = vcombine.low %v3130, %v3130
      %v3162 = vunpack.c.l.s4 1983009808
      %v3163 = vunpack.c.0.s8 %v3162
      %v3164 = vlaneseq
      %v3165 = vshrl.u32 %v3164, 7
      %v3166 = vsub.s32 %v3163, %v3165
      %v3167 = vrot.slane %v3160, %v3166
      %v3168 = vcombine.low %v3131, %v3131
      %v3170 = vunpack.c.l.s4 1983009808
      %v3171 = vunpack.c.0.s8 %v3170
      %v3172 = vlaneseq
      %v3173 = vshrl.u32 %v3172, 7
      %v3174 = vsub.s32 %v3171, %v3173
      %v3175 = vrot.slane %v3168, %v3174
      %v3176 = vcombine.low %v3132, %v3132
      %v3178 = vunpack.c.l.s4 1983009808
      %v3179 = vunpack.c.0.s8 %v3178
      %v3180 = vlaneseq
      %v3181 = vshrl.u32 %v3180, 7
      %v3182 = vsub.s32 %v3179, %v3181
      %v3183 = vrot.slane %v3176, %v3182
      %v3184 = vcombine.low %v3133, %v3133
      %v3186 = vunpack.c.l.s4 1983009808
      %v3187 = vunpack.c.0.s8 %v3186
      %v3188 = vlaneseq
      %v3189 = vshrl.u32 %v3188, 7
      %v3190 = vsub.s32 %v3187, %v3189
      %v3191 = vrot.slane %v3184, %v3190
      %v3192 = vcombine.low %v3134, %v3134
      %v3194 = vunpack.c.l.s4 1983009808
      %v3195 = vunpack.c.0.s8 %v3194
      %v3196 = vlaneseq
      %v3197 = vshrl.u32 %v3196, 7
      %v3198 = vsub.s32 %v3195, %v3197
      %v3199 = vrot.slane %v3192, %v3198
      %v3200 = vcombine.low %v3135, %v3135
      %v3202 = vunpack.c.l.s4 1983009808
      %v3203 = vunpack.c.0.s8 %v3202
      %v3204 = vlaneseq
      %v3205 = vshrl.u32 %v3204, 7
      %v3206 = vsub.s32 %v3203, %v3205
      %v3207 = vrot.slane %v3200, %v3206
      %3216 = vst.msk [vmem:[#allocation2 + $0x38] sm:$0xc] %vm341, %v3151
      %3217 = vst.msk [vmem:[#allocation2 + $0xa0] sm:$0xc] %vm341, %v3159
      %3218 = vst.msk [vmem:[#allocation2 + $0x108] sm:$0xc] %vm341, %v3167
      %3219 = vst.msk [vmem:[#allocation2 + $0x170] sm:$0xc] %vm341, %v3175
      %3220 = vst.msk [vmem:[#allocation2 + $0x1d8] sm:$0xc] %vm341, %v3183
      %3221 = vst.msk [vmem:[#allocation2 + $0x240] sm:$0xc] %vm341, %v3191
      %3222 = vst.msk [vmem:[#allocation2 + $0x2a8] sm:$0xc] %vm341, %v3199
      %3223 = vst.msk [vmem:[#allocation2 + $0x310] sm:$0xc] %vm341, %v3207
      %v3224 = vld [vmem:[%s3110] sm:$0x3]
      %v3225 = vld [vmem:[%s3110 + $0x2] sm:$0x3]
      %v3226 = vld [vmem:[%s3110 + $0x4] sm:$0x3]
      %v3227 = vld [vmem:[%s3110 + $0x6] sm:$0x3]
      %v3228 = vld [vmem:[%s3110 + $0x8] sm:$0x3]
      %v3229 = vld [vmem:[%s3110 + $0xa] sm:$0x3]
      %v3230 = vld [vmem:[%s3110 + $0xc] sm:$0x3]
      %v3231 = vld [vmem:[%s3110 + $0xe] sm:$0x3]
      %v3241 = vunpack.c.l.s4 1983009808
      %v3242 = vunpack.c.0.s8 %v3241
      %v3243 = vlaneseq
      %v3244 = vshrl.u32 %v3243, 7
      %v3245 = vsub.s32 %v3242, %v3244
      %v3246 = vrot.slane %v3224, %v3245
      %v3247 = vcombine.low %v3246, %v3246
      %v3249 = vunpack.c.l.s4 1983009808
      %v3250 = vunpack.c.0.s8 %v3249
      %v3251 = vlaneseq
      %v3252 = vshrl.u32 %v3251, 7
      %v3253 = vsub.s32 %v3250, %v3252
      %v3254 = vrot.slane %v3225, %v3253
      %v3255 = vcombine.low %v3254, %v3254
      %v3257 = vunpack.c.l.s4 1983009808
      %v3258 = vunpack.c.0.s8 %v3257
      %v3259 = vlaneseq
      %v3260 = vshrl.u32 %v3259, 7
      %v3261 = vsub.s32 %v3258, %v3260
      %v3262 = vrot.slane %v3226, %v3261
      %v3263 = vcombine.low %v3262, %v3262
      %v3265 = vunpack.c.l.s4 1983009808
      %v3266 = vunpack.c.0.s8 %v3265
      %v3267 = vlaneseq
      %v3268 = vshrl.u32 %v3267, 7
      %v3269 = vsub.s32 %v3266, %v3268
      %v3270 = vrot.slane %v3227, %v3269
      %v3271 = vcombine.low %v3270, %v3270
      %v3273 = vunpack.c.l.s4 1983009808
      %v3274 = vunpack.c.0.s8 %v3273
      %v3275 = vlaneseq
      %v3276 = vshrl.u32 %v3275, 7
      %v3277 = vsub.s32 %v3274, %v3276
      %v3278 = vrot.slane %v3228, %v3277
      %v3279 = vcombine.low %v3278, %v3278
      %v3281 = vunpack.c.l.s4 1983009808
      %v3282 = vunpack.c.0.s8 %v3281
      %v3283 = vlaneseq
      %v3284 = vshrl.u32 %v3283, 7
      %v3285 = vsub.s32 %v3282, %v3284
      %v3286 = vrot.slane %v3229, %v3285
      %v3287 = vcombine.low %v3286, %v3286
      %v3289 = vunpack.c.l.s4 1983009808
      %v3290 = vunpack.c.0.s8 %v3289
      %v3291 = vlaneseq
      %v3292 = vshrl.u32 %v3291, 7
      %v3293 = vsub.s32 %v3290, %v3292
      %v3294 = vrot.slane %v3230, %v3293
      %v3295 = vcombine.low %v3294, %v3294
      %v3297 = vunpack.c.l.s4 1983009808
      %v3298 = vunpack.c.0.s8 %v3297
      %v3299 = vlaneseq
      %v3300 = vshrl.u32 %v3299, 7
      %v3301 = vsub.s32 %v3298, %v3300
      %v3302 = vrot.slane %v3231, %v3301
      %v3303 = vcombine.low %v3302, %v3302
      %3304 = vrot.lane.b32.xlu0 %v3247, 127
      %v3305 = vpop.permute.xlu0 %3304
      %3306 = vrot.lane.b32.xlu0 %v3255, 127
      %v3307 = vpop.permute.xlu0 %3306
      %3308 = vrot.lane.b32.xlu0 %v3263, 127
      %v3309 = vpop.permute.xlu0 %3308
      %3310 = vrot.lane.b32.xlu0 %v3271, 127
      %v3311 = vpop.permute.xlu0 %3310
      %3312 = vrot.lane.b32.xlu0 %v3279, 127
      %v3313 = vpop.permute.xlu0 %3312
      %3314 = vrot.lane.b32.xlu0 %v3287, 127
      %v3315 = vpop.permute.xlu0 %3314
      %3316 = vrot.lane.b32.xlu0 %v3295, 127
      %v3317 = vpop.permute.xlu0 %3316
      %3318 = vrot.lane.b32.xlu0 %v3303, 127
      %v3319 = vpop.permute.xlu0 %3318
      %3328 = vst.msk [vmem:[#allocation2 + $0x38] sm:$0x30] %vm454, %v3305
      %3329 = vst.msk [vmem:[#allocation2 + $0xa0] sm:$0x30] %vm454, %v3307
      %3330 = vst.msk [vmem:[#allocation2 + $0x108] sm:$0x30] %vm454, %v3309
      %3331 = vst.msk [vmem:[#allocation2 + $0x170] sm:$0x30] %vm454, %v3311
      %3332 = vst.msk [vmem:[#allocation2 + $0x1d8] sm:$0x30] %vm454, %v3313
      %3333 = vst.msk [vmem:[#allocation2 + $0x240] sm:$0x30] %vm454, %v3315
      %3334 = vst.msk [vmem:[#allocation2 + $0x2a8] sm:$0x30] %vm454, %v3317
      %3335 = vst.msk [vmem:[#allocation2 + $0x310] sm:$0x30] %vm454, %v3319
      %v3336 = vld [vmem:[%s3127] sm:$0x3]
      %v3337 = vld [vmem:[%s3127 + $0x2] sm:$0x3]
      %v3338 = vld [vmem:[%s3127 + $0x4] sm:$0x3]
      %v3339 = vld [vmem:[%s3127 + $0x6] sm:$0x3]
      %v3340 = vld [vmem:[%s3127 + $0x8] sm:$0x3]
      %v3341 = vld [vmem:[%s3127 + $0xa] sm:$0x3]
      %v3342 = vld [vmem:[%s3127 + $0xc] sm:$0x3]
      %v3343 = vld [vmem:[%s3127 + $0xe] sm:$0x3]
      %v3352 = vcombine.low %v3336, %v3336
      %v3354 = vunpack.c.l.s4 1983009808
      %v3355 = vunpack.c.0.s8 %v3354
      %v3356 = vlaneseq
      %v3357 = vshrl.u32 %v3356, 7
      %v3358 = vsub.s32 %v3355, %v3357
      %v3359 = vrot.slane %v3352, %v3358
      %v3360 = vcombine.low %v3359, %v3359
      %v3361 = vcombine.low %v3337, %v3337
      %v3363 = vunpack.c.l.s4 1983009808
      %v3364 = vunpack.c.0.s8 %v3363
      %v3365 = vlaneseq
      %v3366 = vshrl.u32 %v3365, 7
      %v3367 = vsub.s32 %v3364, %v3366
      %v3368 = vrot.slane %v3361, %v3367
      %v3369 = vcombine.low %v3368, %v3368
      %v3370 = vcombine.low %v3338, %v3338
      %v3372 = vunpack.c.l.s4 1983009808
      %v3373 = vunpack.c.0.s8 %v3372
      %v3374 = vlaneseq
      %v3375 = vshrl.u32 %v3374, 7
      %v3376 = vsub.s32 %v3373, %v3375
      %v3377 = vrot.slane %v3370, %v3376
      %v3378 = vcombine.low %v3377, %v3377
      %v3379 = vcombine.low %v3339, %v3339
      %v3381 = vunpack.c.l.s4 1983009808
      %v3382 = vunpack.c.0.s8 %v3381
      %v3383 = vlaneseq
      %v3384 = vshrl.u32 %v3383, 7
      %v3385 = vsub.s32 %v3382, %v3384
      %v3386 = vrot.slane %v3379, %v3385
      %v3387 = vcombine.low %v3386, %v3386
      %v3388 = vcombine.low %v3340, %v3340
      %v3390 = vunpack.c.l.s4 1983009808
      %v3391 = vunpack.c.0.s8 %v3390
      %v3392 = vlaneseq
      %v3393 = vshrl.u32 %v3392, 7
      %v3394 = vsub.s32 %v3391, %v3393
      %v3395 = vrot.slane %v3388, %v3394
      %v3396 = vcombine.low %v3395, %v3395
      %v3397 = vcombine.low %v3341, %v3341
      %v3399 = vunpack.c.l.s4 1983009808
      %v3400 = vunpack.c.0.s8 %v3399
      %v3401 = vlaneseq
      %v3402 = vshrl.u32 %v3401, 7
      %v3403 = vsub.s32 %v3400, %v3402
      %v3404 = vrot.slane %v3397, %v3403
      %v3405 = vcombine.low %v3404, %v3404
      %v3406 = vcombine.low %v3342, %v3342
      %v3408 = vunpack.c.l.s4 1983009808
      %v3409 = vunpack.c.0.s8 %v3408
      %v3410 = vlaneseq
      %v3411 = vshrl.u32 %v3410, 7
      %v3412 = vsub.s32 %v3409, %v3411
      %v3413 = vrot.slane %v3406, %v3412
      %v3414 = vcombine.low %v3413, %v3413
      %v3415 = vcombine.low %v3343, %v3343
      %v3417 = vunpack.c.l.s4 1983009808
      %v3418 = vunpack.c.0.s8 %v3417
      %v3419 = vlaneseq
      %v3420 = vshrl.u32 %v3419, 7
      %v3421 = vsub.s32 %v3418, %v3420
      %v3422 = vrot.slane %v3415, %v3421
      %v3423 = vcombine.low %v3422, %v3422
      %3424 = vrot.lane.b32.xlu0 %v3360, 127
      %v3425 = vpop.permute.xlu0 %3424
      %3426 = vrot.lane.b32.xlu0 %v3369, 127
      %v3427 = vpop.permute.xlu0 %3426
      %3428 = vrot.lane.b32.xlu0 %v3378, 127
      %v3429 = vpop.permute.xlu0 %3428
      %3430 = vrot.lane.b32.xlu0 %v3387, 127
      %v3431 = vpop.permute.xlu0 %3430
      %3432 = vrot.lane.b32.xlu0 %v3396, 127
      %v3433 = vpop.permute.xlu0 %3432
      %3434 = vrot.lane.b32.xlu0 %v3405, 127
      %v3435 = vpop.permute.xlu0 %3434
      %3436 = vrot.lane.b32.xlu0 %v3414, 127
      %v3437 = vpop.permute.xlu0 %3436
      %3438 = vrot.lane.b32.xlu0 %v3423, 127
      %v3439 = vpop.permute.xlu0 %3438
      %3448 = vst.msk [vmem:[#allocation2 + $0x38] sm:$0xc0] %vm575, %v3425
      %3449 = vst.msk [vmem:[#allocation2 + $0xa0] sm:$0xc0] %vm575, %v3427
      %3450 = vst.msk [vmem:[#allocation2 + $0x108] sm:$0xc0] %vm575, %v3429
      %3451 = vst.msk [vmem:[#allocation2 + $0x170] sm:$0xc0] %vm575, %v3431
      %3452 = vst.msk [vmem:[#allocation2 + $0x1d8] sm:$0xc0] %vm575, %v3433
      %3453 = vst.msk [vmem:[#allocation2 + $0x240] sm:$0xc0] %vm575, %v3435
      %3454 = vst.msk [vmem:[#allocation2 + $0x2a8] sm:$0xc0] %vm575, %v3437
      %3455 = vst.msk [vmem:[#allocation2 + $0x310] sm:$0xc0] %vm575, %v3439
      %v3456 = vld [vmem:[%s3110] sm:$0x3]
      %v3457 = vld [vmem:[%s3110 + $0x2] sm:$0x3]
      %v3458 = vld [vmem:[%s3110 + $0x4] sm:$0x3]
      %v3459 = vld [vmem:[%s3110 + $0x6] sm:$0x3]
      %v3460 = vld [vmem:[%s3110 + $0x8] sm:$0x3]
      %v3461 = vld [vmem:[%s3110 + $0xa] sm:$0x3]
      %v3462 = vld [vmem:[%s3110 + $0xc] sm:$0x3]
      %v3463 = vld [vmem:[%s3110 + $0xe] sm:$0x3]
      %v3473 = vunpack.c.l.s4 1983009808
      %v3474 = vunpack.c.0.s8 %v3473
      %v3475 = vlaneseq
      %v3476 = vshrl.u32 %v3475, 7
      %v3477 = vsub.s32 %v3474, %v3476
      %v3478 = vrot.slane %v3456, %v3477
      %v3480 = vunpack.c.l.s4 1983009808
      %v3481 = vunpack.c.0.s8 %v3480
      %v3482 = vlaneseq
      %v3483 = vshrl.u32 %v3482, 7
      %v3484 = vsub.s32 %v3481, %v3483
      %v3485 = vrot.slane %v3457, %v3484
      %v3487 = vunpack.c.l.s4 1983009808
      %v3488 = vunpack.c.0.s8 %v3487
      %v3489 = vlaneseq
      %v3490 = vshrl.u32 %v3489, 7
      %v3491 = vsub.s32 %v3488, %v3490
      %v3492 = vrot.slane %v3458, %v3491
      %v3494 = vunpack.c.l.s4 1983009808
      %v3495 = vunpack.c.0.s8 %v3494
      %v3496 = vlaneseq
      %v3497 = vshrl.u32 %v3496, 7
      %v3498 = vsub.s32 %v3495, %v3497
      %v3499 = vrot.slane %v3459, %v3498
      %v3501 = vunpack.c.l.s4 1983009808
      %v3502 = vunpack.c.0.s8 %v3501
      %v3503 = vlaneseq
      %v3504 = vshrl.u32 %v3503, 7
      %v3505 = vsub.s32 %v3502, %v3504
      %v3506 = vrot.slane %v3460, %v3505
      %v3508 = vunpack.c.l.s4 1983009808
      %v3509 = vunpack.c.0.s8 %v3508
      %v3510 = vlaneseq
      %v3511 = vshrl.u32 %v3510, 7
      %v3512 = vsub.s32 %v3509, %v3511
      %v3513 = vrot.slane %v3461, %v3512
      %v3515 = vunpack.c.l.s4 1983009808
      %v3516 = vunpack.c.0.s8 %v3515
      %v3517 = vlaneseq
      %v3518 = vshrl.u32 %v3517, 7
      %v3519 = vsub.s32 %v3516, %v3518
      %v3520 = vrot.slane %v3462, %v3519
      %v3522 = vunpack.c.l.s4 1983009808
      %v3523 = vunpack.c.0.s8 %v3522
      %v3524 = vlaneseq
      %v3525 = vshrl.u32 %v3524, 7
      %v3526 = vsub.s32 %v3523, %v3525
      %v3527 = vrot.slane %v3463, %v3526
      %3528 = vrot.lane.b32.xlu0 %v3478, 126
      %v3529 = vpop.permute.xlu0 %3528
      %3530 = vrot.lane.b32.xlu0 %v3485, 126
      %v3531 = vpop.permute.xlu0 %3530
      %3532 = vrot.lane.b32.xlu0 %v3492, 126
      %v3533 = vpop.permute.xlu0 %3532
      %3534 = vrot.lane.b32.xlu0 %v3499, 126
      %v3535 = vpop.permute.xlu0 %3534
      %3536 = vrot.lane.b32.xlu0 %v3506, 126
      %v3537 = vpop.permute.xlu0 %3536
      %3538 = vrot.lane.b32.xlu0 %v3513, 126
      %v3539 = vpop.permute.xlu0 %3538
      %3540 = vrot.lane.b32.xlu0 %v3520, 126
      %v3541 = vpop.permute.xlu0 %3540
      %3542 = vrot.lane.b32.xlu0 %v3527, 126
      %v3543 = vpop.permute.xlu0 %3542
      %3552 = vst.msk [vmem:[#allocation2 + $0x40] sm:$0x3] %vm243, %v3529
      %3553 = vst.msk [vmem:[#allocation2 + $0xa8] sm:$0x3] %vm243, %v3531
      %3554 = vst.msk [vmem:[#allocation2 + $0x110] sm:$0x3] %vm243, %v3533
      %3555 = vst.msk [vmem:[#allocation2 + $0x178] sm:$0x3] %vm243, %v3535
      %3556 = vst.msk [vmem:[#allocation2 + $0x1e0] sm:$0x3] %vm243, %v3537
      %3557 = vst.msk [vmem:[#allocation2 + $0x248] sm:$0x3] %vm243, %v3539
      %3558 = vst.msk [vmem:[#allocation2 + $0x2b0] sm:$0x3] %vm243, %v3541
      %3559 = vst.msk [vmem:[#allocation2 + $0x318] sm:$0x3] %vm243, %v3543
      %v3560 = vld [vmem:[%s3127] sm:$0x3]
      %v3561 = vld [vmem:[%s3127 + $0x2] sm:$0x3]
      %v3562 = vld [vmem:[%s3127 + $0x4] sm:$0x3]
      %v3563 = vld [vmem:[%s3127 + $0x6] sm:$0x3]
      %v3564 = vld [vmem:[%s3127 + $0x8] sm:$0x3]
      %v3565 = vld [vmem:[%s3127 + $0xa] sm:$0x3]
      %v3566 = vld [vmem:[%s3127 + $0xc] sm:$0x3]
      %v3567 = vld [vmem:[%s3127 + $0xe] sm:$0x3]
      %v3576 = vcombine.low %v3560, %v3560
      %v3578 = vunpack.c.l.s4 1983009808
      %v3579 = vunpack.c.0.s8 %v3578
      %v3580 = vlaneseq
      %v3581 = vshrl.u32 %v3580, 7
      %v3582 = vsub.s32 %v3579, %v3581
      %v3583 = vrot.slane %v3576, %v3582
      %v3584 = vcombine.low %v3561, %v3561
      %v3586 = vunpack.c.l.s4 1983009808
      %v3587 = vunpack.c.0.s8 %v3586
      %v3588 = vlaneseq
      %v3589 = vshrl.u32 %v3588, 7
      %v3590 = vsub.s32 %v3587, %v3589
      %v3591 = vrot.slane %v3584, %v3590
      %v3592 = vcombine.low %v3562, %v3562
      %v3594 = vunpack.c.l.s4 1983009808
      %v3595 = vunpack.c.0.s8 %v3594
      %v3596 = vlaneseq
      %v3597 = vshrl.u32 %v3596, 7
      %v3598 = vsub.s32 %v3595, %v3597
      %v3599 = vrot.slane %v3592, %v3598
      %v3600 = vcombine.low %v3563, %v3563
      %v3602 = vunpack.c.l.s4 1983009808
      %v3603 = vunpack.c.0.s8 %v3602
      %v3604 = vlaneseq
      %v3605 = vshrl.u32 %v3604, 7
      %v3606 = vsub.s32 %v3603, %v3605
      %v3607 = vrot.slane %v3600, %v3606
      %v3608 = vcombine.low %v3564, %v3564
      %v3610 = vunpack.c.l.s4 1983009808
      %v3611 = vunpack.c.0.s8 %v3610
      %v3612 = vlaneseq
      %v3613 = vshrl.u32 %v3612, 7
      %v3614 = vsub.s32 %v3611, %v3613
      %v3615 = vrot.slane %v3608, %v3614
      %v3616 = vcombine.low %v3565, %v3565
      %v3618 = vunpack.c.l.s4 1983009808
      %v3619 = vunpack.c.0.s8 %v3618
      %v3620 = vlaneseq
      %v3621 = vshrl.u32 %v3620, 7
      %v3622 = vsub.s32 %v3619, %v3621
      %v3623 = vrot.slane %v3616, %v3622
      %v3624 = vcombine.low %v3566, %v3566
      %v3626 = vunpack.c.l.s4 1983009808
      %v3627 = vunpack.c.0.s8 %v3626
      %v3628 = vlaneseq
      %v3629 = vshrl.u32 %v3628, 7
      %v3630 = vsub.s32 %v3627, %v3629
      %v3631 = vrot.slane %v3624, %v3630
      %v3632 = vcombine.low %v3567, %v3567
      %v3634 = vunpack.c.l.s4 1983009808
      %v3635 = vunpack.c.0.s8 %v3634
      %v3636 = vlaneseq
      %v3637 = vshrl.u32 %v3636, 7
      %v3638 = vsub.s32 %v3635, %v3637
      %v3639 = vrot.slane %v3632, %v3638
      %3640 = vrot.lane.b32.xlu0 %v3583, 126
      %v3641 = vpop.permute.xlu0 %3640
      %3642 = vrot.lane.b32.xlu0 %v3591, 126
      %v3643 = vpop.permute.xlu0 %3642
      %3644 = vrot.lane.b32.xlu0 %v3599, 126
      %v3645 = vpop.permute.xlu0 %3644
      %3646 = vrot.lane.b32.xlu0 %v3607, 126
      %v3647 = vpop.permute.xlu0 %3646
      %3648 = vrot.lane.b32.xlu0 %v3615, 126
      %v3649 = vpop.permute.xlu0 %3648
      %3650 = vrot.lane.b32.xlu0 %v3623, 126
      %v3651 = vpop.permute.xlu0 %3650
      %3652 = vrot.lane.b32.xlu0 %v3631, 126
      %v3653 = vpop.permute.xlu0 %3652
      %3654 = vrot.lane.b32.xlu0 %v3639, 126
      %v3655 = vpop.permute.xlu0 %3654
      %3664 = vst.msk [vmem:[#allocation2 + $0x40] sm:$0xc] %vm341, %v3641
      %3665 = vst.msk [vmem:[#allocation2 + $0xa8] sm:$0xc] %vm341, %v3643
      %3666 = vst.msk [vmem:[#allocation2 + $0x110] sm:$0xc] %vm341, %v3645
      %3667 = vst.msk [vmem:[#allocation2 + $0x178] sm:$0xc] %vm341, %v3647
      %3668 = vst.msk [vmem:[#allocation2 + $0x1e0] sm:$0xc] %vm341, %v3649
      %3669 = vst.msk [vmem:[#allocation2 + $0x248] sm:$0xc] %vm341, %v3651
      %3670 = vst.msk [vmem:[#allocation2 + $0x2b0] sm:$0xc] %vm341, %v3653
      %3671 = vst.msk [vmem:[#allocation2 + $0x318] sm:$0xc] %vm341, %v3655
      %v3672 = vld [vmem:[%s3110] sm:$0x3]
      %v3673 = vld [vmem:[%s3110 + $0x2] sm:$0x3]
      %v3674 = vld [vmem:[%s3110 + $0x4] sm:$0x3]
      %v3675 = vld [vmem:[%s3110 + $0x6] sm:$0x3]
      %v3676 = vld [vmem:[%s3110 + $0x8] sm:$0x3]
      %v3677 = vld [vmem:[%s3110 + $0xa] sm:$0x3]
      %v3678 = vld [vmem:[%s3110 + $0xc] sm:$0x3]
      %v3679 = vld [vmem:[%s3110 + $0xe] sm:$0x3]
      %v3689 = vunpack.c.l.s4 1983009808
      %v3690 = vunpack.c.0.s8 %v3689
      %v3691 = vlaneseq
      %v3692 = vshrl.u32 %v3691, 7
      %v3693 = vsub.s32 %v3690, %v3692
      %v3694 = vrot.slane %v3672, %v3693
      %v3695 = vcombine.low %v3694, %v3694
      %v3697 = vunpack.c.l.s4 1983009808
      %v3698 = vunpack.c.0.s8 %v3697
      %v3699 = vlaneseq
      %v3700 = vshrl.u32 %v3699, 7
      %v3701 = vsub.s32 %v3698, %v3700
      %v3702 = vrot.slane %v3673, %v3701
      %v3703 = vcombine.low %v3702, %v3702
      %v3705 = vunpack.c.l.s4 1983009808
      %v3706 = vunpack.c.0.s8 %v3705
      %v3707 = vlaneseq
      %v3708 = vshrl.u32 %v3707, 7
      %v3709 = vsub.s32 %v3706, %v3708
      %v3710 = vrot.slane %v3674, %v3709
      %v3711 = vcombine.low %v3710, %v3710
      %v3713 = vunpack.c.l.s4 1983009808
      %v3714 = vunpack.c.0.s8 %v3713
      %v3715 = vlaneseq
      %v3716 = vshrl.u32 %v3715, 7
      %v3717 = vsub.s32 %v3714, %v3716
      %v3718 = vrot.slane %v3675, %v3717
      %v3719 = vcombine.low %v3718, %v3718
      %v3721 = vunpack.c.l.s4 1983009808
      %v3722 = vunpack.c.0.s8 %v3721
      %v3723 = vlaneseq
      %v3724 = vshrl.u32 %v3723, 7
      %v3725 = vsub.s32 %v3722, %v3724
      %v3726 = vrot.slane %v3676, %v3725
      %v3727 = vcombine.low %v3726, %v3726
      %v3729 = vunpack.c.l.s4 1983009808
      %v3730 = vunpack.c.0.s8 %v3729
      %v3731 = vlaneseq
      %v3732 = vshrl.u32 %v3731, 7
      %v3733 = vsub.s32 %v3730, %v3732
      %v3734 = vrot.slane %v3677, %v3733
      %v3735 = vcombine.low %v3734, %v3734
      %v3737 = vunpack.c.l.s4 1983009808
      %v3738 = vunpack.c.0.s8 %v3737
      %v3739 = vlaneseq
      %v3740 = vshrl.u32 %v3739, 7
      %v3741 = vsub.s32 %v3738, %v3740
      %v3742 = vrot.slane %v3678, %v3741
      %v3743 = vcombine.low %v3742, %v3742
      %v3745 = vunpack.c.l.s4 1983009808
      %v3746 = vunpack.c.0.s8 %v3745
      %v3747 = vlaneseq
      %v3748 = vshrl.u32 %v3747, 7
      %v3749 = vsub.s32 %v3746, %v3748
      %v3750 = vrot.slane %v3679, %v3749
      %v3751 = vcombine.low %v3750, %v3750
      %3752 = vrot.lane.b32.xlu0 %v3695, 125
      %v3753 = vpop.permute.xlu0 %3752
      %3754 = vrot.lane.b32.xlu0 %v3703, 125
      %v3755 = vpop.permute.xlu0 %3754
      %3756 = vrot.lane.b32.xlu0 %v3711, 125
      %v3757 = vpop.permute.xlu0 %3756
      %3758 = vrot.lane.b32.xlu0 %v3719, 125
      %v3759 = vpop.permute.xlu0 %3758
      %3760 = vrot.lane.b32.xlu0 %v3727, 125
      %v3761 = vpop.permute.xlu0 %3760
      %3762 = vrot.lane.b32.xlu0 %v3735, 125
      %v3763 = vpop.permute.xlu0 %3762
      %3764 = vrot.lane.b32.xlu0 %v3743, 125
      %v3765 = vpop.permute.xlu0 %3764
      %3766 = vrot.lane.b32.xlu0 %v3751, 125
      %v3767 = vpop.permute.xlu0 %3766
      %3776 = vst.msk [vmem:[#allocation2 + $0x40] sm:$0x30] %vm454, %v3753
      %3777 = vst.msk [vmem:[#allocation2 + $0xa8] sm:$0x30] %vm454, %v3755
      %3778 = vst.msk [vmem:[#allocation2 + $0x110] sm:$0x30] %vm454, %v3757
      %3779 = vst.msk [vmem:[#allocation2 + $0x178] sm:$0x30] %vm454, %v3759
      %3780 = vst.msk [vmem:[#allocation2 + $0x1e0] sm:$0x30] %vm454, %v3761
      %3781 = vst.msk [vmem:[#allocation2 + $0x248] sm:$0x30] %vm454, %v3763
      %3782 = vst.msk [vmem:[#allocation2 + $0x2b0] sm:$0x30] %vm454, %v3765
      %3783 = vst.msk [vmem:[#allocation2 + $0x318] sm:$0x30] %vm454, %v3767
      %s3784 = scalar_lea.vmem %s219, 48
      %v3785 = vld [vmem:[%s3784] sm:$0x3]
      %v3786 = vld [vmem:[%s3784 + $0x2] sm:$0x3]
      %v3787 = vld [vmem:[%s3784 + $0x4] sm:$0x3]
      %v3788 = vld [vmem:[%s3784 + $0x6] sm:$0x3]
      %v3789 = vld [vmem:[%s3784 + $0x8] sm:$0x3]
      %v3790 = vld [vmem:[%s3784 + $0xa] sm:$0x3]
      %v3791 = vld [vmem:[%s3784 + $0xc] sm:$0x3]
      %v3792 = vld [vmem:[%s3784 + $0xe] sm:$0x3]
      %v3801 = vcombine.low %v3785, %v3785
      %v3803 = vunpack.c.l.s4 1983009808
      %v3804 = vunpack.c.0.s8 %v3803
      %v3805 = vlaneseq
      %v3806 = vshrl.u32 %v3805, 7
      %v3807 = vsub.s32 %v3804, %v3806
      %v3808 = vrot.slane %v3801, %v3807
      %v3809 = vcombine.low %v3808, %v3808
      %v3810 = vcombine.low %v3786, %v3786
      %v3812 = vunpack.c.l.s4 1983009808
      %v3813 = vunpack.c.0.s8 %v3812
      %v3814 = vlaneseq
      %v3815 = vshrl.u32 %v3814, 7
      %v3816 = vsub.s32 %v3813, %v3815
      %v3817 = vrot.slane %v3810, %v3816
      %v3818 = vcombine.low %v3817, %v3817
      %v3819 = vcombine.low %v3787, %v3787
      %v3821 = vunpack.c.l.s4 1983009808
      %v3822 = vunpack.c.0.s8 %v3821
      %v3823 = vlaneseq
      %v3824 = vshrl.u32 %v3823, 7
      %v3825 = vsub.s32 %v3822, %v3824
      %v3826 = vrot.slane %v3819, %v3825
      %v3827 = vcombine.low %v3826, %v3826
      %v3828 = vcombine.low %v3788, %v3788
      %v3830 = vunpack.c.l.s4 1983009808
      %v3831 = vunpack.c.0.s8 %v3830
      %v3832 = vlaneseq
      %v3833 = vshrl.u32 %v3832, 7
      %v3834 = vsub.s32 %v3831, %v3833
      %v3835 = vrot.slane %v3828, %v3834
      %v3836 = vcombine.low %v3835, %v3835
      %v3837 = vcombine.low %v3789, %v3789
      %v3839 = vunpack.c.l.s4 1983009808
      %v3840 = vunpack.c.0.s8 %v3839
      %v3841 = vlaneseq
      %v3842 = vshrl.u32 %v3841, 7
      %v3843 = vsub.s32 %v3840, %v3842
      %v3844 = vrot.slane %v3837, %v3843
      %v3845 = vcombine.low %v3844, %v3844
      %v3846 = vcombine.low %v3790, %v3790
      %v3848 = vunpack.c.l.s4 1983009808
      %v3849 = vunpack.c.0.s8 %v3848
      %v3850 = vlaneseq
      %v3851 = vshrl.u32 %v3850, 7
      %v3852 = vsub.s32 %v3849, %v3851
      %v3853 = vrot.slane %v3846, %v3852
      %v3854 = vcombine.low %v3853, %v3853
      %v3855 = vcombine.low %v3791, %v3791
      %v3857 = vunpack.c.l.s4 1983009808
      %v3858 = vunpack.c.0.s8 %v3857
      %v3859 = vlaneseq
      %v3860 = vshrl.u32 %v3859, 7
      %v3861 = vsub.s32 %v3858, %v3860
      %v3862 = vrot.slane %v3855, %v3861
      %v3863 = vcombine.low %v3862, %v3862
      %v3864 = vcombine.low %v3792, %v3792
      %v3866 = vunpack.c.l.s4 1983009808
      %v3867 = vunpack.c.0.s8 %v3866
      %v3868 = vlaneseq
      %v3869 = vshrl.u32 %v3868, 7
      %v3870 = vsub.s32 %v3867, %v3869
      %v3871 = vrot.slane %v3864, %v3870
      %v3872 = vcombine.low %v3871, %v3871
      %3881 = vst.msk [vmem:[#allocation2 + $0x40] sm:$0xc0] %vm575, %v3809
      %3882 = vst.msk [vmem:[#allocation2 + $0xa8] sm:$0xc0] %vm575, %v3818
      %3883 = vst.msk [vmem:[#allocation2 + $0x110] sm:$0xc0] %vm575, %v3827
      %3884 = vst.msk [vmem:[#allocation2 + $0x178] sm:$0xc0] %vm575, %v3836
      %3885 = vst.msk [vmem:[#allocation2 + $0x1e0] sm:$0xc0] %vm575, %v3845
      %3886 = vst.msk [vmem:[#allocation2 + $0x248] sm:$0xc0] %vm575, %v3854
      %3887 = vst.msk [vmem:[#allocation2 + $0x2b0] sm:$0xc0] %vm575, %v3863
      %3888 = vst.msk [vmem:[#allocation2 + $0x318] sm:$0xc0] %vm575, %v3872
      %s3889 = scalar_lea.vmem %s219, 70
      %v3890 = vld [vmem:[%s3889] sm:$0x3]
      %v3891 = vld [vmem:[%s3889 + $0x2] sm:$0x3]
      %v3892 = vld [vmem:[%s3889 + $0x4] sm:$0x3]
      %v3893 = vld [vmem:[%s3889 + $0x6] sm:$0x3]
      %v3894 = vld [vmem:[%s3889 + $0x8] sm:$0x3]
      %v3895 = vld [vmem:[%s3889 + $0xa] sm:$0x3]
      %v3896 = vld [vmem:[%s3889 + $0xc] sm:$0x3]
      %v3897 = vld [vmem:[%s3889 + $0xe] sm:$0x3]
      %3898 = vst.msk [vmem:[#allocation2 + $0x48] sm:$0x3] %vm243, %v3890
      %3899 = vst.msk [vmem:[#allocation2 + $0xb0] sm:$0x3] %vm243, %v3891
      %3900 = vst.msk [vmem:[#allocation2 + $0x118] sm:$0x3] %vm243, %v3892
      %3901 = vst.msk [vmem:[#allocation2 + $0x180] sm:$0x3] %vm243, %v3893
      %3902 = vst.msk [vmem:[#allocation2 + $0x1e8] sm:$0x3] %vm243, %v3894
      %3903 = vst.msk [vmem:[#allocation2 + $0x250] sm:$0x3] %vm243, %v3895
      %3904 = vst.msk [vmem:[#allocation2 + $0x2b8] sm:$0x3] %vm243, %v3896
      %3905 = vst.msk [vmem:[#allocation2 + $0x320] sm:$0x3] %vm243, %v3897
      %v3906 = vld [vmem:[%s3784] sm:$0x3]
      %v3907 = vld [vmem:[%s3784 + $0x2] sm:$0x3]
      %v3908 = vld [vmem:[%s3784 + $0x4] sm:$0x3]
      %v3909 = vld [vmem:[%s3784 + $0x6] sm:$0x3]
      %v3910 = vld [vmem:[%s3784 + $0x8] sm:$0x3]
      %v3911 = vld [vmem:[%s3784 + $0xa] sm:$0x3]
      %v3912 = vld [vmem:[%s3784 + $0xc] sm:$0x3]
      %v3913 = vld [vmem:[%s3784 + $0xe] sm:$0x3]
      %v3922 = vcombine.low %v3906, %v3906
      %v3924 = vunpack.c.l.s4 1983009808
      %v3925 = vunpack.c.0.s8 %v3924
      %v3926 = vlaneseq
      %v3927 = vshrl.u32 %v3926, 7
      %v3928 = vsub.s32 %v3925, %v3927
      %v3929 = vrot.slane %v3922, %v3928
      %v3930 = vcombine.low %v3907, %v3907
      %v3932 = vunpack.c.l.s4 1983009808
      %v3933 = vunpack.c.0.s8 %v3932
      %v3934 = vlaneseq
      %v3935 = vshrl.u32 %v3934, 7
      %v3936 = vsub.s32 %v3933, %v3935
      %v3937 = vrot.slane %v3930, %v3936
      %v3938 = vcombine.low %v3908, %v3908
      %v3940 = vunpack.c.l.s4 1983009808
      %v3941 = vunpack.c.0.s8 %v3940
      %v3942 = vlaneseq
      %v3943 = vshrl.u32 %v3942, 7
      %v3944 = vsub.s32 %v3941, %v3943
      %v3945 = vrot.slane %v3938, %v3944
      %v3946 = vcombine.low %v3909, %v3909
      %v3948 = vunpack.c.l.s4 1983009808
      %v3949 = vunpack.c.0.s8 %v3948
      %v3950 = vlaneseq
      %v3951 = vshrl.u32 %v3950, 7
      %v3952 = vsub.s32 %v3949, %v3951
      %v3953 = vrot.slane %v3946, %v3952
      %v3954 = vcombine.low %v3910, %v3910
      %v3956 = vunpack.c.l.s4 1983009808
      %v3957 = vunpack.c.0.s8 %v3956
      %v3958 = vlaneseq
      %v3959 = vshrl.u32 %v3958, 7
      %v3960 = vsub.s32 %v3957, %v3959
      %v3961 = vrot.slane %v3954, %v3960
      %v3962 = vcombine.low %v3911, %v3911
      %v3964 = vunpack.c.l.s4 1983009808
      %v3965 = vunpack.c.0.s8 %v3964
      %v3966 = vlaneseq
      %v3967 = vshrl.u32 %v3966, 7
      %v3968 = vsub.s32 %v3965, %v3967
      %v3969 = vrot.slane %v3962, %v3968
      %v3970 = vcombine.low %v3912, %v3912
      %v3972 = vunpack.c.l.s4 1983009808
      %v3973 = vunpack.c.0.s8 %v3972
      %v3974 = vlaneseq
      %v3975 = vshrl.u32 %v3974, 7
      %v3976 = vsub.s32 %v3973, %v3975
      %v3977 = vrot.slane %v3970, %v3976
      %v3978 = vcombine.low %v3913, %v3913
      %v3980 = vunpack.c.l.s4 1983009808
      %v3981 = vunpack.c.0.s8 %v3980
      %v3982 = vlaneseq
      %v3983 = vshrl.u32 %v3982, 7
      %v3984 = vsub.s32 %v3981, %v3983
      %v3985 = vrot.slane %v3978, %v3984
      %3986 = vrot.lane.b32.xlu0 %v3929, 127
      %v3987 = vpop.permute.xlu0 %3986
      %3988 = vrot.lane.b32.xlu0 %v3937, 127
      %v3989 = vpop.permute.xlu0 %3988
      %3990 = vrot.lane.b32.xlu0 %v3945, 127
      %v3991 = vpop.permute.xlu0 %3990
      %3992 = vrot.lane.b32.xlu0 %v3953, 127
      %v3993 = vpop.permute.xlu0 %3992
      %3994 = vrot.lane.b32.xlu0 %v3961, 127
      %v3995 = vpop.permute.xlu0 %3994
      %3996 = vrot.lane.b32.xlu0 %v3969, 127
      %v3997 = vpop.permute.xlu0 %3996
      %3998 = vrot.lane.b32.xlu0 %v3977, 127
      %v3999 = vpop.permute.xlu0 %3998
      %4000 = vrot.lane.b32.xlu0 %v3985, 127
      %v4001 = vpop.permute.xlu0 %4000
      %4010 = vst.msk [vmem:[#allocation2 + $0x48] sm:$0xc] %vm341, %v3987
      %4011 = vst.msk [vmem:[#allocation2 + $0xb0] sm:$0xc] %vm341, %v3989
      %4012 = vst.msk [vmem:[#allocation2 + $0x118] sm:$0xc] %vm341, %v3991
      %4013 = vst.msk [vmem:[#allocation2 + $0x180] sm:$0xc] %vm341, %v3993
      %4014 = vst.msk [vmem:[#allocation2 + $0x1e8] sm:$0xc] %vm341, %v3995
      %4015 = vst.msk [vmem:[#allocation2 + $0x250] sm:$0xc] %vm341, %v3997
      %4016 = vst.msk [vmem:[#allocation2 + $0x2b8] sm:$0xc] %vm341, %v3999
      %4017 = vst.msk [vmem:[#allocation2 + $0x320] sm:$0xc] %vm341, %v4001
      %v4018 = vld [vmem:[%s3889] sm:$0x3]
      %v4019 = vld [vmem:[%s3889 + $0x2] sm:$0x3]
      %v4020 = vld [vmem:[%s3889 + $0x4] sm:$0x3]
      %v4021 = vld [vmem:[%s3889 + $0x6] sm:$0x3]
      %v4022 = vld [vmem:[%s3889 + $0x8] sm:$0x3]
      %v4023 = vld [vmem:[%s3889 + $0xa] sm:$0x3]
      %v4024 = vld [vmem:[%s3889 + $0xc] sm:$0x3]
      %v4025 = vld [vmem:[%s3889 + $0xe] sm:$0x3]
      %v4035 = vunpack.c.l.s4 1983009808
      %v4036 = vunpack.c.0.s8 %v4035
      %v4037 = vlaneseq
      %v4038 = vshrl.u32 %v4037, 7
      %v4039 = vsub.s32 %v4036, %v4038
      %v4040 = vrot.slane %v4018, %v4039
      %v4041 = vcombine.low %v4040, %v4040
      %v4043 = vunpack.c.l.s4 1983009808
      %v4044 = vunpack.c.0.s8 %v4043
      %v4045 = vlaneseq
      %v4046 = vshrl.u32 %v4045, 7
      %v4047 = vsub.s32 %v4044, %v4046
      %v4048 = vrot.slane %v4019, %v4047
      %v4049 = vcombine.low %v4048, %v4048
      %v4051 = vunpack.c.l.s4 1983009808
      %v4052 = vunpack.c.0.s8 %v4051
      %v4053 = vlaneseq
      %v4054 = vshrl.u32 %v4053, 7
      %v4055 = vsub.s32 %v4052, %v4054
      %v4056 = vrot.slane %v4020, %v4055
      %v4057 = vcombine.low %v4056, %v4056
      %v4059 = vunpack.c.l.s4 1983009808
      %v4060 = vunpack.c.0.s8 %v4059
      %v4061 = vlaneseq
      %v4062 = vshrl.u32 %v4061, 7
      %v4063 = vsub.s32 %v4060, %v4062
      %v4064 = vrot.slane %v4021, %v4063
      %v4065 = vcombine.low %v4064, %v4064
      %v4067 = vunpack.c.l.s4 1983009808
      %v4068 = vunpack.c.0.s8 %v4067
      %v4069 = vlaneseq
      %v4070 = vshrl.u32 %v4069, 7
      %v4071 = vsub.s32 %v4068, %v4070
      %v4072 = vrot.slane %v4022, %v4071
      %v4073 = vcombine.low %v4072, %v4072
      %v4075 = vunpack.c.l.s4 1983009808
      %v4076 = vunpack.c.0.s8 %v4075
      %v4077 = vlaneseq
      %v4078 = vshrl.u32 %v4077, 7
      %v4079 = vsub.s32 %v4076, %v4078
      %v4080 = vrot.slane %v4023, %v4079
      %v4081 = vcombine.low %v4080, %v4080
      %v4083 = vunpack.c.l.s4 1983009808
      %v4084 = vunpack.c.0.s8 %v4083
      %v4085 = vlaneseq
      %v4086 = vshrl.u32 %v4085, 7
      %v4087 = vsub.s32 %v4084, %v4086
      %v4088 = vrot.slane %v4024, %v4087
      %v4089 = vcombine.low %v4088, %v4088
      %v4091 = vunpack.c.l.s4 1983009808
      %v4092 = vunpack.c.0.s8 %v4091
      %v4093 = vlaneseq
      %v4094 = vshrl.u32 %v4093, 7
      %v4095 = vsub.s32 %v4092, %v4094
      %v4096 = vrot.slane %v4025, %v4095
      %v4097 = vcombine.low %v4096, %v4096
      %4098 = vrot.lane.b32.xlu0 %v4041, 127
      %v4099 = vpop.permute.xlu0 %4098
      %4100 = vrot.lane.b32.xlu0 %v4049, 127
      %v4101 = vpop.permute.xlu0 %4100
      %4102 = vrot.lane.b32.xlu0 %v4057, 127
      %v4103 = vpop.permute.xlu0 %4102
      %4104 = vrot.lane.b32.xlu0 %v4065, 127
      %v4105 = vpop.permute.xlu0 %4104
      %4106 = vrot.lane.b32.xlu0 %v4073, 127
      %v4107 = vpop.permute.xlu0 %4106
      %4108 = vrot.lane.b32.xlu0 %v4081, 127
      %v4109 = vpop.permute.xlu0 %4108
      %4110 = vrot.lane.b32.xlu0 %v4089, 127
      %v4111 = vpop.permute.xlu0 %4110
      %4112 = vrot.lane.b32.xlu0 %v4097, 127
      %v4113 = vpop.permute.xlu0 %4112
      %4122 = vst.msk [vmem:[#allocation2 + $0x48] sm:$0x30] %vm454, %v4099
      %4123 = vst.msk [vmem:[#allocation2 + $0xb0] sm:$0x30] %vm454, %v4101
      %4124 = vst.msk [vmem:[#allocation2 + $0x118] sm:$0x30] %vm454, %v4103
      %4125 = vst.msk [vmem:[#allocation2 + $0x180] sm:$0x30] %vm454, %v4105
      %4126 = vst.msk [vmem:[#allocation2 + $0x1e8] sm:$0x30] %vm454, %v4107
      %4127 = vst.msk [vmem:[#allocation2 + $0x250] sm:$0x30] %vm454, %v4109
      %4128 = vst.msk [vmem:[#allocation2 + $0x2b8] sm:$0x30] %vm454, %v4111
      %4129 = vst.msk [vmem:[#allocation2 + $0x320] sm:$0x30] %vm454, %v4113
      %v4130 = vld [vmem:[%s3784] sm:$0x3]
      %v4131 = vld [vmem:[%s3784 + $0x2] sm:$0x3]
      %v4132 = vld [vmem:[%s3784 + $0x4] sm:$0x3]
      %v4133 = vld [vmem:[%s3784 + $0x6] sm:$0x3]
      %v4134 = vld [vmem:[%s3784 + $0x8] sm:$0x3]
      %v4135 = vld [vmem:[%s3784 + $0xa] sm:$0x3]
      %v4136 = vld [vmem:[%s3784 + $0xc] sm:$0x3]
      %v4137 = vld [vmem:[%s3784 + $0xe] sm:$0x3]
      %v4146 = vcombine.low %v4130, %v4130
      %v4148 = vunpack.c.l.s4 1983009808
      %v4149 = vunpack.c.0.s8 %v4148
      %v4150 = vlaneseq
      %v4151 = vshrl.u32 %v4150, 7
      %v4152 = vsub.s32 %v4149, %v4151
      %v4153 = vrot.slane %v4146, %v4152
      %v4154 = vcombine.low %v4153, %v4153
      %v4155 = vcombine.low %v4131, %v4131
      %v4157 = vunpack.c.l.s4 1983009808
      %v4158 = vunpack.c.0.s8 %v4157
      %v4159 = vlaneseq
      %v4160 = vshrl.u32 %v4159, 7
      %v4161 = vsub.s32 %v4158, %v4160
      %v4162 = vrot.slane %v4155, %v4161
      %v4163 = vcombine.low %v4162, %v4162
      %v4164 = vcombine.low %v4132, %v4132
      %v4166 = vunpack.c.l.s4 1983009808
      %v4167 = vunpack.c.0.s8 %v4166
      %v4168 = vlaneseq
      %v4169 = vshrl.u32 %v4168, 7
      %v4170 = vsub.s32 %v4167, %v4169
      %v4171 = vrot.slane %v4164, %v4170
      %v4172 = vcombine.low %v4171, %v4171
      %v4173 = vcombine.low %v4133, %v4133
      %v4175 = vunpack.c.l.s4 1983009808
      %v4176 = vunpack.c.0.s8 %v4175
      %v4177 = vlaneseq
      %v4178 = vshrl.u32 %v4177, 7
      %v4179 = vsub.s32 %v4176, %v4178
      %v4180 = vrot.slane %v4173, %v4179
      %v4181 = vcombine.low %v4180, %v4180
      %v4182 = vcombine.low %v4134, %v4134
      %v4184 = vunpack.c.l.s4 1983009808
      %v4185 = vunpack.c.0.s8 %v4184
      %v4186 = vlaneseq
      %v4187 = vshrl.u32 %v4186, 7
      %v4188 = vsub.s32 %v4185, %v4187
      %v4189 = vrot.slane %v4182, %v4188
      %v4190 = vcombine.low %v4189, %v4189
      %v4191 = vcombine.low %v4135, %v4135
      %v4193 = vunpack.c.l.s4 1983009808
      %v4194 = vunpack.c.0.s8 %v4193
      %v4195 = vlaneseq
      %v4196 = vshrl.u32 %v4195, 7
      %v4197 = vsub.s32 %v4194, %v4196
      %v4198 = vrot.slane %v4191, %v4197
      %v4199 = vcombine.low %v4198, %v4198
      %v4200 = vcombine.low %v4136, %v4136
      %v4202 = vunpack.c.l.s4 1983009808
      %v4203 = vunpack.c.0.s8 %v4202
      %v4204 = vlaneseq
      %v4205 = vshrl.u32 %v4204, 7
      %v4206 = vsub.s32 %v4203, %v4205
      %v4207 = vrot.slane %v4200, %v4206
      %v4208 = vcombine.low %v4207, %v4207
      %v4209 = vcombine.low %v4137, %v4137
      %v4211 = vunpack.c.l.s4 1983009808
      %v4212 = vunpack.c.0.s8 %v4211
      %v4213 = vlaneseq
      %v4214 = vshrl.u32 %v4213, 7
      %v4215 = vsub.s32 %v4212, %v4214
      %v4216 = vrot.slane %v4209, %v4215
      %v4217 = vcombine.low %v4216, %v4216
      %4218 = vrot.lane.b32.xlu0 %v4154, 126
      %v4219 = vpop.permute.xlu0 %4218
      %4220 = vrot.lane.b32.xlu0 %v4163, 126
      %v4221 = vpop.permute.xlu0 %4220
      %4222 = vrot.lane.b32.xlu0 %v4172, 126
      %v4223 = vpop.permute.xlu0 %4222
      %4224 = vrot.lane.b32.xlu0 %v4181, 126
      %v4225 = vpop.permute.xlu0 %4224
      %4226 = vrot.lane.b32.xlu0 %v4190, 126
      %v4227 = vpop.permute.xlu0 %4226
      %4228 = vrot.lane.b32.xlu0 %v4199, 126
      %v4229 = vpop.permute.xlu0 %4228
      %4230 = vrot.lane.b32.xlu0 %v4208, 126
      %v4231 = vpop.permute.xlu0 %4230
      %4232 = vrot.lane.b32.xlu0 %v4217, 126
      %v4233 = vpop.permute.xlu0 %4232
      %4242 = vst.msk [vmem:[#allocation2 + $0x48] sm:$0xc0] %vm575, %v4219
      %4243 = vst.msk [vmem:[#allocation2 + $0xb0] sm:$0xc0] %vm575, %v4221
      %4244 = vst.msk [vmem:[#allocation2 + $0x118] sm:$0xc0] %vm575, %v4223
      %4245 = vst.msk [vmem:[#allocation2 + $0x180] sm:$0xc0] %vm575, %v4225
      %4246 = vst.msk [vmem:[#allocation2 + $0x1e8] sm:$0xc0] %vm575, %v4227
      %4247 = vst.msk [vmem:[#allocation2 + $0x250] sm:$0xc0] %vm575, %v4229
      %4248 = vst.msk [vmem:[#allocation2 + $0x2b8] sm:$0xc0] %vm575, %v4231
      %4249 = vst.msk [vmem:[#allocation2 + $0x320] sm:$0xc0] %vm575, %v4233
      %v4250 = vld [vmem:[%s3889] sm:$0x3]
      %v4251 = vld [vmem:[%s3889 + $0x2] sm:$0x3]
      %v4252 = vld [vmem:[%s3889 + $0x4] sm:$0x3]
      %v4253 = vld [vmem:[%s3889 + $0x6] sm:$0x3]
      %v4254 = vld [vmem:[%s3889 + $0x8] sm:$0x3]
      %v4255 = vld [vmem:[%s3889 + $0xa] sm:$0x3]
      %v4256 = vld [vmem:[%s3889 + $0xc] sm:$0x3]
      %v4257 = vld [vmem:[%s3889 + $0xe] sm:$0x3]
      %v4267 = vunpack.c.l.s4 1983009808
      %v4268 = vunpack.c.0.s8 %v4267
      %v4269 = vlaneseq
      %v4270 = vshrl.u32 %v4269, 7
      %v4271 = vsub.s32 %v4268, %v4270
      %v4272 = vrot.slane %v4250, %v4271
      %v4274 = vunpack.c.l.s4 1983009808
      %v4275 = vunpack.c.0.s8 %v4274
      %v4276 = vlaneseq
      %v4277 = vshrl.u32 %v4276, 7
      %v4278 = vsub.s32 %v4275, %v4277
      %v4279 = vrot.slane %v4251, %v4278
      %v4281 = vunpack.c.l.s4 1983009808
      %v4282 = vunpack.c.0.s8 %v4281
      %v4283 = vlaneseq
      %v4284 = vshrl.u32 %v4283, 7
      %v4285 = vsub.s32 %v4282, %v4284
      %v4286 = vrot.slane %v4252, %v4285
      %v4288 = vunpack.c.l.s4 1983009808
      %v4289 = vunpack.c.0.s8 %v4288
      %v4290 = vlaneseq
      %v4291 = vshrl.u32 %v4290, 7
      %v4292 = vsub.s32 %v4289, %v4291
      %v4293 = vrot.slane %v4253, %v4292
      %v4295 = vunpack.c.l.s4 1983009808
      %v4296 = vunpack.c.0.s8 %v4295
      %v4297 = vlaneseq
      %v4298 = vshrl.u32 %v4297, 7
      %v4299 = vsub.s32 %v4296, %v4298
      %v4300 = vrot.slane %v4254, %v4299
      %v4302 = vunpack.c.l.s4 1983009808
      %v4303 = vunpack.c.0.s8 %v4302
      %v4304 = vlaneseq
      %v4305 = vshrl.u32 %v4304, 7
      %v4306 = vsub.s32 %v4303, %v4305
      %v4307 = vrot.slane %v4255, %v4306
      %v4309 = vunpack.c.l.s4 1983009808
      %v4310 = vunpack.c.0.s8 %v4309
      %v4311 = vlaneseq
      %v4312 = vshrl.u32 %v4311, 7
      %v4313 = vsub.s32 %v4310, %v4312
      %v4314 = vrot.slane %v4256, %v4313
      %v4316 = vunpack.c.l.s4 1983009808
      %v4317 = vunpack.c.0.s8 %v4316
      %v4318 = vlaneseq
      %v4319 = vshrl.u32 %v4318, 7
      %v4320 = vsub.s32 %v4317, %v4319
      %v4321 = vrot.slane %v4257, %v4320
      %4322 = vrot.lane.b32.xlu0 %v4272, 126
      %v4323 = vpop.permute.xlu0 %4322
      %4324 = vrot.lane.b32.xlu0 %v4279, 126
      %v4325 = vpop.permute.xlu0 %4324
      %4326 = vrot.lane.b32.xlu0 %v4286, 126
      %v4327 = vpop.permute.xlu0 %4326
      %4328 = vrot.lane.b32.xlu0 %v4293, 126
      %v4329 = vpop.permute.xlu0 %4328
      %4330 = vrot.lane.b32.xlu0 %v4300, 126
      %v4331 = vpop.permute.xlu0 %4330
      %4332 = vrot.lane.b32.xlu0 %v4307, 126
      %v4333 = vpop.permute.xlu0 %4332
      %4334 = vrot.lane.b32.xlu0 %v4314, 126
      %v4335 = vpop.permute.xlu0 %4334
      %4336 = vrot.lane.b32.xlu0 %v4321, 126
      %v4337 = vpop.permute.xlu0 %4336
      %4346 = vst.msk [vmem:[#allocation2 + $0x50] sm:$0x3] %vm243, %v4323
      %4347 = vst.msk [vmem:[#allocation2 + $0xb8] sm:$0x3] %vm243, %v4325
      %4348 = vst.msk [vmem:[#allocation2 + $0x120] sm:$0x3] %vm243, %v4327
      %4349 = vst.msk [vmem:[#allocation2 + $0x188] sm:$0x3] %vm243, %v4329
      %4350 = vst.msk [vmem:[#allocation2 + $0x1f0] sm:$0x3] %vm243, %v4331
      %4351 = vst.msk [vmem:[#allocation2 + $0x258] sm:$0x3] %vm243, %v4333
      %4352 = vst.msk [vmem:[#allocation2 + $0x2c0] sm:$0x3] %vm243, %v4335
      %4353 = vst.msk [vmem:[#allocation2 + $0x328] sm:$0x3] %vm243, %v4337
      %v4354 = vld [vmem:[%s3784] sm:$0x3]
      %v4355 = vld [vmem:[%s3784 + $0x2] sm:$0x3]
      %v4356 = vld [vmem:[%s3784 + $0x4] sm:$0x3]
      %v4357 = vld [vmem:[%s3784 + $0x6] sm:$0x3]
      %v4358 = vld [vmem:[%s3784 + $0x8] sm:$0x3]
      %v4359 = vld [vmem:[%s3784 + $0xa] sm:$0x3]
      %v4360 = vld [vmem:[%s3784 + $0xc] sm:$0x3]
      %v4361 = vld [vmem:[%s3784 + $0xe] sm:$0x3]
      %v4370 = vcombine.low %v4354, %v4354
      %v4372 = vunpack.c.l.s4 1983009808
      %v4373 = vunpack.c.0.s8 %v4372
      %v4374 = vlaneseq
      %v4375 = vshrl.u32 %v4374, 7
      %v4376 = vsub.s32 %v4373, %v4375
      %v4377 = vrot.slane %v4370, %v4376
      %v4378 = vcombine.low %v4355, %v4355
      %v4380 = vunpack.c.l.s4 1983009808
      %v4381 = vunpack.c.0.s8 %v4380
      %v4382 = vlaneseq
      %v4383 = vshrl.u32 %v4382, 7
      %v4384 = vsub.s32 %v4381, %v4383
      %v4385 = vrot.slane %v4378, %v4384
      %v4386 = vcombine.low %v4356, %v4356
      %v4388 = vunpack.c.l.s4 1983009808
      %v4389 = vunpack.c.0.s8 %v4388
      %v4390 = vlaneseq
      %v4391 = vshrl.u32 %v4390, 7
      %v4392 = vsub.s32 %v4389, %v4391
      %v4393 = vrot.slane %v4386, %v4392
      %v4394 = vcombine.low %v4357, %v4357
      %v4396 = vunpack.c.l.s4 1983009808
      %v4397 = vunpack.c.0.s8 %v4396
      %v4398 = vlaneseq
      %v4399 = vshrl.u32 %v4398, 7
      %v4400 = vsub.s32 %v4397, %v4399
      %v4401 = vrot.slane %v4394, %v4400
      %v4402 = vcombine.low %v4358, %v4358
      %v4404 = vunpack.c.l.s4 1983009808
      %v4405 = vunpack.c.0.s8 %v4404
      %v4406 = vlaneseq
      %v4407 = vshrl.u32 %v4406, 7
      %v4408 = vsub.s32 %v4405, %v4407
      %v4409 = vrot.slane %v4402, %v4408
      %v4410 = vcombine.low %v4359, %v4359
      %v4412 = vunpack.c.l.s4 1983009808
      %v4413 = vunpack.c.0.s8 %v4412
      %v4414 = vlaneseq
      %v4415 = vshrl.u32 %v4414, 7
      %v4416 = vsub.s32 %v4413, %v4415
      %v4417 = vrot.slane %v4410, %v4416
      %v4418 = vcombine.low %v4360, %v4360
      %v4420 = vunpack.c.l.s4 1983009808
      %v4421 = vunpack.c.0.s8 %v4420
      %v4422 = vlaneseq
      %v4423 = vshrl.u32 %v4422, 7
      %v4424 = vsub.s32 %v4421, %v4423
      %v4425 = vrot.slane %v4418, %v4424
      %v4426 = vcombine.low %v4361, %v4361
      %v4428 = vunpack.c.l.s4 1983009808
      %v4429 = vunpack.c.0.s8 %v4428
      %v4430 = vlaneseq
      %v4431 = vshrl.u32 %v4430, 7
      %v4432 = vsub.s32 %v4429, %v4431
      %v4433 = vrot.slane %v4426, %v4432
      %4434 = vrot.lane.b32.xlu0 %v4377, 125
      %v4435 = vpop.permute.xlu0 %4434
      %4436 = vrot.lane.b32.xlu0 %v4385, 125
      %v4437 = vpop.permute.xlu0 %4436
      %4438 = vrot.lane.b32.xlu0 %v4393, 125
      %v4439 = vpop.permute.xlu0 %4438
      %4440 = vrot.lane.b32.xlu0 %v4401, 125
      %v4441 = vpop.permute.xlu0 %4440
      %4442 = vrot.lane.b32.xlu0 %v4409, 125
      %v4443 = vpop.permute.xlu0 %4442
      %4444 = vrot.lane.b32.xlu0 %v4417, 125
      %v4445 = vpop.permute.xlu0 %4444
      %4446 = vrot.lane.b32.xlu0 %v4425, 125
      %v4447 = vpop.permute.xlu0 %4446
      %4448 = vrot.lane.b32.xlu0 %v4433, 125
      %v4449 = vpop.permute.xlu0 %4448
      %4458 = vst.msk [vmem:[#allocation2 + $0x50] sm:$0xc] %vm341, %v4435
      %4459 = vst.msk [vmem:[#allocation2 + $0xb8] sm:$0xc] %vm341, %v4437
      %4460 = vst.msk [vmem:[#allocation2 + $0x120] sm:$0xc] %vm341, %v4439
      %4461 = vst.msk [vmem:[#allocation2 + $0x188] sm:$0xc] %vm341, %v4441
      %4462 = vst.msk [vmem:[#allocation2 + $0x1f0] sm:$0xc] %vm341, %v4443
      %4463 = vst.msk [vmem:[#allocation2 + $0x258] sm:$0xc] %vm341, %v4445
      %4464 = vst.msk [vmem:[#allocation2 + $0x2c0] sm:$0xc] %vm341, %v4447
      %4465 = vst.msk [vmem:[#allocation2 + $0x328] sm:$0xc] %vm341, %v4449
      %s4466 = scalar_lea.vmem %s219, 6
      %v4467 = vld [vmem:[%s4466] sm:$0x3]
      %v4468 = vld [vmem:[%s4466 + $0x2] sm:$0x3]
      %v4469 = vld [vmem:[%s4466 + $0x4] sm:$0x3]
      %v4470 = vld [vmem:[%s4466 + $0x6] sm:$0x3]
      %v4471 = vld [vmem:[%s4466 + $0x8] sm:$0x3]
      %v4472 = vld [vmem:[%s4466 + $0xa] sm:$0x3]
      %v4473 = vld [vmem:[%s4466 + $0xc] sm:$0x3]
      %v4474 = vld [vmem:[%s4466 + $0xe] sm:$0x3]
      %v4484 = vunpack.c.l.s4 1983009808
      %v4485 = vunpack.c.0.s8 %v4484
      %v4486 = vlaneseq
      %v4487 = vshrl.u32 %v4486, 7
      %v4488 = vsub.s32 %v4485, %v4487
      %v4489 = vrot.slane %v4467, %v4488
      %v4490 = vcombine.low %v4489, %v4489
      %v4492 = vunpack.c.l.s4 1983009808
      %v4493 = vunpack.c.0.s8 %v4492
      %v4494 = vlaneseq
      %v4495 = vshrl.u32 %v4494, 7
      %v4496 = vsub.s32 %v4493, %v4495
      %v4497 = vrot.slane %v4468, %v4496
      %v4498 = vcombine.low %v4497, %v4497
      %v4500 = vunpack.c.l.s4 1983009808
      %v4501 = vunpack.c.0.s8 %v4500
      %v4502 = vlaneseq
      %v4503 = vshrl.u32 %v4502, 7
      %v4504 = vsub.s32 %v4501, %v4503
      %v4505 = vrot.slane %v4469, %v4504
      %v4506 = vcombine.low %v4505, %v4505
      %v4508 = vunpack.c.l.s4 1983009808
      %v4509 = vunpack.c.0.s8 %v4508
      %v4510 = vlaneseq
      %v4511 = vshrl.u32 %v4510, 7
      %v4512 = vsub.s32 %v4509, %v4511
      %v4513 = vrot.slane %v4470, %v4512
      %v4514 = vcombine.low %v4513, %v4513
      %v4516 = vunpack.c.l.s4 1983009808
      %v4517 = vunpack.c.0.s8 %v4516
      %v4518 = vlaneseq
      %v4519 = vshrl.u32 %v4518, 7
      %v4520 = vsub.s32 %v4517, %v4519
      %v4521 = vrot.slane %v4471, %v4520
      %v4522 = vcombine.low %v4521, %v4521
      %v4524 = vunpack.c.l.s4 1983009808
      %v4525 = vunpack.c.0.s8 %v4524
      %v4526 = vlaneseq
      %v4527 = vshrl.u32 %v4526, 7
      %v4528 = vsub.s32 %v4525, %v4527
      %v4529 = vrot.slane %v4472, %v4528
      %v4530 = vcombine.low %v4529, %v4529
      %v4532 = vunpack.c.l.s4 1983009808
      %v4533 = vunpack.c.0.s8 %v4532
      %v4534 = vlaneseq
      %v4535 = vshrl.u32 %v4534, 7
      %v4536 = vsub.s32 %v4533, %v4535
      %v4537 = vrot.slane %v4473, %v4536
      %v4538 = vcombine.low %v4537, %v4537
      %v4540 = vunpack.c.l.s4 1983009808
      %v4541 = vunpack.c.0.s8 %v4540
      %v4542 = vlaneseq
      %v4543 = vshrl.u32 %v4542, 7
      %v4544 = vsub.s32 %v4541, %v4543
      %v4545 = vrot.slane %v4474, %v4544
      %v4546 = vcombine.low %v4545, %v4545
      %4555 = vst.msk [vmem:[#allocation2 + $0x50] sm:$0x30] %vm454, %v4490
      %4556 = vst.msk [vmem:[#allocation2 + $0xb8] sm:$0x30] %vm454, %v4498
      %4557 = vst.msk [vmem:[#allocation2 + $0x120] sm:$0x30] %vm454, %v4506
      %4558 = vst.msk [vmem:[#allocation2 + $0x188] sm:$0x30] %vm454, %v4514
      %4559 = vst.msk [vmem:[#allocation2 + $0x1f0] sm:$0x30] %vm454, %v4522
      %4560 = vst.msk [vmem:[#allocation2 + $0x258] sm:$0x30] %vm454, %v4530
      %4561 = vst.msk [vmem:[#allocation2 + $0x2c0] sm:$0x30] %vm454, %v4538
      %4562 = vst.msk [vmem:[#allocation2 + $0x328] sm:$0x30] %vm454, %v4546
      %s4563 = scalar_lea.vmem %s219, 28
      %v4564 = vld [vmem:[%s4563] sm:$0x3]
      %v4565 = vld [vmem:[%s4563 + $0x2] sm:$0x3]
      %v4566 = vld [vmem:[%s4563 + $0x4] sm:$0x3]
      %v4567 = vld [vmem:[%s4563 + $0x6] sm:$0x3]
      %v4568 = vld [vmem:[%s4563 + $0x8] sm:$0x3]
      %v4569 = vld [vmem:[%s4563 + $0xa] sm:$0x3]
      %v4570 = vld [vmem:[%s4563 + $0xc] sm:$0x3]
      %v4571 = vld [vmem:[%s4563 + $0xe] sm:$0x3]
      %v4580 = vcombine.low %v4564, %v4564
      %v4582 = vunpack.c.l.s4 1983009808
      %v4583 = vunpack.c.0.s8 %v4582
      %v4584 = vlaneseq
      %v4585 = vshrl.u32 %v4584, 7
      %v4586 = vsub.s32 %v4583, %v4585
      %v4587 = vrot.slane %v4580, %v4586
      %v4588 = vcombine.low %v4587, %v4587
      %v4589 = vcombine.low %v4565, %v4565
      %v4591 = vunpack.c.l.s4 1983009808
      %v4592 = vunpack.c.0.s8 %v4591
      %v4593 = vlaneseq
      %v4594 = vshrl.u32 %v4593, 7
      %v4595 = vsub.s32 %v4592, %v4594
      %v4596 = vrot.slane %v4589, %v4595
      %v4597 = vcombine.low %v4596, %v4596
      %v4598 = vcombine.low %v4566, %v4566
      %v4600 = vunpack.c.l.s4 1983009808
      %v4601 = vunpack.c.0.s8 %v4600
      %v4602 = vlaneseq
      %v4603 = vshrl.u32 %v4602, 7
      %v4604 = vsub.s32 %v4601, %v4603
      %v4605 = vrot.slane %v4598, %v4604
      %v4606 = vcombine.low %v4605, %v4605
      %v4607 = vcombine.low %v4567, %v4567
      %v4609 = vunpack.c.l.s4 1983009808
      %v4610 = vunpack.c.0.s8 %v4609
      %v4611 = vlaneseq
      %v4612 = vshrl.u32 %v4611, 7
      %v4613 = vsub.s32 %v4610, %v4612
      %v4614 = vrot.slane %v4607, %v4613
      %v4615 = vcombine.low %v4614, %v4614
      %v4616 = vcombine.low %v4568, %v4568
      %v4618 = vunpack.c.l.s4 1983009808
      %v4619 = vunpack.c.0.s8 %v4618
      %v4620 = vlaneseq
      %v4621 = vshrl.u32 %v4620, 7
      %v4622 = vsub.s32 %v4619, %v4621
      %v4623 = vrot.slane %v4616, %v4622
      %v4624 = vcombine.low %v4623, %v4623
      %v4625 = vcombine.low %v4569, %v4569
      %v4627 = vunpack.c.l.s4 1983009808
      %v4628 = vunpack.c.0.s8 %v4627
      %v4629 = vlaneseq
      %v4630 = vshrl.u32 %v4629, 7
      %v4631 = vsub.s32 %v4628, %v4630
      %v4632 = vrot.slane %v4625, %v4631
      %v4633 = vcombine.low %v4632, %v4632
      %v4634 = vcombine.low %v4570, %v4570
      %v4636 = vunpack.c.l.s4 1983009808
      %v4637 = vunpack.c.0.s8 %v4636
      %v4638 = vlaneseq
      %v4639 = vshrl.u32 %v4638, 7
      %v4640 = vsub.s32 %v4637, %v4639
      %v4641 = vrot.slane %v4634, %v4640
      %v4642 = vcombine.low %v4641, %v4641
      %v4643 = vcombine.low %v4571, %v4571
      %v4645 = vunpack.c.l.s4 1983009808
      %v4646 = vunpack.c.0.s8 %v4645
      %v4647 = vlaneseq
      %v4648 = vshrl.u32 %v4647, 7
      %v4649 = vsub.s32 %v4646, %v4648
      %v4650 = vrot.slane %v4643, %v4649
      %v4651 = vcombine.low %v4650, %v4650
      %4660 = vst.msk [vmem:[#allocation2 + $0x50] sm:$0xc0] %vm575, %v4588
      %4661 = vst.msk [vmem:[#allocation2 + $0xb8] sm:$0xc0] %vm575, %v4597
      %4662 = vst.msk [vmem:[#allocation2 + $0x120] sm:$0xc0] %vm575, %v4606
      %4663 = vst.msk [vmem:[#allocation2 + $0x188] sm:$0xc0] %vm575, %v4615
      %4664 = vst.msk [vmem:[#allocation2 + $0x1f0] sm:$0xc0] %vm575, %v4624
      %4665 = vst.msk [vmem:[#allocation2 + $0x258] sm:$0xc0] %vm575, %v4633
      %4666 = vst.msk [vmem:[#allocation2 + $0x2c0] sm:$0xc0] %vm575, %v4642
      %4667 = vst.msk [vmem:[#allocation2 + $0x328] sm:$0xc0] %vm575, %v4651
      %v4668 = vld [vmem:[%s4466] sm:$0x3]
      %v4669 = vld [vmem:[%s4466 + $0x2] sm:$0x3]
      %v4670 = vld [vmem:[%s4466 + $0x4] sm:$0x3]
      %v4671 = vld [vmem:[%s4466 + $0x6] sm:$0x3]
      %v4672 = vld [vmem:[%s4466 + $0x8] sm:$0x3]
      %v4673 = vld [vmem:[%s4466 + $0xa] sm:$0x3]
      %v4674 = vld [vmem:[%s4466 + $0xc] sm:$0x3]
      %v4675 = vld [vmem:[%s4466 + $0xe] sm:$0x3]
      %v4685 = vunpack.c.l.s4 1983009808
      %v4686 = vunpack.c.0.s8 %v4685
      %v4687 = vlaneseq
      %v4688 = vshrl.u32 %v4687, 7
      %v4689 = vsub.s32 %v4686, %v4688
      %v4690 = vrot.slane %v4668, %v4689
      %v4692 = vunpack.c.l.s4 1983009808
      %v4693 = vunpack.c.0.s8 %v4692
      %v4694 = vlaneseq
      %v4695 = vshrl.u32 %v4694, 7
      %v4696 = vsub.s32 %v4693, %v4695
      %v4697 = vrot.slane %v4669, %v4696
      %v4699 = vunpack.c.l.s4 1983009808
      %v4700 = vunpack.c.0.s8 %v4699
      %v4701 = vlaneseq
      %v4702 = vshrl.u32 %v4701, 7
      %v4703 = vsub.s32 %v4700, %v4702
      %v4704 = vrot.slane %v4670, %v4703
      %v4706 = vunpack.c.l.s4 1983009808
      %v4707 = vunpack.c.0.s8 %v4706
      %v4708 = vlaneseq
      %v4709 = vshrl.u32 %v4708, 7
      %v4710 = vsub.s32 %v4707, %v4709
      %v4711 = vrot.slane %v4671, %v4710
      %v4713 = vunpack.c.l.s4 1983009808
      %v4714 = vunpack.c.0.s8 %v4713
      %v4715 = vlaneseq
      %v4716 = vshrl.u32 %v4715, 7
      %v4717 = vsub.s32 %v4714, %v4716
      %v4718 = vrot.slane %v4672, %v4717
      %v4720 = vunpack.c.l.s4 1983009808
      %v4721 = vunpack.c.0.s8 %v4720
      %v4722 = vlaneseq
      %v4723 = vshrl.u32 %v4722, 7
      %v4724 = vsub.s32 %v4721, %v4723
      %v4725 = vrot.slane %v4673, %v4724
      %v4727 = vunpack.c.l.s4 1983009808
      %v4728 = vunpack.c.0.s8 %v4727
      %v4729 = vlaneseq
      %v4730 = vshrl.u32 %v4729, 7
      %v4731 = vsub.s32 %v4728, %v4730
      %v4732 = vrot.slane %v4674, %v4731
      %v4734 = vunpack.c.l.s4 1983009808
      %v4735 = vunpack.c.0.s8 %v4734
      %v4736 = vlaneseq
      %v4737 = vshrl.u32 %v4736, 7
      %v4738 = vsub.s32 %v4735, %v4737
      %v4739 = vrot.slane %v4675, %v4738
      %4740 = vrot.lane.b32.xlu0 %v4690, 127
      %v4741 = vpop.permute.xlu0 %4740
      %4742 = vrot.lane.b32.xlu0 %v4697, 127
      %v4743 = vpop.permute.xlu0 %4742
      %4744 = vrot.lane.b32.xlu0 %v4704, 127
      %v4745 = vpop.permute.xlu0 %4744
      %4746 = vrot.lane.b32.xlu0 %v4711, 127
      %v4747 = vpop.permute.xlu0 %4746
      %4748 = vrot.lane.b32.xlu0 %v4718, 127
      %v4749 = vpop.permute.xlu0 %4748
      %4750 = vrot.lane.b32.xlu0 %v4725, 127
      %v4751 = vpop.permute.xlu0 %4750
      %4752 = vrot.lane.b32.xlu0 %v4732, 127
      %v4753 = vpop.permute.xlu0 %4752
      %4754 = vrot.lane.b32.xlu0 %v4739, 127
      %v4755 = vpop.permute.xlu0 %4754
      %4764 = vst.msk [vmem:[#allocation2 + $0x58] sm:$0x3] %vm243, %v4741
      %4765 = vst.msk [vmem:[#allocation2 + $0xc0] sm:$0x3] %vm243, %v4743
      %4766 = vst.msk [vmem:[#allocation2 + $0x128] sm:$0x3] %vm243, %v4745
      %4767 = vst.msk [vmem:[#allocation2 + $0x190] sm:$0x3] %vm243, %v4747
      %4768 = vst.msk [vmem:[#allocation2 + $0x1f8] sm:$0x3] %vm243, %v4749
      %4769 = vst.msk [vmem:[#allocation2 + $0x260] sm:$0x3] %vm243, %v4751
      %4770 = vst.msk [vmem:[#allocation2 + $0x2c8] sm:$0x3] %vm243, %v4753
      %4771 = vst.msk [vmem:[#allocation2 + $0x330] sm:$0x3] %vm243, %v4755
      %v4772 = vld [vmem:[%s4563] sm:$0x3]
      %v4773 = vld [vmem:[%s4563 + $0x2] sm:$0x3]
      %v4774 = vld [vmem:[%s4563 + $0x4] sm:$0x3]
      %v4775 = vld [vmem:[%s4563 + $0x6] sm:$0x3]
      %v4776 = vld [vmem:[%s4563 + $0x8] sm:$0x3]
      %v4777 = vld [vmem:[%s4563 + $0xa] sm:$0x3]
      %v4778 = vld [vmem:[%s4563 + $0xc] sm:$0x3]
      %v4779 = vld [vmem:[%s4563 + $0xe] sm:$0x3]
      %v4788 = vcombine.low %v4772, %v4772
      %v4790 = vunpack.c.l.s4 1983009808
      %v4791 = vunpack.c.0.s8 %v4790
      %v4792 = vlaneseq
      %v4793 = vshrl.u32 %v4792, 7
      %v4794 = vsub.s32 %v4791, %v4793
      %v4795 = vrot.slane %v4788, %v4794
      %v4796 = vcombine.low %v4773, %v4773
      %v4798 = vunpack.c.l.s4 1983009808
      %v4799 = vunpack.c.0.s8 %v4798
      %v4800 = vlaneseq
      %v4801 = vshrl.u32 %v4800, 7
      %v4802 = vsub.s32 %v4799, %v4801
      %v4803 = vrot.slane %v4796, %v4802
      %v4804 = vcombine.low %v4774, %v4774
      %v4806 = vunpack.c.l.s4 1983009808
      %v4807 = vunpack.c.0.s8 %v4806
      %v4808 = vlaneseq
      %v4809 = vshrl.u32 %v4808, 7
      %v4810 = vsub.s32 %v4807, %v4809
      %v4811 = vrot.slane %v4804, %v4810
      %v4812 = vcombine.low %v4775, %v4775
      %v4814 = vunpack.c.l.s4 1983009808
      %v4815 = vunpack.c.0.s8 %v4814
      %v4816 = vlaneseq
      %v4817 = vshrl.u32 %v4816, 7
      %v4818 = vsub.s32 %v4815, %v4817
      %v4819 = vrot.slane %v4812, %v4818
      %v4820 = vcombine.low %v4776, %v4776
      %v4822 = vunpack.c.l.s4 1983009808
      %v4823 = vunpack.c.0.s8 %v4822
      %v4824 = vlaneseq
      %v4825 = vshrl.u32 %v4824, 7
      %v4826 = vsub.s32 %v4823, %v4825
      %v4827 = vrot.slane %v4820, %v4826
      %v4828 = vcombine.low %v4777, %v4777
      %v4830 = vunpack.c.l.s4 1983009808
      %v4831 = vunpack.c.0.s8 %v4830
      %v4832 = vlaneseq
      %v4833 = vshrl.u32 %v4832, 7
      %v4834 = vsub.s32 %v4831, %v4833
      %v4835 = vrot.slane %v4828, %v4834
      %v4836 = vcombine.low %v4778, %v4778
      %v4838 = vunpack.c.l.s4 1983009808
      %v4839 = vunpack.c.0.s8 %v4838
      %v4840 = vlaneseq
      %v4841 = vshrl.u32 %v4840, 7
      %v4842 = vsub.s32 %v4839, %v4841
      %v4843 = vrot.slane %v4836, %v4842
      %v4844 = vcombine.low %v4779, %v4779
      %v4846 = vunpack.c.l.s4 1983009808
      %v4847 = vunpack.c.0.s8 %v4846
      %v4848 = vlaneseq
      %v4849 = vshrl.u32 %v4848, 7
      %v4850 = vsub.s32 %v4847, %v4849
      %v4851 = vrot.slane %v4844, %v4850
      %4852 = vrot.lane.b32.xlu0 %v4795, 127
      %v4853 = vpop.permute.xlu0 %4852
      %4854 = vrot.lane.b32.xlu0 %v4803, 127
      %v4855 = vpop.permute.xlu0 %4854
      %4856 = vrot.lane.b32.xlu0 %v4811, 127
      %v4857 = vpop.permute.xlu0 %4856
      %4858 = vrot.lane.b32.xlu0 %v4819, 127
      %v4859 = vpop.permute.xlu0 %4858
      %4860 = vrot.lane.b32.xlu0 %v4827, 127
      %v4861 = vpop.permute.xlu0 %4860
      %4862 = vrot.lane.b32.xlu0 %v4835, 127
      %v4863 = vpop.permute.xlu0 %4862
      %4864 = vrot.lane.b32.xlu0 %v4843, 127
      %v4865 = vpop.permute.xlu0 %4864
      %4866 = vrot.lane.b32.xlu0 %v4851, 127
      %v4867 = vpop.permute.xlu0 %4866
      %4876 = vst.msk [vmem:[#allocation2 + $0x58] sm:$0xc] %vm341, %v4853
      %4877 = vst.msk [vmem:[#allocation2 + $0xc0] sm:$0xc] %vm341, %v4855
      %4878 = vst.msk [vmem:[#allocation2 + $0x128] sm:$0xc] %vm341, %v4857
      %4879 = vst.msk [vmem:[#allocation2 + $0x190] sm:$0xc] %vm341, %v4859
      %4880 = vst.msk [vmem:[#allocation2 + $0x1f8] sm:$0xc] %vm341, %v4861
      %4881 = vst.msk [vmem:[#allocation2 + $0x260] sm:$0xc] %vm341, %v4863
      %4882 = vst.msk [vmem:[#allocation2 + $0x2c8] sm:$0xc] %vm341, %v4865
      %4883 = vst.msk [vmem:[#allocation2 + $0x330] sm:$0xc] %vm341, %v4867
      %v4884 = vld [vmem:[%s4466] sm:$0x3]
      %v4885 = vld [vmem:[%s4466 + $0x2] sm:$0x3]
      %v4886 = vld [vmem:[%s4466 + $0x4] sm:$0x3]
      %v4887 = vld [vmem:[%s4466 + $0x6] sm:$0x3]
      %v4888 = vld [vmem:[%s4466 + $0x8] sm:$0x3]
      %v4889 = vld [vmem:[%s4466 + $0xa] sm:$0x3]
      %v4890 = vld [vmem:[%s4466 + $0xc] sm:$0x3]
      %v4891 = vld [vmem:[%s4466 + $0xe] sm:$0x3]
      %v4901 = vunpack.c.l.s4 1983009808
      %v4902 = vunpack.c.0.s8 %v4901
      %v4903 = vlaneseq
      %v4904 = vshrl.u32 %v4903, 7
      %v4905 = vsub.s32 %v4902, %v4904
      %v4906 = vrot.slane %v4884, %v4905
      %v4907 = vcombine.low %v4906, %v4906
      %v4909 = vunpack.c.l.s4 1983009808
      %v4910 = vunpack.c.0.s8 %v4909
      %v4911 = vlaneseq
      %v4912 = vshrl.u32 %v4911, 7
      %v4913 = vsub.s32 %v4910, %v4912
      %v4914 = vrot.slane %v4885, %v4913
      %v4915 = vcombine.low %v4914, %v4914
      %v4917 = vunpack.c.l.s4 1983009808
      %v4918 = vunpack.c.0.s8 %v4917
      %v4919 = vlaneseq
      %v4920 = vshrl.u32 %v4919, 7
      %v4921 = vsub.s32 %v4918, %v4920
      %v4922 = vrot.slane %v4886, %v4921
      %v4923 = vcombine.low %v4922, %v4922
      %v4925 = vunpack.c.l.s4 1983009808
      %v4926 = vunpack.c.0.s8 %v4925
      %v4927 = vlaneseq
      %v4928 = vshrl.u32 %v4927, 7
      %v4929 = vsub.s32 %v4926, %v4928
      %v4930 = vrot.slane %v4887, %v4929
      %v4931 = vcombine.low %v4930, %v4930
      %v4933 = vunpack.c.l.s4 1983009808
      %v4934 = vunpack.c.0.s8 %v4933
      %v4935 = vlaneseq
      %v4936 = vshrl.u32 %v4935, 7
      %v4937 = vsub.s32 %v4934, %v4936
      %v4938 = vrot.slane %v4888, %v4937
      %v4939 = vcombine.low %v4938, %v4938
      %v4941 = vunpack.c.l.s4 1983009808
      %v4942 = vunpack.c.0.s8 %v4941
      %v4943 = vlaneseq
      %v4944 = vshrl.u32 %v4943, 7
      %v4945 = vsub.s32 %v4942, %v4944
      %v4946 = vrot.slane %v4889, %v4945
      %v4947 = vcombine.low %v4946, %v4946
      %v4949 = vunpack.c.l.s4 1983009808
      %v4950 = vunpack.c.0.s8 %v4949
      %v4951 = vlaneseq
      %v4952 = vshrl.u32 %v4951, 7
      %v4953 = vsub.s32 %v4950, %v4952
      %v4954 = vrot.slane %v4890, %v4953
      %v4955 = vcombine.low %v4954, %v4954
      %v4957 = vunpack.c.l.s4 1983009808
      %v4958 = vunpack.c.0.s8 %v4957
      %v4959 = vlaneseq
      %v4960 = vshrl.u32 %v4959, 7
      %v4961 = vsub.s32 %v4958, %v4960
      %v4962 = vrot.slane %v4891, %v4961
      %v4963 = vcombine.low %v4962, %v4962
      %4964 = vrot.lane.b32.xlu0 %v4907, 126
      %v4965 = vpop.permute.xlu0 %4964
      %4966 = vrot.lane.b32.xlu0 %v4915, 126
      %v4967 = vpop.permute.xlu0 %4966
      %4968 = vrot.lane.b32.xlu0 %v4923, 126
      %v4969 = vpop.permute.xlu0 %4968
      %4970 = vrot.lane.b32.xlu0 %v4931, 126
      %v4971 = vpop.permute.xlu0 %4970
      %4972 = vrot.lane.b32.xlu0 %v4939, 126
      %v4973 = vpop.permute.xlu0 %4972
      %4974 = vrot.lane.b32.xlu0 %v4947, 126
      %v4975 = vpop.permute.xlu0 %4974
      %4976 = vrot.lane.b32.xlu0 %v4955, 126
      %v4977 = vpop.permute.xlu0 %4976
      %4978 = vrot.lane.b32.xlu0 %v4963, 126
      %v4979 = vpop.permute.xlu0 %4978
      %4988 = vst.msk [vmem:[#allocation2 + $0x58] sm:$0x30] %vm454, %v4965
      %4989 = vst.msk [vmem:[#allocation2 + $0xc0] sm:$0x30] %vm454, %v4967
      %4990 = vst.msk [vmem:[#allocation2 + $0x128] sm:$0x30] %vm454, %v4969
      %4991 = vst.msk [vmem:[#allocation2 + $0x190] sm:$0x30] %vm454, %v4971
      %4992 = vst.msk [vmem:[#allocation2 + $0x1f8] sm:$0x30] %vm454, %v4973
      %4993 = vst.msk [vmem:[#allocation2 + $0x260] sm:$0x30] %vm454, %v4975
      %4994 = vst.msk [vmem:[#allocation2 + $0x2c8] sm:$0x30] %vm454, %v4977
      %4995 = vst.msk [vmem:[#allocation2 + $0x330] sm:$0x30] %vm454, %v4979
      %v4996 = vld [vmem:[%s4563] sm:$0x3]
      %v4997 = vld [vmem:[%s4563 + $0x2] sm:$0x3]
      %v4998 = vld [vmem:[%s4563 + $0x4] sm:$0x3]
      %v4999 = vld [vmem:[%s4563 + $0x6] sm:$0x3]
      %v5000 = vld [vmem:[%s4563 + $0x8] sm:$0x3]
      %v5001 = vld [vmem:[%s4563 + $0xa] sm:$0x3]
      %v5002 = vld [vmem:[%s4563 + $0xc] sm:$0x3]
      %v5003 = vld [vmem:[%s4563 + $0xe] sm:$0x3]
      %v5012 = vcombine.low %v4996, %v4996
      %v5014 = vunpack.c.l.s4 1983009808
      %v5015 = vunpack.c.0.s8 %v5014
      %v5016 = vlaneseq
      %v5017 = vshrl.u32 %v5016, 7
      %v5018 = vsub.s32 %v5015, %v5017
      %v5019 = vrot.slane %v5012, %v5018
      %v5020 = vcombine.low %v5019, %v5019
      %v5021 = vcombine.low %v4997, %v4997
      %v5023 = vunpack.c.l.s4 1983009808
      %v5024 = vunpack.c.0.s8 %v5023
      %v5025 = vlaneseq
      %v5026 = vshrl.u32 %v5025, 7
      %v5027 = vsub.s32 %v5024, %v5026
      %v5028 = vrot.slane %v5021, %v5027
      %v5029 = vcombine.low %v5028, %v5028
      %v5030 = vcombine.low %v4998, %v4998
      %v5032 = vunpack.c.l.s4 1983009808
      %v5033 = vunpack.c.0.s8 %v5032
      %v5034 = vlaneseq
      %v5035 = vshrl.u32 %v5034, 7
      %v5036 = vsub.s32 %v5033, %v5035
      %v5037 = vrot.slane %v5030, %v5036
      %v5038 = vcombine.low %v5037, %v5037
      %v5039 = vcombine.low %v4999, %v4999
      %v5041 = vunpack.c.l.s4 1983009808
      %v5042 = vunpack.c.0.s8 %v5041
      %v5043 = vlaneseq
      %v5044 = vshrl.u32 %v5043, 7
      %v5045 = vsub.s32 %v5042, %v5044
      %v5046 = vrot.slane %v5039, %v5045
      %v5047 = vcombine.low %v5046, %v5046
      %v5048 = vcombine.low %v5000, %v5000
      %v5050 = vunpack.c.l.s4 1983009808
      %v5051 = vunpack.c.0.s8 %v5050
      %v5052 = vlaneseq
      %v5053 = vshrl.u32 %v5052, 7
      %v5054 = vsub.s32 %v5051, %v5053
      %v5055 = vrot.slane %v5048, %v5054
      %v5056 = vcombine.low %v5055, %v5055
      %v5057 = vcombine.low %v5001, %v5001
      %v5059 = vunpack.c.l.s4 1983009808
      %v5060 = vunpack.c.0.s8 %v5059
      %v5061 = vlaneseq
      %v5062 = vshrl.u32 %v5061, 7
      %v5063 = vsub.s32 %v5060, %v5062
      %v5064 = vrot.slane %v5057, %v5063
      %v5065 = vcombine.low %v5064, %v5064
      %v5066 = vcombine.low %v5002, %v5002
      %v5068 = vunpack.c.l.s4 1983009808
      %v5069 = vunpack.c.0.s8 %v5068
      %v5070 = vlaneseq
      %v5071 = vshrl.u32 %v5070, 7
      %v5072 = vsub.s32 %v5069, %v5071
      %v5073 = vrot.slane %v5066, %v5072
      %v5074 = vcombine.low %v5073, %v5073
      %v5075 = vcombine.low %v5003, %v5003
      %v5077 = vunpack.c.l.s4 1983009808
      %v5078 = vunpack.c.0.s8 %v5077
      %v5079 = vlaneseq
      %v5080 = vshrl.u32 %v5079, 7
      %v5081 = vsub.s32 %v5078, %v5080
      %v5082 = vrot.slane %v5075, %v5081
      %v5083 = vcombine.low %v5082, %v5082
      %5084 = vrot.lane.b32.xlu0 %v5020, 126
      %v5085 = vpop.permute.xlu0 %5084
      %5086 = vrot.lane.b32.xlu0 %v5029, 126
      %v5087 = vpop.permute.xlu0 %5086
      %5088 = vrot.lane.b32.xlu0 %v5038, 126
      %v5089 = vpop.permute.xlu0 %5088
      %5090 = vrot.lane.b32.xlu0 %v5047, 126
      %v5091 = vpop.permute.xlu0 %5090
      %5092 = vrot.lane.b32.xlu0 %v5056, 126
      %v5093 = vpop.permute.xlu0 %5092
      %5094 = vrot.lane.b32.xlu0 %v5065, 126
      %v5095 = vpop.permute.xlu0 %5094
      %5096 = vrot.lane.b32.xlu0 %v5074, 126
      %v5097 = vpop.permute.xlu0 %5096
      %5098 = vrot.lane.b32.xlu0 %v5083, 126
      %v5099 = vpop.permute.xlu0 %5098
      %5108 = vst.msk [vmem:[#allocation2 + $0x58] sm:$0xc0] %vm575, %v5085
      %5109 = vst.msk [vmem:[#allocation2 + $0xc0] sm:$0xc0] %vm575, %v5087
      %5110 = vst.msk [vmem:[#allocation2 + $0x128] sm:$0xc0] %vm575, %v5089
      %5111 = vst.msk [vmem:[#allocation2 + $0x190] sm:$0xc0] %vm575, %v5091
      %5112 = vst.msk [vmem:[#allocation2 + $0x1f8] sm:$0xc0] %vm575, %v5093
      %5113 = vst.msk [vmem:[#allocation2 + $0x260] sm:$0xc0] %vm575, %v5095
      %5114 = vst.msk [vmem:[#allocation2 + $0x2c8] sm:$0xc0] %vm575, %v5097
      %5115 = vst.msk [vmem:[#allocation2 + $0x330] sm:$0xc0] %vm575, %v5099
      %v5116 = vld [vmem:[%s4466] sm:$0x3]
      %v5117 = vld [vmem:[%s4466 + $0x2] sm:$0x3]
      %v5118 = vld [vmem:[%s4466 + $0x4] sm:$0x3]
      %v5119 = vld [vmem:[%s4466 + $0x6] sm:$0x3]
      %v5120 = vld [vmem:[%s4466 + $0x8] sm:$0x3]
      %v5121 = vld [vmem:[%s4466 + $0xa] sm:$0x3]
      %v5122 = vld [vmem:[%s4466 + $0xc] sm:$0x3]
      %v5123 = vld [vmem:[%s4466 + $0xe] sm:$0x3]
      %v5133 = vunpack.c.l.s4 1983009808
      %v5134 = vunpack.c.0.s8 %v5133
      %v5135 = vlaneseq
      %v5136 = vshrl.u32 %v5135, 7
      %v5137 = vsub.s32 %v5134, %v5136
      %v5138 = vrot.slane %v5116, %v5137
      %v5140 = vunpack.c.l.s4 1983009808
      %v5141 = vunpack.c.0.s8 %v5140
      %v5142 = vlaneseq
      %v5143 = vshrl.u32 %v5142, 7
      %v5144 = vsub.s32 %v5141, %v5143
      %v5145 = vrot.slane %v5117, %v5144
      %v5147 = vunpack.c.l.s4 1983009808
      %v5148 = vunpack.c.0.s8 %v5147
      %v5149 = vlaneseq
      %v5150 = vshrl.u32 %v5149, 7
      %v5151 = vsub.s32 %v5148, %v5150
      %v5152 = vrot.slane %v5118, %v5151
      %v5154 = vunpack.c.l.s4 1983009808
      %v5155 = vunpack.c.0.s8 %v5154
      %v5156 = vlaneseq
      %v5157 = vshrl.u32 %v5156, 7
      %v5158 = vsub.s32 %v5155, %v5157
      %v5159 = vrot.slane %v5119, %v5158
      %v5161 = vunpack.c.l.s4 1983009808
      %v5162 = vunpack.c.0.s8 %v5161
      %v5163 = vlaneseq
      %v5164 = vshrl.u32 %v5163, 7
      %v5165 = vsub.s32 %v5162, %v5164
      %v5166 = vrot.slane %v5120, %v5165
      %v5168 = vunpack.c.l.s4 1983009808
      %v5169 = vunpack.c.0.s8 %v5168
      %v5170 = vlaneseq
      %v5171 = vshrl.u32 %v5170, 7
      %v5172 = vsub.s32 %v5169, %v5171
      %v5173 = vrot.slane %v5121, %v5172
      %v5175 = vunpack.c.l.s4 1983009808
      %v5176 = vunpack.c.0.s8 %v5175
      %v5177 = vlaneseq
      %v5178 = vshrl.u32 %v5177, 7
      %v5179 = vsub.s32 %v5176, %v5178
      %v5180 = vrot.slane %v5122, %v5179
      %v5182 = vunpack.c.l.s4 1983009808
      %v5183 = vunpack.c.0.s8 %v5182
      %v5184 = vlaneseq
      %v5185 = vshrl.u32 %v5184, 7
      %v5186 = vsub.s32 %v5183, %v5185
      %v5187 = vrot.slane %v5123, %v5186
      %5188 = vrot.lane.b32.xlu0 %v5138, 125
      %v5189 = vpop.permute.xlu0 %5188
      %5190 = vrot.lane.b32.xlu0 %v5145, 125
      %v5191 = vpop.permute.xlu0 %5190
      %5192 = vrot.lane.b32.xlu0 %v5152, 125
      %v5193 = vpop.permute.xlu0 %5192
      %5194 = vrot.lane.b32.xlu0 %v5159, 125
      %v5195 = vpop.permute.xlu0 %5194
      %5196 = vrot.lane.b32.xlu0 %v5166, 125
      %v5197 = vpop.permute.xlu0 %5196
      %5198 = vrot.lane.b32.xlu0 %v5173, 125
      %v5199 = vpop.permute.xlu0 %5198
      %5200 = vrot.lane.b32.xlu0 %v5180, 125
      %v5201 = vpop.permute.xlu0 %5200
      %5202 = vrot.lane.b32.xlu0 %v5187, 125
      %v5203 = vpop.permute.xlu0 %5202
      %5212 = vst.msk [vmem:[#allocation2 + $0x60] sm:$0x3] %vm243, %v5189
      %5213 = vst.msk [vmem:[#allocation2 + $0xc8] sm:$0x3] %vm243, %v5191
      %5214 = vst.msk [vmem:[#allocation2 + $0x130] sm:$0x3] %vm243, %v5193
      %5215 = vst.msk [vmem:[#allocation2 + $0x198] sm:$0x3] %vm243, %v5195
      %5216 = vst.msk [vmem:[#allocation2 + $0x200] sm:$0x3] %vm243, %v5197
      %5217 = vst.msk [vmem:[#allocation2 + $0x268] sm:$0x3] %vm243, %v5199
      %5218 = vst.msk [vmem:[#allocation2 + $0x2d0] sm:$0x3] %vm243, %v5201
      %5219 = vst.msk [vmem:[#allocation2 + $0x338] sm:$0x3] %vm243, %v5203
      %v5220 = vld [vmem:[%s1] sm:$0xff]
      %v5221 = vld [vmem:[#allocation2] sm:$0xff]
      %v5222 = vld [vmem:[#allocation2 + $0x8] sm:$0xff]
      %v5223 = vld [vmem:[#allocation2 + $0x10] sm:$0xff]
      %v5224 = vld [vmem:[#allocation2 + $0x18] sm:$0xff]
      %v5225 = vld [vmem:[#allocation2 + $0x20] sm:$0xff]
      %v5226 = vld [vmem:[#allocation2 + $0x28] sm:$0xff]
      %v5227 = vld [vmem:[#allocation2 + $0x30] sm:$0xff]
      %v5228 = vld [vmem:[#allocation2 + $0x38] sm:$0xff]
      %v5229 = vld [vmem:[#allocation2 + $0x40] sm:$0xff]
      %v5230 = vld [vmem:[#allocation2 + $0x48] sm:$0xff]
      %v5231 = vld [vmem:[#allocation2 + $0x50] sm:$0xff]
      %v5232 = vld [vmem:[#allocation2 + $0x58] sm:$0xff]
      %v5233 = vld [vmem:[#allocation2 + $0x60] sm:$0xff]
      %v5234 = vld [vmem:[#allocation2 + $0x68] sm:$0xff]
      %v5235 = vld [vmem:[#allocation2 + $0x70] sm:$0xff]
      %v5236 = vld [vmem:[#allocation2 + $0x78] sm:$0xff]
      %v5237 = vld [vmem:[#allocation2 + $0x80] sm:$0xff]
      %v5238 = vld [vmem:[#allocation2 + $0x88] sm:$0xff]
      %v5239 = vld [vmem:[#allocation2 + $0x90] sm:$0xff]
      %v5240 = vld [vmem:[#allocation2 + $0x98] sm:$0xff]
      %v5241 = vld [vmem:[#allocation2 + $0xa0] sm:$0xff]
      %v5242 = vld [vmem:[#allocation2 + $0xa8] sm:$0xff]
      %v5243 = vld [vmem:[#allocation2 + $0xb0] sm:$0xff]
      %v5244 = vld [vmem:[#allocation2 + $0xb8] sm:$0xff]
      %v5245 = vld [vmem:[#allocation2 + $0xc0] sm:$0xff]
      %v5246 = vld [vmem:[#allocation2 + $0xc8] sm:$0xff]
      %v5247 = vld [vmem:[#allocation2 + $0xd0] sm:$0xff]
      %v5248 = vld [vmem:[#allocation2 + $0xd8] sm:$0xff]
      %v5249 = vld [vmem:[#allocation2 + $0xe0] sm:$0xff]
      %v5250 = vld [vmem:[#allocation2 + $0xe8] sm:$0xff]
      %v5251 = vld [vmem:[#allocation2 + $0xf0] sm:$0xff]
      %v5252 = vld [vmem:[#allocation2 + $0xf8] sm:$0xff]
      %v5253 = vld [vmem:[#allocation2 + $0x100] sm:$0xff]
      %v5254 = vld [vmem:[#allocation2 + $0x108] sm:$0xff]
      %v5255 = vld [vmem:[#allocation2 + $0x110] sm:$0xff]
      %v5256 = vld [vmem:[#allocation2 + $0x118] sm:$0xff]
      %v5257 = vld [vmem:[#allocation2 + $0x120] sm:$0xff]
      %v5258 = vld [vmem:[#allocation2 + $0x128] sm:$0xff]
      %v5259 = vld [vmem:[#allocation2 + $0x130] sm:$0xff]
      %v5260 = vld [vmem:[#allocation2 + $0x138] sm:$0xff]
      %v5261 = vld [vmem:[#allocation2 + $0x140] sm:$0xff]
      %v5262 = vld [vmem:[#allocation2 + $0x148] sm:$0xff]
      %v5263 = vld [vmem:[#allocation2 + $0x150] sm:$0xff]
      %v5264 = vld [vmem:[#allocation2 + $0x158] sm:$0xff]
      %v5265 = vld [vmem:[#allocation2 + $0x160] sm:$0xff]
      %v5266 = vld [vmem:[#allocation2 + $0x168] sm:$0xff]
      %v5267 = vld [vmem:[#allocation2 + $0x170] sm:$0xff]
      %v5268 = vld [vmem:[#allocation2 + $0x178] sm:$0xff]
      %v5269 = vld [vmem:[#allocation2 + $0x180] sm:$0xff]
      %v5270 = vld [vmem:[#allocation2 + $0x188] sm:$0xff]
      %v5271 = vld [vmem:[#allocation2 + $0x190] sm:$0xff]
      %v5272 = vld [vmem:[#allocation2 + $0x198] sm:$0xff]
      %v5273 = vld [vmem:[#allocation2 + $0x1a0] sm:$0xff]
      %v5274 = vld [vmem:[#allocation2 + $0x1a8] sm:$0xff]
      %v5275 = vld [vmem:[#allocation2 + $0x1b0] sm:$0xff]
      %v5276 = vld [vmem:[#allocation2 + $0x1b8] sm:$0xff]
      %v5277 = vld [vmem:[#allocation2 + $0x1c0] sm:$0xff]
      %v5278 = vld [vmem:[#allocation2 + $0x1c8] sm:$0xff]
      %v5279 = vld [vmem:[#allocation2 + $0x1d0] sm:$0xff]
      %v5280 = vld [vmem:[#allocation2 + $0x1d8] sm:$0xff]
      %v5281 = vld [vmem:[#allocation2 + $0x1e0] sm:$0xff]
      %v5282 = vld [vmem:[#allocation2 + $0x1e8] sm:$0xff]
      %v5283 = vld [vmem:[#allocation2 + $0x1f0] sm:$0xff]
      %v5284 = vld [vmem:[#allocation2 + $0x1f8] sm:$0xff]
      %v5285 = vld [vmem:[#allocation2 + $0x200] sm:$0xff]
      %v5286 = vld [vmem:[#allocation2 + $0x208] sm:$0xff]
      %v5287 = vld [vmem:[#allocation2 + $0x210] sm:$0xff]
      %v5288 = vld [vmem:[#allocation2 + $0x218] sm:$0xff]
      %v5289 = vld [vmem:[#allocation2 + $0x220] sm:$0xff]
      %v5290 = vld [vmem:[#allocation2 + $0x228] sm:$0xff]
      %v5291 = vld [vmem:[#allocation2 + $0x230] sm:$0xff]
      %v5292 = vld [vmem:[#allocation2 + $0x238] sm:$0xff]
      %v5293 = vld [vmem:[#allocation2 + $0x240] sm:$0xff]
      %v5294 = vld [vmem:[#allocation2 + $0x248] sm:$0xff]
      %v5295 = vld [vmem:[#allocation2 + $0x250] sm:$0xff]
      %v5296 = vld [vmem:[#allocation2 + $0x258] sm:$0xff]
      %v5297 = vld [vmem:[#allocation2 + $0x260] sm:$0xff]
      %v5298 = vld [vmem:[#allocation2 + $0x268] sm:$0xff]
      %v5299 = vld [vmem:[#allocation2 + $0x270] sm:$0xff]
      %v5300 = vld [vmem:[#allocation2 + $0x278] sm:$0xff]
      %v5301 = vld [vmem:[#allocation2 + $0x280] sm:$0xff]
      %v5302 = vld [vmem:[#allocation2 + $0x288] sm:$0xff]
      %v5303 = vld [vmem:[#allocation2 + $0x290] sm:$0xff]
      %v5304 = vld [vmem:[#allocation2 + $0x298] sm:$0xff]
      %v5305 = vld [vmem:[#allocation2 + $0x2a0] sm:$0xff]
      %v5306 = vld [vmem:[#allocation2 + $0x2a8] sm:$0xff]
      %v5307 = vld [vmem:[#allocation2 + $0x2b0] sm:$0xff]
      %v5308 = vld [vmem:[#allocation2 + $0x2b8] sm:$0xff]
      %v5309 = vld [vmem:[#allocation2 + $0x2c0] sm:$0xff]
      %v5310 = vld [vmem:[#allocation2 + $0x2c8] sm:$0xff]
      %v5311 = vld [vmem:[#allocation2 + $0x2d0] sm:$0xff]
      %v5312 = vld [vmem:[#allocation2 + $0x2d8] sm:$0xff]
      %v5313 = vld [vmem:[#allocation2 + $0x2e0] sm:$0xff]
      %v5314 = vld [vmem:[#allocation2 + $0x2e8] sm:$0xff]
      %v5315 = vld [vmem:[#allocation2 + $0x2f0] sm:$0xff]
      %v5316 = vld [vmem:[#allocation2 + $0x2f8] sm:$0xff]
      %v5317 = vld [vmem:[#allocation2 + $0x300] sm:$0xff]
      %v5318 = vld [vmem:[#allocation2 + $0x308] sm:$0xff]
      %v5319 = vld [vmem:[#allocation2 + $0x310] sm:$0xff]
      %v5320 = vld [vmem:[#allocation2 + $0x318] sm:$0xff]
      %v5321 = vld [vmem:[#allocation2 + $0x320] sm:$0xff]
      %v5322 = vld [vmem:[#allocation2 + $0x328] sm:$0xff]
      %v5323 = vld [vmem:[#allocation2 + $0x330] sm:$0xff]
      %v5324 = vld [vmem:[#allocation2 + $0x338] sm:$0xff]
      %v5326 = vunpack.c.l.b16 %v5220
      %v5327 = vunpack.c.h.b16 %v5220
      %v5328 = vpack.c.b16 %v5326, %v5326
      %v5329 = vpack.c.b16 %v5327, %v5327
      %vm5331 = vcmask 654336
      %v5333 = vsel %vm5331, %v5329, 0
      %5335 = vmatprep.subr.bf16.mxu0 0
      %5336 = vmatpush1.bf16.msra.mxu0 %v5221
      %5337 = vmatprep.subr.bf16.mxu0 0
      %5338 = vmatpush1.bf16.msra.mxu0 %v5222
      %5339 = vmatprep.subr.bf16.mxu0 0
      %5340 = vmatpush1.bf16.msra.mxu0 %v5223
      %5341 = vmatprep.subr.bf16.mxu0 0
      %5342 = vmatpush1.bf16.msra.mxu0 %v5224
      %5343 = vmatprep.subr.bf16.mxu0 0
      %5344 = vmatpush1.bf16.msra.mxu0 %v5225
      %5345 = vmatprep.subr.bf16.mxu0 0
      %5346 = vmatpush1.bf16.msra.mxu0 %v5226
      %5347 = vmatprep.subr.bf16.mxu0 0
      %5348 = vmatpush1.bf16.msra.mxu0 %v5227
      %5349 = vmatprep.subr.bf16.mxu0 0
      %5350 = vmatpush1.bf16.msra.mxu0 %v5228
      %5351 = vmatprep.subr.bf16.mxu0 0
      %5352 = vmatpush1.bf16.msra.mxu0 %v5229
      %5353 = vmatprep.subr.bf16.mxu0 0
      %5354 = vmatpush1.bf16.msra.mxu0 %v5230
      %5355 = vmatprep.subr.bf16.mxu0 0
      %5356 = vmatpush1.bf16.msra.mxu0 %v5231
      %5357 = vmatprep.subr.bf16.mxu0 0
      %5358 = vmatpush1.bf16.msra.mxu0 %v5232
      %5359 = vmatprep.subr.bf16.mxu0 0
      %5360 = vmatpush1.bf16.msra.mxu0 %v5233
      %5361 = vmatprep.subr.bf16.mxu0 0
      %5362 = vmatpush1.bf16.msra.mxu0 0
      %5363 = vmatprep.subr.bf16.mxu0 0
      %5364 = vmatpush1.bf16.msra.mxu0 0
      %5365 = vmatprep.subr.bf16.mxu0 0
      %5366 = vmatpush1.bf16.msra.mxu0 0
      %5367 = vmatprep.mubr.bf16.mxu0 %v5333
      %5368 = vmatmul.mubr.bf16.gmra.mrb[0].mxu0 %v5328
      %v5369 = vpop.f32.mrb[0].mxu0
      %v5370 = vadd.f32 0.0, %v5369
      %v5371 = vpop.f32.mrb[0].mxu0
      %v5372 = vpop.f32.mrb[0].mxu0
      %v5373 = vpop.f32.mrb[0].mxu0
      %5374 = vdwg.mxu0
      %5375 = vmatprep.subr.bf16.mxu0 0
      %5376 = vmatpush1.bf16.msra.mxu0 %v5234
      %5377 = vmatprep.subr.bf16.mxu0 0
      %5378 = vmatpush1.bf16.msra.mxu0 %v5235
      %5379 = vmatprep.subr.bf16.mxu0 0
      %5380 = vmatpush1.bf16.msra.mxu0 %v5236
      %5381 = vmatprep.subr.bf16.mxu0 0
      %5382 = vmatpush1.bf16.msra.mxu0 %v5237
      %5383 = vmatprep.subr.bf16.mxu0 0
      %5384 = vmatpush1.bf16.msra.mxu0 %v5238
      %5385 = vmatprep.subr.bf16.mxu0 0
      %5386 = vmatpush1.bf16.msra.mxu0 %v5239
      %5387 = vmatprep.subr.bf16.mxu0 0
      %5388 = vmatpush1.bf16.msra.mxu0 %v5240
      %5389 = vmatprep.subr.bf16.mxu0 0
      %5390 = vmatpush1.bf16.msra.mxu0 %v5241
      %5391 = vmatprep.subr.bf16.mxu0 0
      %5392 = vmatpush1.bf16.msra.mxu0 %v5242
      %5393 = vmatprep.subr.bf16.mxu0 0
      %5394 = vmatpush1.bf16.msra.mxu0 %v5243
      %5395 = vmatprep.subr.bf16.mxu0 0
      %5396 = vmatpush1.bf16.msra.mxu0 %v5244
      %5397 = vmatprep.subr.bf16.mxu0 0
      %5398 = vmatpush1.bf16.msra.mxu0 %v5245
      %5399 = vmatprep.subr.bf16.mxu0 0
      %5400 = vmatpush1.bf16.msra.mxu0 %v5246
      %5401 = vmatprep.subr.bf16.mxu0 0
      %5402 = vmatpush1.bf16.msra.mxu0 0
      %5403 = vmatprep.subr.bf16.mxu0 0
      %5404 = vmatpush1.bf16.msra.mxu0 0
      %5405 = vmatprep.subr.bf16.mxu0 0
      %5406 = vmatpush1.bf16.msra.mxu0 0
      %5407 = vmatprep.mubr.bf16.mxu0 %v5333
      %5408 = vmatmul.mubr.bf16.gmra.mrb[0].mxu0 %v5328
      %v5409 = vpop.f32.mrb[0].mxu0
      %v5410 = vadd.f32 0.0, %v5409
      %v5411 = vpop.f32.mrb[0].mxu0
      %v5412 = vpop.f32.mrb[0].mxu0
      %v5413 = vpop.f32.mrb[0].mxu0
      %5414 = vdwg.mxu0
      %5415 = vmatprep.subr.bf16.mxu0 0
      %5416 = vmatpush1.bf16.msra.mxu0 %v5247
      %5417 = vmatprep.subr.bf16.mxu0 0
      %5418 = vmatpush1.bf16.msra.mxu0 %v5248
      %5419 = vmatprep.subr.bf16.mxu0 0
      %5420 = vmatpush1.bf16.msra.mxu0 %v5249
      %5421 = vmatprep.subr.bf16.mxu0 0
      %5422 = vmatpush1.bf16.msra.mxu0 %v5250
      %5423 = vmatprep.subr.bf16.mxu0 0
      %5424 = vmatpush1.bf16.msra.mxu0 %v5251
      %5425 = vmatprep.subr.bf16.mxu0 0
      %5426 = vmatpush1.bf16.msra.mxu0 %v5252
      %5427 = vmatprep.subr.bf16.mxu0 0
      %5428 = vmatpush1.bf16.msra.mxu0 %v5253
      %5429 = vmatprep.subr.bf16.mxu0 0
      %5430 = vmatpush1.bf16.msra.mxu0 %v5254
      %5431 = vmatprep.subr.bf16.mxu0 0
      %5432 = vmatpush1.bf16.msra.mxu0 %v5255
      %5433 = vmatprep.subr.bf16.mxu0 0
      %5434 = vmatpush1.bf16.msra.mxu0 %v5256
      %5435 = vmatprep.subr.bf16.mxu0 0
      %5436 = vmatpush1.bf16.msra.mxu0 %v5257
      %5437 = vmatprep.subr.bf16.mxu0 0
      %5438 = vmatpush1.bf16.msra.mxu0 %v5258
      %5439 = vmatprep.subr.bf16.mxu0 0
      %5440 = vmatpush1.bf16.msra.mxu0 %v5259
      %5441 = vmatprep.subr.bf16.mxu0 0
      %5442 = vmatpush1.bf16.msra.mxu0 0
      %5443 = vmatprep.subr.bf16.mxu0 0
      %5444 = vmatpush1.bf16.msra.mxu0 0
      %5445 = vmatprep.subr.bf16.mxu0 0
      %5446 = vmatpush1.bf16.msra.mxu0 0
      %5447 = vmatprep.mubr.bf16.mxu0 %v5333
      %5448 = vmatmul.mubr.bf16.gmra.mrb[0].mxu0 %v5328
      %v5449 = vpop.f32.mrb[0].mxu0
      %v5450 = vadd.f32 0.0, %v5449
      %v5451 = vpop.f32.mrb[0].mxu0
      %v5452 = vpop.f32.mrb[0].mxu0
      %v5453 = vpop.f32.mrb[0].mxu0
      %5454 = vdwg.mxu0
      %5455 = vmatprep.subr.bf16.mxu0 0
      %5456 = vmatpush1.bf16.msra.mxu0 %v5260
      %5457 = vmatprep.subr.bf16.mxu0 0
      %5458 = vmatpush1.bf16.msra.mxu0 %v5261
      %5459 = vmatprep.subr.bf16.mxu0 0
      %5460 = vmatpush1.bf16.msra.mxu0 %v5262
      %5461 = vmatprep.subr.bf16.mxu0 0
      %5462 = vmatpush1.bf16.msra.mxu0 %v5263
      %5463 = vmatprep.subr.bf16.mxu0 0
      %5464 = vmatpush1.bf16.msra.mxu0 %v5264
      %5465 = vmatprep.subr.bf16.mxu0 0
      %5466 = vmatpush1.bf16.msra.mxu0 %v5265
      %5467 = vmatprep.subr.bf16.mxu0 0
      %5468 = vmatpush1.bf16.msra.mxu0 %v5266
      %5469 = vmatprep.subr.bf16.mxu0 0
      %5470 = vmatpush1.bf16.msra.mxu0 %v5267
      %5471 = vmatprep.subr.bf16.mxu0 0
      %5472 = vmatpush1.bf16.msra.mxu0 %v5268
      %5473 = vmatprep.subr.bf16.mxu0 0
      %5474 = vmatpush1.bf16.msra.mxu0 %v5269
      %5475 = vmatprep.subr.bf16.mxu0 0
      %5476 = vmatpush1.bf16.msra.mxu0 %v5270
      %5477 = vmatprep.subr.bf16.mxu0 0
      %5478 = vmatpush1.bf16.msra.mxu0 %v5271
      %5479 = vmatprep.subr.bf16.mxu0 0
      %5480 = vmatpush1.bf16.msra.mxu0 %v5272
      %5481 = vmatprep.subr.bf16.mxu0 0
      %5482 = vmatpush1.bf16.msra.mxu0 0
      %5483 = vmatprep.subr.bf16.mxu0 0
      %5484 = vmatpush1.bf16.msra.mxu0 0
      %5485 = vmatprep.subr.bf16.mxu0 0
      %5486 = vmatpush1.bf16.msra.mxu0 0
      %5487 = vmatprep.mubr.bf16.mxu0 %v5333
      %5488 = vmatmul.mubr.bf16.gmra.mrb[0].mxu0 %v5328
      %v5489 = vpop.f32.mrb[0].mxu0
      %v5490 = vadd.f32 0.0, %v5489
      %v5491 = vpop.f32.mrb[0].mxu0
      %v5492 = vpop.f32.mrb[0].mxu0
      %v5493 = vpop.f32.mrb[0].mxu0
      %5494 = vdwg.mxu0
      %5495 = vmatprep.subr.bf16.mxu0 0
      %5496 = vmatpush1.bf16.msra.mxu0 %v5273
      %5497 = vmatprep.subr.bf16.mxu0 0
      %5498 = vmatpush1.bf16.msra.mxu0 %v5274
      %5499 = vmatprep.subr.bf16.mxu0 0
      %5500 = vmatpush1.bf16.msra.mxu0 %v5275
      %5501 = vmatprep.subr.bf16.mxu0 0
      %5502 = vmatpush1.bf16.msra.mxu0 %v5276
      %5503 = vmatprep.subr.bf16.mxu0 0
      %5504 = vmatpush1.bf16.msra.mxu0 %v5277
      %5505 = vmatprep.subr.bf16.mxu0 0
      %5506 = vmatpush1.bf16.msra.mxu0 %v5278
      %5507 = vmatprep.subr.bf16.mxu0 0
      %5508 = vmatpush1.bf16.msra.mxu0 %v5279
      %5509 = vmatprep.subr.bf16.mxu0 0
      %5510 = vmatpush1.bf16.msra.mxu0 %v5280
      %5511 = vmatprep.subr.bf16.mxu0 0
      %5512 = vmatpush1.bf16.msra.mxu0 %v5281
      %5513 = vmatprep.subr.bf16.mxu0 0
      %5514 = vmatpush1.bf16.msra.mxu0 %v5282
      %5515 = vmatprep.subr.bf16.mxu0 0
      %5516 = vmatpush1.bf16.msra.mxu0 %v5283
      %5517 = vmatprep.subr.bf16.mxu0 0
      %5518 = vmatpush1.bf16.msra.mxu0 %v5284
      %5519 = vmatprep.subr.bf16.mxu0 0
      %5520 = vmatpush1.bf16.msra.mxu0 %v5285
      %5521 = vmatprep.subr.bf16.mxu0 0
      %5522 = vmatpush1.bf16.msra.mxu0 0
      %5523 = vmatprep.subr.bf16.mxu0 0
      %5524 = vmatpush1.bf16.msra.mxu0 0
      %5525 = vmatprep.subr.bf16.mxu0 0
      %5526 = vmatpush1.bf16.msra.mxu0 0
      %5527 = vmatprep.mubr.bf16.mxu0 %v5333
      %5528 = vmatmul.mubr.bf16.gmra.mrb[0].mxu0 %v5328
      %v5529 = vpop.f32.mrb[0].mxu0
      %v5530 = vadd.f32 0.0, %v5529
      %v5531 = vpop.f32.mrb[0].mxu0
      %v5532 = vpop.f32.mrb[0].mxu0
      %v5533 = vpop.f32.mrb[0].mxu0
      %5534 = vdwg.mxu0
      %5535 = vmatprep.subr.bf16.mxu0 0
      %5536 = vmatpush1.bf16.msra.mxu0 %v5286
      %5537 = vmatprep.subr.bf16.mxu0 0
      %5538 = vmatpush1.bf16.msra.mxu0 %v5287
      %5539 = vmatprep.subr.bf16.mxu0 0
      %5540 = vmatpush1.bf16.msra.mxu0 %v5288
      %5541 = vmatprep.subr.bf16.mxu0 0
      %5542 = vmatpush1.bf16.msra.mxu0 %v5289
      %5543 = vmatprep.subr.bf16.mxu0 0
      %5544 = vmatpush1.bf16.msra.mxu0 %v5290
      %5545 = vmatprep.subr.bf16.mxu0 0
      %5546 = vmatpush1.bf16.msra.mxu0 %v5291
      %5547 = vmatprep.subr.bf16.mxu0 0
      %5548 = vmatpush1.bf16.msra.mxu0 %v5292
      %5549 = vmatprep.subr.bf16.mxu0 0
      %5550 = vmatpush1.bf16.msra.mxu0 %v5293
      %5551 = vmatprep.subr.bf16.mxu0 0
      %5552 = vmatpush1.bf16.msra.mxu0 %v5294
      %5553 = vmatprep.subr.bf16.mxu0 0
      %5554 = vmatpush1.bf16.msra.mxu0 %v5295
      %5555 = vmatprep.subr.bf16.mxu0 0
      %5556 = vmatpush1.bf16.msra.mxu0 %v5296
      %5557 = vmatprep.subr.bf16.mxu0 0
      %5558 = vmatpush1.bf16.msra.mxu0 %v5297
      %5559 = vmatprep.subr.bf16.mxu0 0
      %5560 = vmatpush1.bf16.msra.mxu0 %v5298
      %5561 = vmatprep.subr.bf16.mxu0 0
      %5562 = vmatpush1.bf16.msra.mxu0 0
      %5563 = vmatprep.subr.bf16.mxu0 0
      %5564 = vmatpush1.bf16.msra.mxu0 0
      %5565 = vmatprep.subr.bf16.mxu0 0
      %5566 = vmatpush1.bf16.msra.mxu0 0
      %5567 = vmatprep.mubr.bf16.mxu0 %v5333
      %5568 = vmatmul.mubr.bf16.gmra.mrb[0].mxu0 %v5328
      %v5569 = vpop.f32.mrb[0].mxu0
      %v5570 = vadd.f32 0.0, %v5569
      %v5571 = vpop.f32.mrb[0].mxu0
      %v5572 = vpop.f32.mrb[0].mxu0
      %v5573 = vpop.f32.mrb[0].mxu0
      %5574 = vdwg.mxu0
      %5575 = vmatprep.subr.bf16.mxu0 0
      %5576 = vmatpush1.bf16.msra.mxu0 %v5299
      %5577 = vmatprep.subr.bf16.mxu0 0
      %5578 = vmatpush1.bf16.msra.mxu0 %v5300
      %5579 = vmatprep.subr.bf16.mxu0 0
      %5580 = vmatpush1.bf16.msra.mxu0 %v5301
      %5581 = vmatprep.subr.bf16.mxu0 0
      %5582 = vmatpush1.bf16.msra.mxu0 %v5302
      %5583 = vmatprep.subr.bf16.mxu0 0
      %5584 = vmatpush1.bf16.msra.mxu0 %v5303
      %5585 = vmatprep.subr.bf16.mxu0 0
      %5586 = vmatpush1.bf16.msra.mxu0 %v5304
      %5587 = vmatprep.subr.bf16.mxu0 0
      %5588 = vmatpush1.bf16.msra.mxu0 %v5305
      %5589 = vmatprep.subr.bf16.mxu0 0
      %5590 = vmatpush1.bf16.msra.mxu0 %v5306
      %5591 = vmatprep.subr.bf16.mxu0 0
      %5592 = vmatpush1.bf16.msra.mxu0 %v5307
      %5593 = vmatprep.subr.bf16.mxu0 0
      %5594 = vmatpush1.bf16.msra.mxu0 %v5308
      %5595 = vmatprep.subr.bf16.mxu0 0
      %5596 = vmatpush1.bf16.msra.mxu0 %v5309
      %5597 = vmatprep.subr.bf16.mxu0 0
      %5598 = vmatpush1.bf16.msra.mxu0 %v5310
      %5599 = vmatprep.subr.bf16.mxu0 0
      %5600 = vmatpush1.bf16.msra.mxu0 %v5311
      %5601 = vmatprep.subr.bf16.mxu0 0
      %5602 = vmatpush1.bf16.msra.mxu0 0
      %5603 = vmatprep.subr.bf16.mxu0 0
      %5604 = vmatpush1.bf16.msra.mxu0 0
      %5605 = vmatprep.subr.bf16.mxu0 0
      %5606 = vmatpush1.bf16.msra.mxu0 0
      %5607 = vmatprep.mubr.bf16.mxu0 %v5333
      %5608 = vmatmul.mubr.bf16.gmra.mrb[0].mxu0 %v5328
      %v5609 = vpop.f32.mrb[0].mxu0
      %v5610 = vadd.f32 0.0, %v5609
      %v5611 = vpop.f32.mrb[0].mxu0
      %v5612 = vpop.f32.mrb[0].mxu0
      %v5613 = vpop.f32.mrb[0].mxu0
      %5614 = vdwg.mxu0
      %5615 = vmatprep.subr.bf16.mxu0 0
      %5616 = vmatpush1.bf16.msra.mxu0 %v5312
      %5617 = vmatprep.subr.bf16.mxu0 0
      %5618 = vmatpush1.bf16.msra.mxu0 %v5313
      %5619 = vmatprep.subr.bf16.mxu0 0
      %5620 = vmatpush1.bf16.msra.mxu0 %v5314
      %5621 = vmatprep.subr.bf16.mxu0 0
      %5622 = vmatpush1.bf16.msra.mxu0 %v5315
      %5623 = vmatprep.subr.bf16.mxu0 0
      %5624 = vmatpush1.bf16.msra.mxu0 %v5316
      %5625 = vmatprep.subr.bf16.mxu0 0
      %5626 = vmatpush1.bf16.msra.mxu0 %v5317
      %5627 = vmatprep.subr.bf16.mxu0 0
      %5628 = vmatpush1.bf16.msra.mxu0 %v5318
      %5629 = vmatprep.subr.bf16.mxu0 0
      %5630 = vmatpush1.bf16.msra.mxu0 %v5319
      %5631 = vmatprep.subr.bf16.mxu0 0
      %5632 = vmatpush1.bf16.msra.mxu0 %v5320
      %5633 = vmatprep.subr.bf16.mxu0 0
      %5634 = vmatpush1.bf16.msra.mxu0 %v5321
      %5635 = vmatprep.subr.bf16.mxu0 0
      %5636 = vmatpush1.bf16.msra.mxu0 %v5322
      %5637 = vmatprep.subr.bf16.mxu0 0
      %5638 = vmatpush1.bf16.msra.mxu0 %v5323
      %5639 = vmatprep.subr.bf16.mxu0 0
      %5640 = vmatpush1.bf16.msra.mxu0 %v5324
      %5641 = vmatprep.subr.bf16.mxu0 0
      %5642 = vmatpush1.bf16.msra.mxu0 0
      %5643 = vmatprep.subr.bf16.mxu0 0
      %5644 = vmatpush1.bf16.msra.mxu0 0
      %5645 = vmatprep.subr.bf16.mxu0 0
      %5646 = vmatpush1.bf16.msra.mxu0 0
      %5647 = vmatprep.mubr.bf16.mxu0 %v5333
      %5648 = vmatmul.mubr.bf16.gmra.mrb[0].mxu0 %v5328
      %v5649 = vpop.f32.mrb[0].mxu0
      %v5650 = vadd.f32 0.0, %v5649
      %v5651 = vpop.f32.mrb[0].mxu0
      %v5652 = vpop.f32.mrb[0].mxu0
      %v5653 = vpop.f32.mrb[0].mxu0
      %5654 = vdwg.mxu0
      %vm5655 = vcmask 64512
      %v5656 = vsel %vm5655, %v5370, 0.0
      %5657 = vadd.xlane.f32.xlu0 %v5656
      %v5658 = vpop.xlane.xlu0 %5657
      %v5659 = vsel %vm5655, %v5410, 0.0
      %5660 = vadd.xlane.f32.xlu0 %v5659
      %v5661 = vpop.xlane.xlu0 %5660
      %v5662 = vsel %vm5655, %v5450, 0.0
      %5663 = vadd.xlane.f32.xlu0 %v5662
      %v5664 = vpop.xlane.xlu0 %5663
      %v5665 = vsel %vm5655, %v5490, 0.0
      %5666 = vadd.xlane.f32.xlu0 %v5665
      %v5667 = vpop.xlane.xlu0 %5666
      %v5668 = vsel %vm5655, %v5530, 0.0
      %5669 = vadd.xlane.f32.xlu0 %v5668
      %v5670 = vpop.xlane.xlu0 %5669
      %v5671 = vsel %vm5655, %v5570, 0.0
      %5672 = vadd.xlane.f32.xlu0 %v5671
      %v5673 = vpop.xlane.xlu0 %5672
      %v5674 = vsel %vm5655, %v5610, 0.0
      %5675 = vadd.xlane.f32.xlu0 %v5674
      %v5676 = vpop.xlane.xlu0 %5675
      %v5677 = vsel %vm5655, %v5650, 0.0
      %5678 = vadd.xlane.f32.xlu0 %v5677
      %v5679 = vpop.xlane.xlu0 %5678
      %v5680 = vadd.f32 %v5658, %v5661
      %v5681 = vadd.f32 %v5680, %v5664
      %v5682 = vadd.f32 %v5681, %v5667
      %v5683 = vadd.f32 %v5682, %v5670
      %v5684 = vadd.f32 %v5683, %v5673
      %v5685 = vadd.f32 %v5684, %v5676
      %v5686 = vadd.f32 %v5685, %v5679
      %v5687 = vmul.f32 %v5686, 0.015625
      %v5688 = vsub.f32 %v5370, %v5687
      %v5689 = vsub.f32 %v5410, %v5687
      %v5690 = vsub.f32 %v5450, %v5687
      %v5691 = vsub.f32 %v5490, %v5687
      %v5692 = vsub.f32 %v5530, %v5687
      %v5693 = vsub.f32 %v5570, %v5687
      %v5694 = vsub.f32 %v5610, %v5687
      %v5695 = vsub.f32 %v5650, %v5687
      %v5696 = vmul.f32 %v5688, %v5688
      %v5697 = vmul.f32 %v5689, %v5689
      %v5698 = vmul.f32 %v5690, %v5690
      %v5699 = vmul.f32 %v5691, %v5691
      %v5700 = vmul.f32 %v5692, %v5692
      %v5701 = vmul.f32 %v5693, %v5693
      %v5702 = vmul.f32 %v5694, %v5694
      %v5703 = vmul.f32 %v5695, %v5695
      %v5704 = vsel %vm5655, %v5696, 0.0
      %5705 = vadd.xlane.f32.xlu0 %v5704
      %v5706 = vpop.xlane.xlu0 %5705
      %v5707 = vsel %vm5655, %v5697, 0.0
      %5708 = vadd.xlane.f32.xlu0 %v5707
      %v5709 = vpop.xlane.xlu0 %5708
      %v5710 = vsel %vm5655, %v5698, 0.0
      %5711 = vadd.xlane.f32.xlu0 %v5710
      %v5712 = vpop.xlane.xlu0 %5711
      %v5713 = vsel %vm5655, %v5699, 0.0
      %5714 = vadd.xlane.f32.xlu0 %v5713
      %v5715 = vpop.xlane.xlu0 %5714
      %v5716 = vsel %vm5655, %v5700, 0.0
      %5717 = vadd.xlane.f32.xlu0 %v5716
      %v5718 = vpop.xlane.xlu0 %5717
      %v5719 = vsel %vm5655, %v5701, 0.0
      %5720 = vadd.xlane.f32.xlu0 %v5719
      %v5721 = vpop.xlane.xlu0 %5720
      %v5722 = vsel %vm5655, %v5702, 0.0
      %5723 = vadd.xlane.f32.xlu0 %v5722
      %v5724 = vpop.xlane.xlu0 %5723
      %v5725 = vsel %vm5655, %v5703, 0.0
      %5726 = vadd.xlane.f32.xlu0 %v5725
      %v5727 = vpop.xlane.xlu0 %5726
      %v5728 = vadd.f32 %v5706, %v5709
      %v5729 = vadd.f32 %v5728, %v5712
      %v5730 = vadd.f32 %v5729, %v5715
      %v5731 = vadd.f32 %v5730, %v5718
      %v5732 = vadd.f32 %v5731, %v5721
      %v5733 = vadd.f32 %v5732, %v5724
      %v5734 = vadd.f32 %v5733, %v5727
      %v5735 = vmul.f32 %v5734, 0.015625
      %v5736 = vld [vmem:[%s2] sm:$0xff]
      %v5737 = vadd.f32 %v5735, 1e-05
      %v5738 = vrsqrt.pop %v5737
      %v5739 = vmul.f32 %v5736, %v5738
      %5741 = vset.pattern.permute.xlu0 0
      %5742 = vperm.xlu0 %5741, %v5739
      %v5743 = vpop.permute.xlu0 %5742
      %v5745 = vmul.f32 %v5688, %v5743
      %v5746 = vmul.f32 %v5689, %v5743
      %v5747 = vmul.f32 %v5690, %v5743
      %v5748 = vmul.f32 %v5691, %v5743
      %v5749 = vmul.f32 %v5692, %v5743
      %v5750 = vmul.f32 %v5693, %v5743
      %v5751 = vmul.f32 %v5694, %v5743
      %v5752 = vmul.f32 %v5695, %v5743
      %v5753 = vld [vmem:[%s3] sm:$0xff]
      %5755 = vset.pattern.permute.xlu0 0
      %5756 = vperm.xlu0 %5755, %v5753
      %v5757 = vpop.permute.xlu0 %5756
      %v5759 = vadd.f32 %v5745, %v5757
      %v5760 = vadd.f32 %v5746, %v5757
      %v5761 = vadd.f32 %v5747, %v5757
      %v5762 = vadd.f32 %v5748, %v5757
      %v5763 = vadd.f32 %v5749, %v5757
      %v5764 = vadd.f32 %v5750, %v5757
      %v5765 = vadd.f32 %v5751, %v5757
      %v5766 = vadd.f32 %v5752, %v5757
      %v5767 = vmax.f32 %v5759, 0.0
      %v5768 = vmax.f32 %v5760, 0.0
      %v5769 = vmax.f32 %v5761, 0.0
      %v5770 = vmax.f32 %v5762, 0.0
      %v5771 = vmax.f32 %v5763, 0.0
      %v5772 = vmax.f32 %v5764, 0.0
      %v5773 = vmax.f32 %v5765, 0.0
      %v5774 = vmax.f32 %v5766, 0.0
      %v5775 = vmax.f32 %v5767, %v5768
      %v5776 = vmax.f32 %v5769, %v5770
      %v5777 = vmax.f32 %v5771, %v5772
      %v5778 = vmax.f32 %v5773, %v5774
      %v5779 = vmax.f32 %v5775, 0.0
      %v5780 = vmax.f32 %v5776, %v5768
      %v5781 = vmax.f32 %v5777, %v5770
      %v5782 = vmax.f32 %v5778, %v5772
      %v5783 = vld [vmem:[%s4] sm:$0xff]
      %v5785 = vsel %vm5655, %v5779, 0
      %v5788 = vsel %vm5655, %v5780, 0
      %v5791 = vsel %vm5655, %v5781, 0
      %v5794 = vsel %vm5655, %v5782, 0
      %5796 = vmatprep.subr.mxu0 0.0
      %5797 = vmatpush1.msra.mxu0 %v5783
      %5798 = vmatprep.subr.mxu0 0.0
      %5799 = vmatpush1.msra.mxu0 0.0
      %5800 = vmatprep.subr.mxu0 0.0
      %5801 = vmatpush1.msra.mxu0 0.0
      %5802 = vmatprep.subr.mxu0 0.0
      %5803 = vmatpush1.msra.mxu0 0.0
      %5804 = vmatprep.subr.mxu0 0.0
      %5805 = vmatpush1.msra.mxu0 0.0
      %5806 = vmatprep.subr.mxu0 0.0
      %5807 = vmatpush1.msra.mxu0 0.0
      %5808 = vmatprep.subr.mxu0 0.0
      %5809 = vmatpush1.msra.mxu0 0.0
      %5810 = vmatprep.subr.mxu0 0.0
      %5811 = vmatpush1.msra.mxu0 0.0
      %5812 = vmatprep.subr.mxu0 0.0
      %5813 = vmatpush1.msra.mxu0 0.0
      %5814 = vmatprep.subr.mxu0 0.0
      %5815 = vmatpush1.msra.mxu0 0.0
      %5816 = vmatprep.subr.mxu0 0.0
      %5817 = vmatpush1.msra.mxu0 0.0
      %5818 = vmatprep.subr.mxu0 0.0
      %5819 = vmatpush1.msra.mxu0 0.0
      %5820 = vmatprep.subr.mxu0 0.0
      %5821 = vmatpush1.msra.mxu0 0.0
      %5822 = vmatprep.subr.mxu0 0.0
      %5823 = vmatpush1.msra.mxu0 0.0
      %5824 = vmatprep.subr.mxu0 0.0
      %5825 = vmatpush1.msra.mxu0 0.0
      %5826 = vmatprep.subr.mxu0 0.0
      %5827 = vmatpush1.msra.mxu0 0.0
      %5828 = vmatprep.subr.mxu0 0.0
      %5829 = vmatpush1.msra.mxu0 0.0
      %5830 = vmatprep.subr.mxu0 0.0
      %5831 = vmatpush1.msra.mxu0 0.0
      %5832 = vmatprep.subr.mxu0 0.0
      %5833 = vmatpush1.msra.mxu0 0.0
      %5834 = vmatprep.subr.mxu0 0.0
      %5835 = vmatpush1.msra.mxu0 0.0
      %5836 = vmatprep.subr.mxu0 0.0
      %5837 = vmatpush1.msra.mxu0 0.0
      %5838 = vmatprep.subr.mxu0 0.0
      %5839 = vmatpush1.msra.mxu0 0.0
      %5840 = vmatprep.subr.mxu0 0.0
      %5841 = vmatpush1.msra.mxu0 0.0
      %5842 = vmatprep.subr.mxu0 0.0
      %5843 = vmatpush1.msra.mxu0 0.0
      %5844 = vmatprep.subr.mxu0 0.0
      %5845 = vmatpush1.msra.mxu0 0.0
      %5846 = vmatprep.subr.mxu0 0.0
      %5847 = vmatpush1.msra.mxu0 0.0
      %5848 = vmatprep.subr.mxu0 0.0
      %5849 = vmatpush1.msra.mxu0 0.0
      %5850 = vmatprep.subr.mxu0 0.0
      %5851 = vmatpush1.msra.mxu0 0.0
      %5852 = vmatprep.subr.mxu0 0.0
      %5853 = vmatpush1.msra.mxu0 0.0
      %5854 = vmatprep.subr.mxu0 0.0
      %5855 = vmatpush1.msra.mxu0 0.0
      %5856 = vmatprep.subr.mxu0 0.0
      %5857 = vmatpush1.msra.mxu0 0.0
      %5858 = vmatprep.subr.mxu0 0.0
      %5859 = vmatpush1.msra.mxu0 0.0
      %5860 = vmatprep.mubr.f32.mxu0 0.0
      %5861 = vmatmul.mubr.f32.gmra.mrb[0].mxu0 %v5785
      %v5862 = vpop.f32.mrb[0].mxu0
      %v5863 = vadd.f32 0.0, %v5862
      %v5864 = vpop.f32.mrb[0].mxu0
      %5865 = vmatprep.mubr.f32.mxu0 0.0
      %5866 = vmatmul.mubr.f32.gmra.mrb[0].mxu0 %v5788
      %v5867 = vpop.f32.mrb[0].mxu0
      %v5868 = vadd.f32 0.0, %v5867
      %v5869 = vpop.f32.mrb[0].mxu0
      %5870 = vmatprep.mubr.f32.mxu0 0.0
      %5871 = vmatmul.mubr.f32.gmra.mrb[0].mxu0 %v5791
      %v5872 = vpop.f32.mrb[0].mxu0
      %v5873 = vadd.f32 0.0, %v5872
      %v5874 = vpop.f32.mrb[0].mxu0
      %5875 = vmatprep.mubr.f32.mxu0 0.0
      %5876 = vmatmul.mubr.f32.gmra.mrb[0].mxu0 %v5794
      %v5877 = vpop.f32.mrb[0].mxu0
      %v5878 = vadd.f32 0.0, %v5877
      %v5879 = vpop.f32.mrb[0].mxu0
      %5880 = vdwg.mxu0
      %s5881 = scalar_lea.vmem %s4, 8
      %v5882 = vld [vmem:[%s5881] sm:$0xff]
      %5883 = vmatprep.subr.mxu0 0.0
      %5884 = vmatpush1.msra.mxu0 %v5882
      %5885 = vmatprep.subr.mxu0 0.0
      %5886 = vmatpush1.msra.mxu0 0.0
      %5887 = vmatprep.subr.mxu0 0.0
      %5888 = vmatpush1.msra.mxu0 0.0
      %5889 = vmatprep.subr.mxu0 0.0
      %5890 = vmatpush1.msra.mxu0 0.0
      %5891 = vmatprep.subr.mxu0 0.0
      %5892 = vmatpush1.msra.mxu0 0.0
      %5893 = vmatprep.subr.mxu0 0.0
      %5894 = vmatpush1.msra.mxu0 0.0
      %5895 = vmatprep.subr.mxu0 0.0
      %5896 = vmatpush1.msra.mxu0 0.0
      %5897 = vmatprep.subr.mxu0 0.0
      %5898 = vmatpush1.msra.mxu0 0.0
      %5899 = vmatprep.subr.mxu0 0.0
      %5900 = vmatpush1.msra.mxu0 0.0
      %5901 = vmatprep.subr.mxu0 0.0
      %5902 = vmatpush1.msra.mxu0 0.0
      %5903 = vmatprep.subr.mxu0 0.0
      %5904 = vmatpush1.msra.mxu0 0.0
      %5905 = vmatprep.subr.mxu0 0.0
      %5906 = vmatpush1.msra.mxu0 0.0
      %5907 = vmatprep.subr.mxu0 0.0
      %5908 = vmatpush1.msra.mxu0 0.0
      %5909 = vmatprep.subr.mxu0 0.0
      %5910 = vmatpush1.msra.mxu0 0.0
      %5911 = vmatprep.subr.mxu0 0.0
      %5912 = vmatpush1.msra.mxu0 0.0
      %5913 = vmatprep.subr.mxu0 0.0
      %5914 = vmatpush1.msra.mxu0 0.0
      %5915 = vmatprep.subr.mxu0 0.0
      %5916 = vmatpush1.msra.mxu0 0.0
      %5917 = vmatprep.subr.mxu0 0.0
      %5918 = vmatpush1.msra.mxu0 0.0
      %5919 = vmatprep.subr.mxu0 0.0
      %5920 = vmatpush1.msra.mxu0 0.0
      %5921 = vmatprep.subr.mxu0 0.0
      %5922 = vmatpush1.msra.mxu0 0.0
      %5923 = vmatprep.subr.mxu0 0.0
      %5924 = vmatpush1.msra.mxu0 0.0
      %5925 = vmatprep.subr.mxu0 0.0
      %5926 = vmatpush1.msra.mxu0 0.0
      %5927 = vmatprep.subr.mxu0 0.0
      %5928 = vmatpush1.msra.mxu0 0.0
      %5929 = vmatprep.subr.mxu0 0.0
      %5930 = vmatpush1.msra.mxu0 0.0
      %5931 = vmatprep.subr.mxu0 0.0
      %5932 = vmatpush1.msra.mxu0 0.0
      %5933 = vmatprep.subr.mxu0 0.0
      %5934 = vmatpush1.msra.mxu0 0.0
      %5935 = vmatprep.subr.mxu0 0.0
      %5936 = vmatpush1.msra.mxu0 0.0
      %5937 = vmatprep.subr.mxu0 0.0
      %5938 = vmatpush1.msra.mxu0 0.0
      %5939 = vmatprep.subr.mxu0 0.0
      %5940 = vmatpush1.msra.mxu0 0.0
      %5941 = vmatprep.subr.mxu0 0.0
      %5942 = vmatpush1.msra.mxu0 0.0
      %5943 = vmatprep.subr.mxu0 0.0
      %5944 = vmatpush1.msra.mxu0 0.0
      %5945 = vmatprep.subr.mxu0 0.0
      %5946 = vmatpush1.msra.mxu0 0.0
      %5947 = vmatprep.mubr.f32.mxu0 0.0
      %5948 = vmatmul.mubr.f32.gmra.mrb[0].mxu0 %v5785
      %v5949 = vpop.f32.mrb[0].mxu0
      %v5950 = vadd.f32 0.0, %v5949
      %v5951 = vpop.f32.mrb[0].mxu0
      %5952 = vmatprep.mubr.f32.mxu0 0.0
      %5953 = vmatmul.mubr.f32.gmra.mrb[0].mxu0 %v5788
      %v5954 = vpop.f32.mrb[0].mxu0
      %v5955 = vadd.f32 0.0, %v5954
      %v5956 = vpop.f32.mrb[0].mxu0
      %5957 = vmatprep.mubr.f32.mxu0 0.0
      %5958 = vmatmul.mubr.f32.gmra.mrb[0].mxu0 %v5791
      %v5959 = vpop.f32.mrb[0].mxu0
      %v5960 = vadd.f32 0.0, %v5959
      %v5961 = vpop.f32.mrb[0].mxu0
      %5962 = vmatprep.mubr.f32.mxu0 0.0
      %5963 = vmatmul.mubr.f32.gmra.mrb[0].mxu0 %v5794
      %v5964 = vpop.f32.mrb[0].mxu0
      %v5965 = vadd.f32 0.0, %v5964
      %v5966 = vpop.f32.mrb[0].mxu0
      %5967 = vdwg.mxu0
      %s5968 = scalar_lea.vmem %s4, 16
      %v5969 = vld [vmem:[%s5968] sm:$0xff]
      %5970 = vmatprep.subr.mxu0 0.0
      %5971 = vmatpush1.msra.mxu0 %v5969
      %5972 = vmatprep.subr.mxu0 0.0
      %5973 = vmatpush1.msra.mxu0 0.0
      %5974 = vmatprep.subr.mxu0 0.0
      %5975 = vmatpush1.msra.mxu0 0.0
      %5976 = vmatprep.subr.mxu0 0.0
      %5977 = vmatpush1.msra.mxu0 0.0
      %5978 = vmatprep.subr.mxu0 0.0
      %5979 = vmatpush1.msra.mxu0 0.0
      %5980 = vmatprep.subr.mxu0 0.0
      %5981 = vmatpush1.msra.mxu0 0.0
      %5982 = vmatprep.subr.mxu0 0.0
      %5983 = vmatpush1.msra.mxu0 0.0
      %5984 = vmatprep.subr.mxu0 0.0
      %5985 = vmatpush1.msra.mxu0 0.0
      %5986 = vmatprep.subr.mxu0 0.0
      %5987 = vmatpush1.msra.mxu0 0.0
      %5988 = vmatprep.subr.mxu0 0.0
      %5989 = vmatpush1.msra.mxu0 0.0
      %5990 = vmatprep.subr.mxu0 0.0
      %5991 = vmatpush1.msra.mxu0 0.0
      %5992 = vmatprep.subr.mxu0 0.0
      %5993 = vmatpush1.msra.mxu0 0.0
      %5994 = vmatprep.subr.mxu0 0.0
      %5995 = vmatpush1.msra.mxu0 0.0
      %5996 = vmatprep.subr.mxu0 0.0
      %5997 = vmatpush1.msra.mxu0 0.0
      %5998 = vmatprep.subr.mxu0 0.0
      %5999 = vmatpush1.msra.mxu0 0.0
      %6000 = vmatprep.subr.mxu0 0.0
      %6001 = vmatpush1.msra.mxu0 0.0
      %6002 = vmatprep.subr.mxu0 0.0
      %6003 = vmatpush1.msra.mxu0 0.0
      %6004 = vmatprep.subr.mxu0 0.0
      %6005 = vmatpush1.msra.mxu0 0.0
      %6006 = vmatprep.subr.mxu0 0.0
      %6007 = vmatpush1.msra.mxu0 0.0
      %6008 = vmatprep.subr.mxu0 0.0
      %6009 = vmatpush1.msra.mxu0 0.0
      %6010 = vmatprep.subr.mxu0 0.0
      %6011 = vmatpush1.msra.mxu0 0.0
      %6012 = vmatprep.subr.mxu0 0.0
      %6013 = vmatpush1.msra.mxu0 0.0
      %6014 = vmatprep.subr.mxu0 0.0
      %6015 = vmatpush1.msra.mxu0 0.0
      %6016 = vmatprep.subr.mxu0 0.0
      %6017 = vmatpush1.msra.mxu0 0.0
      %6018 = vmatprep.subr.mxu0 0.0
      %6019 = vmatpush1.msra.mxu0 0.0
      %6020 = vmatprep.subr.mxu0 0.0
      %6021 = vmatpush1.msra.mxu0 0.0
      %6022 = vmatprep.subr.mxu0 0.0
      %6023 = vmatpush1.msra.mxu0 0.0
      %6024 = vmatprep.subr.mxu0 0.0
      %6025 = vmatpush1.msra.mxu0 0.0
      %6026 = vmatprep.subr.mxu0 0.0
      %6027 = vmatpush1.msra.mxu0 0.0
      %6028 = vmatprep.subr.mxu0 0.0
      %6029 = vmatpush1.msra.mxu0 0.0
      %6030 = vmatprep.subr.mxu0 0.0
      %6031 = vmatpush1.msra.mxu0 0.0
      %6032 = vmatprep.subr.mxu0 0.0
      %6033 = vmatpush1.msra.mxu0 0.0
      %6034 = vmatprep.mubr.f32.mxu0 0.0
      %6035 = vmatmul.mubr.f32.gmra.mrb[0].mxu0 %v5785
      %v6036 = vpop.f32.mrb[0].mxu0
      %v6037 = vadd.f32 0.0, %v6036
      %v6038 = vpop.f32.mrb[0].mxu0
      %6039 = vmatprep.mubr.f32.mxu0 0.0
      %6040 = vmatmul.mubr.f32.gmra.mrb[0].mxu0 %v5788
      %v6041 = vpop.f32.mrb[0].mxu0
      %v6042 = vadd.f32 0.0, %v6041
      %v6043 = vpop.f32.mrb[0].mxu0
      %6044 = vmatprep.mubr.f32.mxu0 0.0
      %6045 = vmatmul.mubr.f32.gmra.mrb[0].mxu0 %v5791
      %v6046 = vpop.f32.mrb[0].mxu0
      %v6047 = vadd.f32 0.0, %v6046
      %v6048 = vpop.f32.mrb[0].mxu0
      %6049 = vmatprep.mubr.f32.mxu0 0.0
      %6050 = vmatmul.mubr.f32.gmra.mrb[0].mxu0 %v5794
      %v6051 = vpop.f32.mrb[0].mxu0
      %v6052 = vadd.f32 0.0, %v6051
      %v6053 = vpop.f32.mrb[0].mxu0
      %6054 = vdwg.mxu0
      %v6055 = vmax.f32 %v5863, %v5950
      %v6056 = vmax.f32 %v5868, %v5955
      %v6057 = vmax.f32 %v5873, %v5960
      %v6058 = vmax.f32 %v5878, %v5965
      %v6059 = vmax.f32 %v6055, %v6037
      %v6060 = vmax.f32 %v6056, %v6042
      %v6061 = vmax.f32 %v6057, %v6047
      %v6062 = vmax.f32 %v6058, %v6052
      %vm6063 = vcmask 31744
      %6064 = vst.msk [vmem:[%s224] sm:$0xff] %vm6063, %v6059
      %6065 = vst.msk [vmem:[%s224 + $0x8] sm:$0xff] %vm6063, %v6060
      %6066 = vst.msk [vmem:[%s224 + $0x10] sm:$0xff] %vm6063, %v6061
      %6067 = vst.msk [vmem:[%s224 + $0x18] sm:$0xff] %vm6063, %v6062
      %p6068 = scmp.lt.s32.totalorder %s16, 1
      %s6069 = scalar_select %p6068, %s16, 1
      %s6070 = smul.addr %s6069, 4
      %s6071 = smul.addr %s6070, 8
      %s6072 = scalar_lea.vmem %s5, %s6071
      // Predicated region
      $region41: #{tpu_custom_call.1} parent=39 // pred_check
        %p6073 = pneg %p144
      $region42: #{tpu_custom_call.1} parent=39 // pred_check_branch
        %6075 = sbr.rel (%p6073) target = $region44
      $region43: #{tpu_custom_call.1} parent=39 // pred_region
        _
      $region44: #{tpu_custom_call.1} parent=39 // pred_fallthru
        _
    $region40: #{tpu_custom_call.1} parent=5 // pred_fallthru
      _
    %p6076 = scmp.le.s32.totalorder 2, %s11
    // Predicated region
    $region45: #{tpu_custom_call.1} parent=5 // pred_check
      %p6077 = pneg %p6076
    $region46: #{tpu_custom_call.1} parent=5 // pred_check_branch
      %6079 = sbr.rel (%p6077) target = $region48
    $region47: #{tpu_custom_call.1} parent=5 // pred_region
      %s6080 = ssub.s32 %s11, 2
      // Predicated region
      $region49: #{tpu_custom_call.1} parent=47 // pred_check
        %p6081 = pneg %p150
      $region50: #{tpu_custom_call.1} parent=47 // pred_check_branch
        %6083 = sbr.rel (%p6081) target = $region52
      $region51: #{tpu_custom_call.1} parent=47 // pred_region
        %p6084 = scmp.lt.s32.totalorder %s17, 1
        %s6085 = scalar_select %p6084, %s17, 1
        %s6086 = smul.addr %s6085, 4
        %s6087 = smul.addr %s6086, 8
        %s6088 = scalar_lea.vmem %s5, %s6087
      $region52: #{tpu_custom_call.1} parent=47 // pred_fallthru
        _
    $region48: #{tpu_custom_call.1} parent=5 // pred_fallthru
      _
  $region6: #{tpu_custom_call.1} parent=0 // loop_footer
    %s15 = sadd.s32 1, %s11
  $region7: #{tpu_custom_call.1} parent=0 // loop_footer_branch
    %10 = sbr.rel target = $region3
  $region8: #{tpu_custom_call.1} parent=0 // loop_exit
    _

</llo_original>
